<compile_context>
chip_gen: v7x
topology: tpu7x:2x2x1
jax: 0.10.0
libtpu: 0.0.40
codegen_flags: <defaults>
</compile_context>

<pallas_src>
import functools

import jax
import jax.numpy as jnp
from jax import lax
from jax.experimental import pallas as pl
from jax.experimental.pallas import tpu as pltpu

BN_EPS = 1e-5
LANE = 128


def _round_up(x, m):
    return (x + m - 1) // m * m


# ----------------------------- Pallas kernels ------------------------------ #

def _conv_taps_matmul(x_ref, w_ref, Ho, Wo):
    """3x3 conv as 9 accumulated MXU matmuls over VMEM-resident windows.

    x_ref block: (1, Hp, Wp, Cp) bf16 (spatially padded, channel padded).
    w_ref block: (9*Cp, Cout)    bf16 (tap-major, BN scale pre-folded).
    Returns (Ho*Wo, Cout) f32.
    """
    x = x_ref[0]                                   # (Hp, Wp, Cp)
    cp = x.shape[-1]
    acc = None
    for kh in range(3):
        for kw in range(3):
            win = x[kh:kh + Ho, kw:kw + Wo, :].reshape(Ho * Wo, cp)
            wk = w_ref[pl.ds((kh * 3 + kw) * cp, cp), :]
            part = jnp.dot(win, wk, preferred_element_type=jnp.float32)
            acc = part if acc is None else acc + part
    return acc


def _conv3x3_bn_relu_kernel(x_ref, w_ref, b_ref, o_ref, *, Ho, Wo):
    # conv1 path: 3x3 conv + folded-BN bias + ReLU.
    acc = _conv_taps_matmul(x_ref, w_ref, Ho, Wo)
    out = jnp.maximum(acc + b_ref[...], 0.0)
    o_ref[0] = out.reshape(Ho, Wo, -1).astype(o_ref.dtype)


def _conv3x3_bn_add_relu_kernel(x_ref, w_ref, b_ref, r_ref, o_ref, *, Ho, Wo):
    # conv2 path, identity shortcut: conv + bias + residual add + ReLU.
    acc = _conv_taps_matmul(x_ref, w_ref, Ho, Wo)
    res = r_ref[0].reshape(Ho * Wo, -1).astype(jnp.float32)
    out = jnp.maximum(acc + b_ref[...] + res, 0.0)
    o_ref[0] = out.reshape(Ho, Wo, -1).astype(o_ref.dtype)


def _conv3x3_bn_scconv_add_relu_kernel(x_ref, w_ref, b_ref, xs_ref, ws_ref,
                                       bs_ref, o_ref, *, Ho, Wo):
    # conv2 path, conv shortcut: conv + bias + fused 1x1-conv shortcut + ReLU.
    acc = _conv_taps_matmul(x_ref, w_ref, Ho, Wo)
    xs = xs_ref[0].reshape(Ho * Wo, -1)
    sc = jnp.dot(xs, ws_ref[...], preferred_element_type=jnp.float32) + bs_ref[...]
    out = jnp.maximum(acc + b_ref[...] + sc, 0.0)
    o_ref[0] = out.reshape(Ho, Wo, -1).astype(o_ref.dtype)


# ----------------------------- pallas_call glue ----------------------------- #

def _conv_call(kernel, xp, w, b, extra_inputs, extra_specs, out_shape_nhwc,
               out_dtype):
    N, Hp, Wp, Cp = xp.shape
    Cout = w.shape[1]
    _, Ho, Wo, _ = out_shape_nhwc
    kern = functools.partial(kernel, Ho=Ho, Wo=Wo)
    in_specs = [
        pl.BlockSpec((1, Hp, Wp, Cp), lambda n: (n, 0, 0, 0)),
        pl.BlockSpec((9 * Cp, Cout), lambda n: (0, 0)),
        pl.BlockSpec((1, Cout), lambda n: (0, 0)),
    ] + extra_specs
    return pl.pallas_call(
        kern,
        out_shape=jax.ShapeDtypeStruct(out_shape_nhwc, out_dtype),
        grid_spec=pltpu.PrefetchScalarGridSpec(
            num_scalar_prefetch=0,
            grid=(N,),
            in_specs=in_specs,
            out_specs=pl.BlockSpec((1, Ho, Wo, Cout), lambda n: (n, 0, 0, 0)),
        ),
        compiler_params=pltpu.CompilerParams(
            dimension_semantics=("parallel",),
            vmem_limit_bytes=48 * 1024 * 1024),
    )(xp, w, b, *extra_inputs)


def conv3x3_bn_relu(xp, w, b, Ho, Wo, out_dtype):
    N = xp.shape[0]
    Cout = w.shape[1]
    return _conv_call(_conv3x3_bn_relu_kernel, xp, w, b, [], [],
                      (N, Ho, Wo, Cout), out_dtype)


def conv3x3_bn_add_relu(xp, w, b, res, Ho, Wo, out_dtype):
    N = xp.shape[0]
    Cout = w.shape[1]
    specs = [pl.BlockSpec((1, Ho, Wo, Cout), lambda n: (n, 0, 0, 0))]
    return _conv_call(_conv3x3_bn_add_relu_kernel, xp, w, b, [res], specs,
                      (N, Ho, Wo, Cout), out_dtype)


def conv3x3_bn_scconv_add_relu(xp, w, b, xs, ws, bs, Ho, Wo, out_dtype):
    N = xp.shape[0]
    Cout = w.shape[1]
    Cs = xs.shape[-1]
    specs = [pl.BlockSpec((1, Ho, Wo, Cs), lambda n: (n, 0, 0, 0)),
             pl.BlockSpec((Cs, Cout), lambda n: (0, 0)),
             pl.BlockSpec((1, Cout), lambda n: (0, 0))]
    return _conv_call(_conv3x3_bn_scconv_add_relu_kernel, xp, w, b,
                      [xs, ws, bs], specs, (N, Ho, Wo, Cout), out_dtype)


# --------------------------- parameter preparation -------------------------- #

def _fold_bn(gamma, beta, mean, var):
    scale = gamma / jnp.sqrt(var + BN_EPS)
    bias = beta - mean * scale
    return scale, bias


def _prep_conv3x3(w_oihw, bn, cin_p, cout_p):
    cout, cin = w_oihw.shape[0], w_oihw.shape[1]
    scale, bias = _fold_bn(*bn)
    w = jnp.transpose(w_oihw, (2, 3, 1, 0)) * scale              # (3,3,cin,cout)
    w = jnp.pad(w, ((0, 0), (0, 0), (0, cin_p - cin), (0, cout_p - cout)))
    w = w.reshape(9 * cin_p, cout_p).astype(jnp.bfloat16)
    b = jnp.pad(bias, (0, cout_p - cout)).reshape(1, cout_p).astype(jnp.float32)
    return w, b


def _prep_conv1x1(w_oihw, bn, cin_p, cout_p):
    cout, cin = w_oihw.shape[0], w_oihw.shape[1]
    scale, bias = _fold_bn(*bn)
    w = w_oihw.reshape(cout, cin).T * scale                      # (cin, cout)
    w = jnp.pad(w, ((0, cin_p - cin), (0, cout_p - cout))).astype(jnp.bfloat16)
    b = jnp.pad(bias, (0, cout_p - cout)).reshape(1, cout_p).astype(jnp.float32)
    return w, b


def init_params(key, in_planes, planes, stride):
    ks = jax.random.split(key, 8)

    def bn_params(k, c):
        k1, k2, k3, k4 = jax.random.split(k, 4)
        gamma = jax.random.uniform(k1, (c,), jnp.float32, 0.5, 1.5)
        beta = 0.1 * jax.random.normal(k2, (c,), jnp.float32)
        mean = 0.1 * jax.random.normal(k3, (c,), jnp.float32)
        var = jax.random.uniform(k4, (c,), jnp.float32, 0.5, 1.5)
        return gamma, beta, mean, var

    p = {
        # conv weights stored in PyTorch OIHW layout
        "w1": 0.2 * jax.random.normal(ks[0], (planes, in_planes, 3, 3), jnp.float32),
        "bn1": bn_params(ks[1], planes),
        "w2": 0.2 * jax.random.normal(ks[2], (planes, planes, 3, 3), jnp.float32),
        "bn2": bn_params(ks[3], planes),
        "has_shortcut": (stride != 1 or in_planes != planes),
    }
    if p["has_shortcut"]:
        p["ws"] = 0.2 * jax.random.normal(
            ks[4], (planes, in_planes, 1, 1), jnp.float32)
        p["bns"] = bn_params(ks[5], planes)
    return p


# --------------------------------- forward ---------------------------------- #

def basicblock_forward(x_nchw, params, stride):
    """Forward pass matching the PyTorch BasicBlock (eval-mode BN)."""
    # TODO(synk): in a stacked ResNet keep NHWC end-to-end and hoist these
    #             interface transposes out of the per-block forward.
    x = jnp.transpose(x_nchw, (0, 2, 3, 1))                      # NCHW -> NHWC
    N, H, W, cin = x.shape
    planes = params["w1"].shape[0]
    cin_p = _round_up(cin, LANE)
    p_p = _round_up(planes, LANE)

    # channel-pad to a lane multiple + cast activations to bf16 once
    xc = jnp.pad(x, ((0, 0), (0, 0), (0, 0), (0, cin_p - cin))).astype(jnp.bfloat16)

    # ---- conv1 (3x3, stride, pad=1) + bn1 + relu : one fused kernel ----
    w1, b1 = _prep_conv3x3(params["w1"], params["bn1"], cin_p, p_p)
    xp = jnp.pad(xc, ((0, 0), (1, 1), (1, 1), (0, 0)))
    out = conv3x3_bn_relu(xp, w1, b1, H, W, jnp.bfloat16)        # (N, H, W, p_p)
    if stride > 1:
        # TODO(synk): stride>1 is computed at full resolution then subsampled
        #             (extra compute); an in-kernel strided window would avoid it.
        out = out[:, ::stride, ::stride, :]
    Ho, Wo = out.shape[1], out.shape[2]

    # ---- conv2 (3x3, 1, pad=1) + bn2 + shortcut add + relu : one fused kernel ----
    w2, b2 = _prep_conv3x3(params["w2"], params["bn2"], p_p, p_p)
    outp = jnp.pad(out, ((0, 0), (1, 1), (1, 1), (0, 0)))
    if params["has_shortcut"]:
        xs = xc[:, ::stride, ::stride, :]                        # (N, Ho, Wo, cin_p)
        ws, bs = _prep_conv1x1(params["ws"], params["bns"], cin_p, p_p)
        y = conv3x3_bn_scconv_add_relu(outp, w2, b2, xs, ws, bs, Ho, Wo,
                                       jnp.float32)
    else:
        y = conv3x3_bn_add_relu(outp, w2, b2, xc, Ho, Wo, jnp.float32)

    y = y[..., :planes]                                          # strip channel pad
    return jnp.transpose(y, (0, 3, 1, 2))                        # NHWC -> NCHW


# ------------------------- pure-JAX reference check ------------------------- #

def _ref_basicblock(x_nchw, params, stride):
    x = jnp.transpose(x_nchw, (0, 2, 3, 1))

    def conv(a, w_oihw, s=1, pad=0):
        return lax.conv_general_dilated(
            a, jnp.transpose(w_oihw, (2, 3, 1, 0)), (s, s),
            [(pad, pad), (pad, pad)],
            dimension_numbers=("NHWC", "HWIO", "NHWC"))

    def bn(a, prm):
        g, b, m, v = prm
        return (a - m) / jnp.sqrt(v + BN_EPS) * g + b

    out = jax.nn.relu(bn(conv(x, params["w1"], s=stride, pad=1), params["bn1"]))
    out = bn(conv(out, params["w2"], s=1, pad=1), params["bn2"])
    sc = x
    if params["has_shortcut"]:
        sc = bn(conv(x, params["ws"], s=stride), params["bns"])
    out = jax.nn.relu(out + sc)
    return jnp.transpose(out, (0, 3, 1, 2))


# ----------------------------------- main ------------------------------------ #

if __name__ == "__main__":
    key = jax.random.PRNGKey(0)

    configs = [
        # (N, in_planes, H, W, planes, stride)
        (2, 4, 16, 16, 4, 1),    # identity shortcut
        (2, 4, 16, 16, 8, 2),    # 1x1-conv shortcut + stride 2
    ]
    for idx, (N, cin, H, W, planes, stride) in enumerate(configs):
        k_x, k_p = jax.random.split(jax.random.fold_in(key, idx))
        x = jax.random.normal(k_x, (N, cin, H, W), jnp.float32)   # NCHW
        params = init_params(k_p, cin, planes, stride)

        out = jax.block_until_ready(basicblock_forward(x, params, stride))
        ref = jax.block_until_ready(_ref_basicblock(x, params, stride))

        assert out.shape == (N, planes, H // stride, W // stride), out.shape
        err = float(jnp.max(jnp.abs(out - ref)))
        # bf16 inputs / f32 accumulation -> slightly looser tolerance vs f32 ref
        assert jnp.allclose(out, ref, rtol=5e-2, atol=5e-2), f"max abs err {err}"

    print("KERNEL_OK")
</pallas_src>

<mosaic_0001>
module attributes {stable_mosaic.version = 11 : i64} {
  func.func @_conv3x3_bn_relu_kernel(%arg0: i32, %arg1: memref<1x18x18x128xbf16, #tpu.memory_space<vmem>>, %arg2: memref<1152x128xbf16, #tpu.memory_space<vmem>>, %arg3: memref<1x128xf32, #tpu.memory_space<vmem>>, %arg4: memref<1x16x16x128xbf16, #tpu.memory_space<vmem>>) attributes {dimension_semantics = [#tpu.dimension_semantics<parallel>], iteration_bounds = array<i64: 2>, scalar_prefetch = 0 : i64, scratch_operands = 0 : i64, tpu.core_type = #tpu.core_type<tc>, window_params = [{transform_indices = @transform_0, window_bounds = array<i64: 1, 18, 18, 128>}, {pipeline_mode = #tpu.pipeline_mode<synchronous>, transform_indices = @transform_1, window_bounds = array<i64: 1152, 128>}, {pipeline_mode = #tpu.pipeline_mode<synchronous>, transform_indices = @transform_2, window_bounds = array<i64: 1, 128>}, {transform_indices = @transform_3, window_bounds = array<i64: 1, 16, 16, 128>}]} {
    %c0 = arith.constant 0 : index
    %c0_0 = arith.constant 0 : index
    %c0_1 = arith.constant 0 : index
    %c0_2 = arith.constant 0 : index
    %0 = vector.load %arg1[%c0, %c0_0, %c0_1, %c0_2] : memref<1x18x18x128xbf16, #tpu.memory_space<vmem>>, vector<1x18x18x128xbf16>
    %1 = vector.shape_cast %0 : vector<1x18x18x128xbf16> to vector<18x18x128xbf16>
    %2 = vector.extract_strided_slice %1 {offsets = [0, 0, 0], sizes = [16, 16, 128], strides = [1, 1, 1]} : vector<18x18x128xbf16> to vector<16x16x128xbf16>
    %3 = vector.shape_cast %2 : vector<16x16x128xbf16> to vector<256x128xbf16>
    %c0_3 = arith.constant 0 : index
    %c0_4 = arith.constant 0 : index
    %4 = vector.load %arg2[%c0_3, %c0_4] : memref<1152x128xbf16, #tpu.memory_space<vmem>>, vector<128x128xbf16>
    %cst = arith.constant dense<0.000000e+00> : vector<256x128xf32>
    %5 = tpu.matmul %3, %4, %cst {dimension_numbers = #tpu.dot_dimension_numbers<[1], [0], [0], [1], [0, 0, 1, 1], [], []>} : vector<256x128xbf16>, vector<128x128xbf16>, vector<256x128xf32> -> vector<256x128xf32>
    %6 = vector.extract_strided_slice %1 {offsets = [0, 1, 0], sizes = [16, 16, 128], strides = [1, 1, 1]} : vector<18x18x128xbf16> to vector<16x16x128xbf16>
    %7 = vector.shape_cast %6 : vector<16x16x128xbf16> to vector<256x128xbf16>
    %c128 = arith.constant 128 : index
    %c0_5 = arith.constant 0 : index
    %8 = vector.load %arg2[%c128, %c0_5] : memref<1152x128xbf16, #tpu.memory_space<vmem>>, vector<128x128xbf16>
    %cst_6 = arith.constant dense<0.000000e+00> : vector<256x128xf32>
    %9 = tpu.matmul %7, %8, %cst_6 {dimension_numbers = #tpu.dot_dimension_numbers<[1], [0], [0], [1], [0, 0, 1, 1], [], []>} : vector<256x128xbf16>, vector<128x128xbf16>, vector<256x128xf32> -> vector<256x128xf32>
    %10 = arith.addf %5, %9 : vector<256x128xf32>
    %11 = vector.extract_strided_slice %1 {offsets = [0, 2, 0], sizes = [16, 16, 128], strides = [1, 1, 1]} : vector<18x18x128xbf16> to vector<16x16x128xbf16>
    %12 = vector.shape_cast %11 : vector<16x16x128xbf16> to vector<256x128xbf16>
    %c256 = arith.constant 256 : index
    %c0_7 = arith.constant 0 : index
    %13 = vector.load %arg2[%c256, %c0_7] : memref<1152x128xbf16, #tpu.memory_space<vmem>>, vector<128x128xbf16>
    %cst_8 = arith.constant dense<0.000000e+00> : vector<256x128xf32>
    %14 = tpu.matmul %12, %13, %cst_8 {dimension_numbers = #tpu.dot_dimension_numbers<[1], [0], [0], [1], [0, 0, 1, 1], [], []>} : vector<256x128xbf16>, vector<128x128xbf16>, vector<256x128xf32> -> vector<256x128xf32>
    %15 = arith.addf %10, %14 : vector<256x128xf32>
    %16 = vector.extract_strided_slice %1 {offsets = [1, 0, 0], sizes = [16, 16, 128], strides = [1, 1, 1]} : vector<18x18x128xbf16> to vector<16x16x128xbf16>
    %17 = vector.shape_cast %16 : vector<16x16x128xbf16> to vector<256x128xbf16>
    %c384 = arith.constant 384 : index
    %c0_9 = arith.constant 0 : index
    %18 = vector.load %arg2[%c384, %c0_9] : memref<1152x128xbf16, #tpu.memory_space<vmem>>, vector<128x128xbf16>
    %cst_10 = arith.constant dense<0.000000e+00> : vector<256x128xf32>
    %19 = tpu.matmul %17, %18, %cst_10 {dimension_numbers = #tpu.dot_dimension_numbers<[1], [0], [0], [1], [0, 0, 1, 1], [], []>} : vector<256x128xbf16>, vector<128x128xbf16>, vector<256x128xf32> -> vector<256x128xf32>
    %20 = arith.addf %15, %19 : vector<256x128xf32>
    %21 = vector.extract_strided_slice %1 {offsets = [1, 1, 0], sizes = [16, 16, 128], strides = [1, 1, 1]} : vector<18x18x128xbf16> to vector<16x16x128xbf16>
    %22 = vector.shape_cast %21 : vector<16x16x128xbf16> to vector<256x128xbf16>
    %c512 = arith.constant 512 : index
    %c0_11 = arith.constant 0 : index
    %23 = vector.load %arg2[%c512, %c0_11] : memref<1152x128xbf16, #tpu.memory_space<vmem>>, vector<128x128xbf16>
    %cst_12 = arith.constant dense<0.000000e+00> : vector<256x128xf32>
    %24 = tpu.matmul %22, %23, %cst_12 {dimension_numbers = #tpu.dot_dimension_numbers<[1], [0], [0], [1], [0, 0, 1, 1], [], []>} : vector<256x128xbf16>, vector<128x128xbf16>, vector<256x128xf32> -> vector<256x128xf32>
    %25 = arith.addf %20, %24 : vector<256x128xf32>
    %26 = vector.extract_strided_slice %1 {offsets = [1, 2, 0], sizes = [16, 16, 128], strides = [1, 1, 1]} : vector<18x18x128xbf16> to vector<16x16x128xbf16>
    %27 = vector.shape_cast %26 : vector<16x16x128xbf16> to vector<256x128xbf16>
    %c640 = arith.constant 640 : index
    %c0_13 = arith.constant 0 : index
    %28 = vector.load %arg2[%c640, %c0_13] : memref<1152x128xbf16, #tpu.memory_space<vmem>>, vector<128x128xbf16>
    %cst_14 = arith.constant dense<0.000000e+00> : vector<256x128xf32>
    %29 = tpu.matmul %27, %28, %cst_14 {dimension_numbers = #tpu.dot_dimension_numbers<[1], [0], [0], [1], [0, 0, 1, 1], [], []>} : vector<256x128xbf16>, vector<128x128xbf16>, vector<256x128xf32> -> vector<256x128xf32>
    %30 = arith.addf %25, %29 : vector<256x128xf32>
    %31 = vector.extract_strided_slice %1 {offsets = [2, 0, 0], sizes = [16, 16, 128], strides = [1, 1, 1]} : vector<18x18x128xbf16> to vector<16x16x128xbf16>
    %32 = vector.shape_cast %31 : vector<16x16x128xbf16> to vector<256x128xbf16>
    %c768 = arith.constant 768 : index
    %c0_15 = arith.constant 0 : index
    %33 = vector.load %arg2[%c768, %c0_15] : memref<1152x128xbf16, #tpu.memory_space<vmem>>, vector<128x128xbf16>
    %cst_16 = arith.constant dense<0.000000e+00> : vector<256x128xf32>
    %34 = tpu.matmul %32, %33, %cst_16 {dimension_numbers = #tpu.dot_dimension_numbers<[1], [0], [0], [1], [0, 0, 1, 1], [], []>} : vector<256x128xbf16>, vector<128x128xbf16>, vector<256x128xf32> -> vector<256x128xf32>
    %35 = arith.addf %30, %34 : vector<256x128xf32>
    %36 = vector.extract_strided_slice %1 {offsets = [2, 1, 0], sizes = [16, 16, 128], strides = [1, 1, 1]} : vector<18x18x128xbf16> to vector<16x16x128xbf16>
    %37 = vector.shape_cast %36 : vector<16x16x128xbf16> to vector<256x128xbf16>
    %c896 = arith.constant 896 : index
    %c0_17 = arith.constant 0 : index
    %38 = vector.load %arg2[%c896, %c0_17] : memref<1152x128xbf16, #tpu.memory_space<vmem>>, vector<128x128xbf16>
    %cst_18 = arith.constant dense<0.000000e+00> : vector<256x128xf32>
    %39 = tpu.matmul %37, %38, %cst_18 {dimension_numbers = #tpu.dot_dimension_numbers<[1], [0], [0], [1], [0, 0, 1, 1], [], []>} : vector<256x128xbf16>, vector<128x128xbf16>, vector<256x128xf32> -> vector<256x128xf32>
    %40 = arith.addf %35, %39 : vector<256x128xf32>
    %41 = vector.extract_strided_slice %1 {offsets = [2, 2, 0], sizes = [16, 16, 128], strides = [1, 1, 1]} : vector<18x18x128xbf16> to vector<16x16x128xbf16>
    %42 = vector.shape_cast %41 : vector<16x16x128xbf16> to vector<256x128xbf16>
    %c1024 = arith.constant 1024 : index
    %c0_19 = arith.constant 0 : index
    %43 = vector.load %arg2[%c1024, %c0_19] : memref<1152x128xbf16, #tpu.memory_space<vmem>>, vector<128x128xbf16>
    %cst_20 = arith.constant dense<0.000000e+00> : vector<256x128xf32>
    %44 = tpu.matmul %42, %43, %cst_20 {dimension_numbers = #tpu.dot_dimension_numbers<[1], [0], [0], [1], [0, 0, 1, 1], [], []>} : vector<256x128xbf16>, vector<128x128xbf16>, vector<256x128xf32> -> vector<256x128xf32>
    %45 = arith.addf %40, %44 : vector<256x128xf32>
    %c0_21 = arith.constant 0 : index
    %c0_22 = arith.constant 0 : index
    %46 = vector.load %arg3[%c0_21, %c0_22] : memref<1x128xf32, #tpu.memory_space<vmem>>, vector<1x128xf32>
    %47 = vector.broadcast %46 : vector<1x128xf32> to vector<256x128xf32>
    %48 = arith.addf %45, %47 : vector<256x128xf32>
    %cst_23 = arith.constant 0.000000e+00 : f32
    %49 = vector.broadcast %cst_23 : f32 to vector<256x128xf32>
    %50 = arith.maximumf %48, %49 : vector<256x128xf32>
    %51 = vector.shape_cast %50 : vector<256x128xf32> to vector<16x16x128xf32>
    %52 = arith.truncf %51 : vector<16x16x128xf32> to vector<16x16x128xbf16>
    %c0_24 = arith.constant 0 : index
    %c0_25 = arith.constant 0 : index
    %c0_26 = arith.constant 0 : index
    %c0_27 = arith.constant 0 : index
    %53 = vector.load %arg4[%c0_24, %c0_25, %c0_26, %c0_27] : memref<1x16x16x128xbf16, #tpu.memory_space<vmem>>, vector<1x16x16x128xbf16>
    %54 = vector.shape_cast %53 : vector<1x16x16x128xbf16> to vector<16x16x128xbf16>
    %55 = vector.shape_cast %52 : vector<16x16x128xbf16> to vector<1x16x16x128xbf16>
    tpu.vector_store %arg4[%c0_24, %c0_25, %c0_26, %c0_27], %55 {strides = array<i32>} : memref<1x16x16x128xbf16, #tpu.memory_space<vmem>>, vector<1x16x16x128xbf16>,
    return
  }
  func.func @transform_0(%arg0: i32) -> (i32, i32, i32, i32) {
    %c0_i32 = arith.constant 0 : i32
    %c0_i32_0 = arith.constant 0 : i32
    %c0_i32_1 = arith.constant 0 : i32
    %c0_i32_2 = arith.constant 0 : i32
    return %arg0, %c0_i32, %c0_i32_0, %c0_i32_1 : i32, i32, i32, i32
  }
  func.func @transform_1(%arg0: i32) -> (i32, i32) {
    %c0_i32 = arith.constant 0 : i32
    %c0_i32_0 = arith.constant 0 : i32
    %c0_i32_1 = arith.constant 0 : i32
    return %c0_i32, %c0_i32_0 : i32, i32
  }
  func.func @transform_2(%arg0: i32) -> (i32, i32) {
    %c0_i32 = arith.constant 0 : i32
    %c0_i32_0 = arith.constant 0 : i32
    %c0_i32_1 = arith.constant 0 : i32
    return %c0_i32, %c0_i32_0 : i32, i32
  }
  func.func @transform_3(%arg0: i32) -> (i32, i32, i32, i32) {
    %c0_i32 = arith.constant 0 : i32
    %c0_i32_0 = arith.constant 0 : i32
    %c0_i32_1 = arith.constant 0 : i32
    %c0_i32_2 = arith.constant 0 : i32
    return %arg0, %c0_i32, %c0_i32_0, %c0_i32_1 : i32, i32, i32, i32
  }
}

</mosaic_0001>

<llo_original>
// kernel: tpu_custom_call.1
$region0: #{tpu_custom_call.1}
  #allocation0 [shape = 'u32[]', space=smem, size = 0x4, offset = 0x4, fixed_abs, tag = 'smem constant byte address 0x4 - core index']
  #allocation1 [shape = 'u32[144,128]{1,0:T(1,128)}', space=vmem, size = 0x12000, scoped, tag = 'internal scratch']
  %s0 = inlined_call_operand.vmem [shape: bf16[2,18,18,128], index: 0, kind: input, shape index: {}]
  %s1 = inlined_call_operand.vmem [shape: bf16[1152,128], index: 1, kind: input, shape index: {}]
  %s2 = inlined_call_operand.vmem [shape: f32[1,128], index: 2, kind: input, shape index: {}]
  %s3 = inlined_call_operand.hbm [shape: bf16[2,16,16,128], index: 3, kind: output, shape index: {}]
  %s4 = sld [smem:[#allocation0]]
  $region45: #{tpu_custom_call.1} parent=0
    _
  %s6 = ssub.s32 1, %s4
  %s7 = scalar_select 0, %s6, %s4
  $region1: #{tpu_custom_call.1} parent=0
    #allocation2 [shape = 'u8[131072]{0}', space=vmem, size = 0x20000, scoped, tag = 'output window, operand 0']
    #allocation3 [shape = 's32[2]{0}', space=sflag, size = 0x8, scoped, tag = 'scoped memory for tpu_custom_call.1']
    %8 = vsyncpa [#allocation3], 0
    %s9 = scalar_lea.sflag [#allocation3], 1
    %10 = vsyncpa %s9, 0
    loop: start=0, step=1, limit=4
    $region2: #{tpu_custom_call.1} parent=1 // loop_pre_header
      _
    $region3: #{tpu_custom_call.1} parent=1 // loop_header
      %s12 = sphi 0, %s16
      %p13 = scmp.ge.s32.totalorder %s12, 4
      %s22 = sphi 0, %s24
      %s25 = sphi 0, %s22
      %s26 = sphi 0, %s25
      %s42 = sphi 0, %s26
      %s46 = sphi 0, %s46
      %s48 = sphi 0, %s46
      %s49 = sphi 0, %s48
      %s63 = sphi 0, %s49
      %s67 = sphi 0, %s67
      %s69 = sphi 0, %s67
      %s70 = sphi 0, %s69
      %s84 = sphi 0, %s70
      %s90 = sphi 0, %s92
      %s93 = sphi 0, %s90
      %s94 = sphi 0, %s93
      %s110 = sphi 0, %s94
    $region4: #{tpu_custom_call.1} parent=1 // loop_header_branch
      %15 = sbr.rel (%p13) target = $region8
    $region5: #{tpu_custom_call.1} parent=1 // loop_body
      %s17 = ssub.s32 %s12, 1
      %s18 = ssub.s32 %s12, 2
      %s19 = sadd.s32 %s12, 1
      %s20 = ssub.s32 %s12, %s19
      %p21 = scmp.eq.s32.totalorder %s20, 0
      %s23 = sadd.s32 %s22, 1
      %s24 = scalar_select %p21, %s22, %s23
      %p27 = pneg %p21
      %p28 = scmp.eq.s32.totalorder %s12, 1
      %p29 = por %p27, %p28
      %p30 = scmp.ne.s32.totalorder %s22, %s25
      %p31 = scmp.eq.s32.totalorder %s12, 0
      %p32 = por %p30, %p31
      %p33 = scmp.ne.s32.totalorder %s22, %s25
      %p34 = scmp.eq.s32.totalorder %s17, 1
      %p35 = por %p33, %p34
      %p36 = scmp.ne.s32.totalorder %s25, %s26
      %p37 = scmp.eq.s32.totalorder %s17, 0
      %p38 = por %p36, %p37
      %p39 = scmp.ne.s32.totalorder %s25, %s26
      %p40 = scmp.eq.s32.totalorder %s18, 1
      %p41 = por %p39, %p40
      %p43 = scmp.ne.s32.totalorder %s26, %s42
      %p44 = scmp.eq.s32.totalorder %s18, 0
      %p45 = por %p43, %p44
      %s47 = sadd.s32 %s46, 1
      %p50 = scmp.eq.s32.totalorder %s12, 1
      %p51 = scmp.ne.s32.totalorder %s46, %s48
      %p52 = scmp.eq.s32.totalorder %s12, 0
      %p53 = por %p51, %p52
      %p54 = scmp.ne.s32.totalorder %s46, %s48
      %p55 = scmp.eq.s32.totalorder %s17, 1
      %p56 = por %p54, %p55
      %p57 = scmp.ne.s32.totalorder %s48, %s49
      %p58 = scmp.eq.s32.totalorder %s17, 0
      %p59 = por %p57, %p58
      %p60 = scmp.ne.s32.totalorder %s48, %s49
      %p61 = scmp.eq.s32.totalorder %s18, 1
      %p62 = por %p60, %p61
      %p64 = scmp.ne.s32.totalorder %s49, %s63
      %p65 = scmp.eq.s32.totalorder %s18, 0
      %p66 = por %p64, %p65
      %s68 = sadd.s32 %s67, 1
      %p71 = scmp.eq.s32.totalorder %s12, 1
      %p72 = scmp.ne.s32.totalorder %s67, %s69
      %p73 = scmp.eq.s32.totalorder %s12, 0
      %p74 = por %p72, %p73
      %p75 = scmp.ne.s32.totalorder %s67, %s69
      %p76 = scmp.eq.s32.totalorder %s17, 1
      %p77 = por %p75, %p76
      %p78 = scmp.ne.s32.totalorder %s69, %s70
      %p79 = scmp.eq.s32.totalorder %s17, 0
      %p80 = por %p78, %p79
      %p81 = scmp.ne.s32.totalorder %s69, %s70
      %p82 = scmp.eq.s32.totalorder %s18, 1
      %p83 = por %p81, %p82
      %p85 = scmp.ne.s32.totalorder %s70, %s84
      %p86 = scmp.eq.s32.totalorder %s18, 0
      %p87 = por %p85, %p86
      %s88 = ssub.s32 %s12, %s19
      %p89 = scmp.eq.s32.totalorder %s88, 0
      %s91 = sadd.s32 %s90, 1
      %s92 = scalar_select %p89, %s90, %s91
      %p95 = pneg %p89
      %p96 = scmp.eq.s32.totalorder %s12, 1
      %p97 = por %p95, %p96
      %p98 = scmp.ne.s32.totalorder %s90, %s93
      %p99 = scmp.eq.s32.totalorder %s12, 0
      %p100 = por %p98, %p99
      %p101 = scmp.ne.s32.totalorder %s90, %s93
      %p102 = scmp.eq.s32.totalorder %s17, 1
      %p103 = por %p101, %p102
      %p104 = scmp.ne.s32.totalorder %s93, %s94
      %p105 = scmp.eq.s32.totalorder %s17, 0
      %p106 = por %p104, %p105
      %p107 = scmp.ne.s32.totalorder %s93, %s94
      %p108 = scmp.eq.s32.totalorder %s18, 1
      %p109 = por %p107, %p108
      %p111 = scmp.ne.s32.totalorder %s94, %s110
      %p112 = scmp.eq.s32.totalorder %s18, 0
      %p113 = por %p111, %p112
      %p114 = scmp.le.s32.totalorder 1, %s12
      %p115 = scmp.lt.s32.totalorder %s12, 3
      %p116 = pnand %p114, %p115
      %p117 = pneg %p116
      // Predicated region
      $region9: #{tpu_custom_call.1} parent=5 // pred_check
        _
      $region10: #{tpu_custom_call.1} parent=5 // pred_check_branch
        %119 = sbr.rel (%p116) target = $region12
      $region11: #{tpu_custom_call.1} parent=5 // pred_region
        %s120 = ssub.s32 %s12, 1
        // Predicated region
        $region13: #{tpu_custom_call.1} parent=11 // pred_check
          %p121 = pneg %p59
        $region14: #{tpu_custom_call.1} parent=11 // pred_check_branch
          %123 = sbr.rel (%p121) target = $region16
        $region15: #{tpu_custom_call.1} parent=11 // pred_region
          _
        $region16: #{tpu_custom_call.1} parent=11 // pred_fallthru
          _
        // Predicated region
        $region17: #{tpu_custom_call.1} parent=11 // pred_check
          %p124 = pneg %p80
        $region18: #{tpu_custom_call.1} parent=11 // pred_check_branch
          %126 = sbr.rel (%p124) target = $region20
        $region19: #{tpu_custom_call.1} parent=11 // pred_region
          _
        $region20: #{tpu_custom_call.1} parent=11 // pred_fallthru
          _
      $region12: #{tpu_custom_call.1} parent=5 // pred_fallthru
        _
      %p127 = scmp.lt.s32.totalorder %s12, 2
      // Predicated region
      $region21: #{tpu_custom_call.1} parent=5 // pred_check
        %p128 = pneg %p127
      $region22: #{tpu_custom_call.1} parent=5 // pred_check_branch
        %130 = sbr.rel (%p128) target = $region24
      $region23: #{tpu_custom_call.1} parent=5 // pred_region
        // Predicated region
        $region25: #{tpu_custom_call.1} parent=23 // pred_check
          %p131 = pneg %p32
        $region26: #{tpu_custom_call.1} parent=23 // pred_check_branch
          %133 = sbr.rel (%p131) target = $region28
        $region27: #{tpu_custom_call.1} parent=23 // pred_region
          %p134 = scmp.lt.s32.totalorder %s12, 1
          %s135 = scalar_select %p134, %s12, 1
          %s136 = smul.addr %s135, 54
          %s137 = smul.addr %s136, 4
          %s138 = scalar_lea.vmem %s0, %s137
        $region28: #{tpu_custom_call.1} parent=23 // pred_fallthru
          _
      $region24: #{tpu_custom_call.1} parent=5 // pred_fallthru
        _
      %p139 = scmp.le.s32.totalorder 1, %s12
      %p140 = scmp.lt.s32.totalorder %s12, 3
      %p141 = pnand %p139, %p140
      %p142 = pneg %p141
      // Predicated region
      $region29: #{tpu_custom_call.1} parent=5 // pred_check
        _
      $region30: #{tpu_custom_call.1} parent=5 // pred_check_branch
        %144 = sbr.rel (%p141) target = $region32
      $region31: #{tpu_custom_call.1} parent=5 // pred_region
        %s145 = ssub.s32 %s12, 1
        %p146 = scmp.lt.s32.totalorder %s17, 1
        %s147 = scalar_select %p146, %s17, 1
        %s148 = smul.addr %s147, 54
        %s149 = smul.addr %s148, 4
        %s150 = scalar_lea.vmem %s0, %s149
        %p151 = pneg %p38
        %p152 = pneg %p35
        %p153 = pneg %p59
        %p154 = pneg %p56
        %p155 = pneg %p80
        %p156 = pneg %p77
        %p157 = pneg %p106
        %p158 = pneg %p103
        %s159 = sand.u32 %s93, 1
        %s160 = scalar_lea.sflag [#allocation3], %s159
        %s161 = sand.u32 %s93, 1
        %s162 = smul.addr %s161, 128
        %s163 = scalar_lea.vmem [#allocation2], %s162
        %p164 = scmp.lt.s32.totalorder %s17, 1
        %s165 = scalar_select %p164, %s17, 1
        %s166 = smul.addr %s165, 54
        %s167 = smul.addr %s166, 4
        %s168 = scalar_lea.vmem %s0, %s167
        %v170 = vld [vmem:[%s168] sm:$0xf]
        %v171 = vld [vmem:[%s168 + $0x4] sm:$0xf]
        %v172 = vld [vmem:[%s168 + $0x8] sm:$0x1]
        %v173 = vld [vmem:[%s168 + $0xc] sm:$0xf]
        %v174 = vld [vmem:[%s168 + $0x10] sm:$0xf]
        %v175 = vld [vmem:[%s168 + $0x14] sm:$0x1]
        %v176 = vld [vmem:[%s168 + $0x18] sm:$0xf]
        %v177 = vld [vmem:[%s168 + $0x1c] sm:$0xf]
        %v178 = vld [vmem:[%s168 + $0x20] sm:$0x1]
        %v179 = vld [vmem:[%s168 + $0x24] sm:$0xf]
        %v180 = vld [vmem:[%s168 + $0x28] sm:$0xf]
        %v181 = vld [vmem:[%s168 + $0x2c] sm:$0x1]
        %v182 = vld [vmem:[%s168 + $0x30] sm:$0xf]
        %v183 = vld [vmem:[%s168 + $0x34] sm:$0xf]
        %v184 = vld [vmem:[%s168 + $0x38] sm:$0x1]
        %v185 = vld [vmem:[%s168 + $0x3c] sm:$0xf]
        %v186 = vld [vmem:[%s168 + $0x40] sm:$0xf]
        %v187 = vld [vmem:[%s168 + $0x44] sm:$0x1]
        %v188 = vld [vmem:[%s168 + $0x48] sm:$0xf]
        %v189 = vld [vmem:[%s168 + $0x4c] sm:$0xf]
        %v190 = vld [vmem:[%s168 + $0x50] sm:$0x1]
        %v191 = vld [vmem:[%s168 + $0x54] sm:$0xf]
        %v192 = vld [vmem:[%s168 + $0x58] sm:$0xf]
        %v193 = vld [vmem:[%s168 + $0x5c] sm:$0x1]
        %v194 = vld [vmem:[%s168 + $0x60] sm:$0xf]
        %v195 = vld [vmem:[%s168 + $0x64] sm:$0xf]
        %v196 = vld [vmem:[%s168 + $0x68] sm:$0x1]
        %v197 = vld [vmem:[%s168 + $0x6c] sm:$0xf]
        %v198 = vld [vmem:[%s168 + $0x70] sm:$0xf]
        %v199 = vld [vmem:[%s168 + $0x74] sm:$0x1]
        %v200 = vld [vmem:[%s168 + $0x78] sm:$0xf]
        %v201 = vld [vmem:[%s168 + $0x7c] sm:$0xf]
        %v202 = vld [vmem:[%s168 + $0x80] sm:$0x1]
        %v203 = vld [vmem:[%s168 + $0x84] sm:$0xf]
        %v204 = vld [vmem:[%s168 + $0x88] sm:$0xf]
        %v205 = vld [vmem:[%s168 + $0x8c] sm:$0x1]
        %v206 = vld [vmem:[%s168 + $0x90] sm:$0xf]
        %v207 = vld [vmem:[%s168 + $0x94] sm:$0xf]
        %v208 = vld [vmem:[%s168 + $0x98] sm:$0x1]
        %v209 = vld [vmem:[%s168 + $0x9c] sm:$0xf]
        %v210 = vld [vmem:[%s168 + $0xa0] sm:$0xf]
        %v211 = vld [vmem:[%s168 + $0xa4] sm:$0x1]
        %v212 = vld [vmem:[%s168 + $0xa8] sm:$0xf]
        %v213 = vld [vmem:[%s168 + $0xac] sm:$0xf]
        %v214 = vld [vmem:[%s168 + $0xb0] sm:$0x1]
        %v215 = vld [vmem:[%s168 + $0xb4] sm:$0xf]
        %v216 = vld [vmem:[%s168 + $0xb8] sm:$0xf]
        %v217 = vld [vmem:[%s168 + $0xbc] sm:$0x1]
        %v218 = vld [vmem:[%s168 + $0xc0] sm:$0xf]
        %v219 = vld [vmem:[%s168 + $0xc4] sm:$0xf]
        %v220 = vld [vmem:[%s168 + $0xc8] sm:$0x1]
        %v221 = vld [vmem:[%s168 + $0xcc] sm:$0xf]
        %v222 = vld [vmem:[%s168 + $0xd0] sm:$0xf]
        %v223 = vld [vmem:[%s168 + $0xd4] sm:$0x1]
        %v224 = vld [vmem:[%s1] sm:$0xf]
        %v225 = vld [vmem:[%s1 + $0x4] sm:$0xf]
        %v226 = vld [vmem:[%s1 + $0x8] sm:$0xf]
        %v227 = vld [vmem:[%s1 + $0xc] sm:$0xf]
        %v228 = vld [vmem:[%s1 + $0x10] sm:$0xf]
        %v229 = vld [vmem:[%s1 + $0x14] sm:$0xf]
        %v230 = vld [vmem:[%s1 + $0x18] sm:$0xf]
        %v231 = vld [vmem:[%s1 + $0x1c] sm:$0xf]
        %v232 = vld [vmem:[%s1 + $0x20] sm:$0xf]
        %v233 = vld [vmem:[%s1 + $0x24] sm:$0xf]
        %v234 = vld [vmem:[%s1 + $0x28] sm:$0xf]
        %v235 = vld [vmem:[%s1 + $0x2c] sm:$0xf]
        %v236 = vld [vmem:[%s1 + $0x30] sm:$0xf]
        %v237 = vld [vmem:[%s1 + $0x34] sm:$0xf]
        %v238 = vld [vmem:[%s1 + $0x38] sm:$0xf]
        %v239 = vld [vmem:[%s1 + $0x3c] sm:$0xf]
        %vm240 = vsmask.f32 3328
        %vm241 = vsmask.f32 7440
        %vm242 = vmor %vm240, %vm241
        %v244 = vshrl.u32 %v170, 16
        %v246 = vrot.slane %v244, 4
        %v247 = vshll.u32 %v170, 16
        %v249 = vrot.slane %v247, 5
        %v250 = vor.u32 %v246, %v249
        %v251 = vrot.slane %v250, 4
        %v253 = vshll.u32 %v171, 16
        %v255 = vrot.slane %v253, 5
        %v256 = vsel %vm242, %v251, %v255
        %v257 = vshrl.u32 %v171, 16
        %v259 = vrot.slane %v257, 4
        %v260 = vor.u32 %v259, %v255
        %v261 = vrot.slane %v260, 4
        %v263 = vshll.u32 %v172, 16
        %v265 = vrot.slane %v263, 5
        %v266 = vsel %vm242, %v261, %v265
        %v268 = vshrl.u32 %v173, 16
        %v270 = vrot.slane %v268, 4
        %v271 = vshll.u32 %v173, 16
        %v273 = vrot.slane %v271, 5
        %v274 = vor.u32 %v270, %v273
        %v275 = vrot.slane %v274, 4
        %v277 = vshll.u32 %v174, 16
        %v279 = vrot.slane %v277, 5
        %v280 = vsel %vm242, %v275, %v279
        %v281 = vshrl.u32 %v174, 16
        %v283 = vrot.slane %v281, 4
        %v284 = vor.u32 %v283, %v279
        %v285 = vrot.slane %v284, 4
        %v287 = vshll.u32 %v175, 16
        %v289 = vrot.slane %v287, 5
        %v290 = vsel %vm242, %v285, %v289
        %v292 = vshrl.u32 %v176, 16
        %v294 = vrot.slane %v292, 4
        %v295 = vshll.u32 %v176, 16
        %v297 = vrot.slane %v295, 5
        %v298 = vor.u32 %v294, %v297
        %v299 = vrot.slane %v298, 4
        %v301 = vshll.u32 %v177, 16
        %v303 = vrot.slane %v301, 5
        %v304 = vsel %vm242, %v299, %v303
        %v305 = vshrl.u32 %v177, 16
        %v307 = vrot.slane %v305, 4
        %v308 = vor.u32 %v307, %v303
        %v309 = vrot.slane %v308, 4
        %v311 = vshll.u32 %v178, 16
        %v313 = vrot.slane %v311, 5
        %v314 = vsel %vm242, %v309, %v313
        %v316 = vshrl.u32 %v179, 16
        %v318 = vrot.slane %v316, 4
        %v319 = vshll.u32 %v179, 16
        %v321 = vrot.slane %v319, 5
        %v322 = vor.u32 %v318, %v321
        %v323 = vrot.slane %v322, 4
        %v325 = vshll.u32 %v180, 16
        %v327 = vrot.slane %v325, 5
        %v328 = vsel %vm242, %v323, %v327
        %v329 = vshrl.u32 %v180, 16
        %v331 = vrot.slane %v329, 4
        %v332 = vor.u32 %v331, %v327
        %v333 = vrot.slane %v332, 4
        %v335 = vshll.u32 %v181, 16
        %v337 = vrot.slane %v335, 5
        %v338 = vsel %vm242, %v333, %v337
        %v340 = vshrl.u32 %v182, 16
        %v342 = vrot.slane %v340, 4
        %v343 = vshll.u32 %v182, 16
        %v345 = vrot.slane %v343, 5
        %v346 = vor.u32 %v342, %v345
        %v347 = vrot.slane %v346, 4
        %v349 = vshll.u32 %v183, 16
        %v351 = vrot.slane %v349, 5
        %v352 = vsel %vm242, %v347, %v351
        %v353 = vshrl.u32 %v183, 16
        %v355 = vrot.slane %v353, 4
        %v356 = vor.u32 %v355, %v351
        %v357 = vrot.slane %v356, 4
        %v359 = vshll.u32 %v184, 16
        %v361 = vrot.slane %v359, 5
        %v362 = vsel %vm242, %v357, %v361
        %v364 = vshrl.u32 %v185, 16
        %v366 = vrot.slane %v364, 4
        %v367 = vshll.u32 %v185, 16
        %v369 = vrot.slane %v367, 5
        %v370 = vor.u32 %v366, %v369
        %v371 = vrot.slane %v370, 4
        %v373 = vshll.u32 %v186, 16
        %v375 = vrot.slane %v373, 5
        %v376 = vsel %vm242, %v371, %v375
        %v377 = vshrl.u32 %v186, 16
        %v379 = vrot.slane %v377, 4
        %v380 = vor.u32 %v379, %v375
        %v381 = vrot.slane %v380, 4
        %v383 = vshll.u32 %v187, 16
        %v385 = vrot.slane %v383, 5
        %v386 = vsel %vm242, %v381, %v385
        %v388 = vshrl.u32 %v188, 16
        %v390 = vrot.slane %v388, 4
        %v391 = vshll.u32 %v188, 16
        %v393 = vrot.slane %v391, 5
        %v394 = vor.u32 %v390, %v393
        %v395 = vrot.slane %v394, 4
        %v397 = vshll.u32 %v189, 16
        %v399 = vrot.slane %v397, 5
        %v400 = vsel %vm242, %v395, %v399
        %v401 = vshrl.u32 %v189, 16
        %v403 = vrot.slane %v401, 4
        %v404 = vor.u32 %v403, %v399
        %v405 = vrot.slane %v404, 4
        %v407 = vshll.u32 %v190, 16
        %v409 = vrot.slane %v407, 5
        %v410 = vsel %vm242, %v405, %v409
        %v412 = vshrl.u32 %v191, 16
        %v414 = vrot.slane %v412, 4
        %v415 = vshll.u32 %v191, 16
        %v417 = vrot.slane %v415, 5
        %v418 = vor.u32 %v414, %v417
        %v419 = vrot.slane %v418, 4
        %v421 = vshll.u32 %v192, 16
        %v423 = vrot.slane %v421, 5
        %v424 = vsel %vm242, %v419, %v423
        %v425 = vshrl.u32 %v192, 16
        %v427 = vrot.slane %v425, 4
        %v428 = vor.u32 %v427, %v423
        %v429 = vrot.slane %v428, 4
        %v431 = vshll.u32 %v193, 16
        %v433 = vrot.slane %v431, 5
        %v434 = vsel %vm242, %v429, %v433
        %v436 = vshrl.u32 %v194, 16
        %v438 = vrot.slane %v436, 4
        %v439 = vshll.u32 %v194, 16
        %v441 = vrot.slane %v439, 5
        %v442 = vor.u32 %v438, %v441
        %v443 = vrot.slane %v442, 4
        %v445 = vshll.u32 %v195, 16
        %v447 = vrot.slane %v445, 5
        %v448 = vsel %vm242, %v443, %v447
        %v449 = vshrl.u32 %v195, 16
        %v451 = vrot.slane %v449, 4
        %v452 = vor.u32 %v451, %v447
        %v453 = vrot.slane %v452, 4
        %v455 = vshll.u32 %v196, 16
        %v457 = vrot.slane %v455, 5
        %v458 = vsel %vm242, %v453, %v457
        %v460 = vshrl.u32 %v197, 16
        %v462 = vrot.slane %v460, 4
        %v463 = vshll.u32 %v197, 16
        %v465 = vrot.slane %v463, 5
        %v466 = vor.u32 %v462, %v465
        %v467 = vrot.slane %v466, 4
        %v469 = vshll.u32 %v198, 16
        %v471 = vrot.slane %v469, 5
        %v472 = vsel %vm242, %v467, %v471
        %v473 = vshrl.u32 %v198, 16
        %v475 = vrot.slane %v473, 4
        %v476 = vor.u32 %v475, %v471
        %v477 = vrot.slane %v476, 4
        %v479 = vshll.u32 %v199, 16
        %v481 = vrot.slane %v479, 5
        %v482 = vsel %vm242, %v477, %v481
        %v484 = vshrl.u32 %v200, 16
        %v486 = vrot.slane %v484, 4
        %v487 = vshll.u32 %v200, 16
        %v489 = vrot.slane %v487, 5
        %v490 = vor.u32 %v486, %v489
        %v491 = vrot.slane %v490, 4
        %v493 = vshll.u32 %v201, 16
        %v495 = vrot.slane %v493, 5
        %v496 = vsel %vm242, %v491, %v495
        %v497 = vshrl.u32 %v201, 16
        %v499 = vrot.slane %v497, 4
        %v500 = vor.u32 %v499, %v495
        %v501 = vrot.slane %v500, 4
        %v503 = vshll.u32 %v202, 16
        %v505 = vrot.slane %v503, 5
        %v506 = vsel %vm242, %v501, %v505
        %v508 = vshrl.u32 %v203, 16
        %v510 = vrot.slane %v508, 4
        %v511 = vshll.u32 %v203, 16
        %v513 = vrot.slane %v511, 5
        %v514 = vor.u32 %v510, %v513
        %v515 = vrot.slane %v514, 4
        %v517 = vshll.u32 %v204, 16
        %v519 = vrot.slane %v517, 5
        %v520 = vsel %vm242, %v515, %v519
        %v521 = vshrl.u32 %v204, 16
        %v523 = vrot.slane %v521, 4
        %v524 = vor.u32 %v523, %v519
        %v525 = vrot.slane %v524, 4
        %v527 = vshll.u32 %v205, 16
        %v529 = vrot.slane %v527, 5
        %v530 = vsel %vm242, %v525, %v529
        %v532 = vshrl.u32 %v206, 16
        %v534 = vrot.slane %v532, 4
        %v535 = vshll.u32 %v206, 16
        %v537 = vrot.slane %v535, 5
        %v538 = vor.u32 %v534, %v537
        %v539 = vrot.slane %v538, 4
        %v541 = vshll.u32 %v207, 16
        %v543 = vrot.slane %v541, 5
        %v544 = vsel %vm242, %v539, %v543
        %v545 = vshrl.u32 %v207, 16
        %v547 = vrot.slane %v545, 4
        %v548 = vor.u32 %v547, %v543
        %v549 = vrot.slane %v548, 4
        %v551 = vshll.u32 %v208, 16
        %v553 = vrot.slane %v551, 5
        %v554 = vsel %vm242, %v549, %v553
        %v556 = vshrl.u32 %v209, 16
        %v558 = vrot.slane %v556, 4
        %v559 = vshll.u32 %v209, 16
        %v561 = vrot.slane %v559, 5
        %v562 = vor.u32 %v558, %v561
        %v563 = vrot.slane %v562, 4
        %v565 = vshll.u32 %v210, 16
        %v567 = vrot.slane %v565, 5
        %v568 = vsel %vm242, %v563, %v567
        %v569 = vshrl.u32 %v210, 16
        %v571 = vrot.slane %v569, 4
        %v572 = vor.u32 %v571, %v567
        %v573 = vrot.slane %v572, 4
        %v575 = vshll.u32 %v211, 16
        %v577 = vrot.slane %v575, 5
        %v578 = vsel %vm242, %v573, %v577
        %v580 = vshrl.u32 %v212, 16
        %v582 = vrot.slane %v580, 4
        %v583 = vshll.u32 %v212, 16
        %v585 = vrot.slane %v583, 5
        %v586 = vor.u32 %v582, %v585
        %v587 = vrot.slane %v586, 4
        %v589 = vshll.u32 %v213, 16
        %v591 = vrot.slane %v589, 5
        %v592 = vsel %vm242, %v587, %v591
        %v593 = vshrl.u32 %v213, 16
        %v595 = vrot.slane %v593, 4
        %v596 = vor.u32 %v595, %v591
        %v597 = vrot.slane %v596, 4
        %v599 = vshll.u32 %v214, 16
        %v601 = vrot.slane %v599, 5
        %v602 = vsel %vm242, %v597, %v601
        %v604 = vshrl.u32 %v215, 16
        %v606 = vrot.slane %v604, 4
        %v607 = vshll.u32 %v215, 16
        %v609 = vrot.slane %v607, 5
        %v610 = vor.u32 %v606, %v609
        %v611 = vrot.slane %v610, 4
        %v613 = vshll.u32 %v216, 16
        %v615 = vrot.slane %v613, 5
        %v616 = vsel %vm242, %v611, %v615
        %v617 = vshrl.u32 %v216, 16
        %v619 = vrot.slane %v617, 4
        %v620 = vor.u32 %v619, %v615
        %v621 = vrot.slane %v620, 4
        %v623 = vshll.u32 %v217, 16
        %v625 = vrot.slane %v623, 5
        %v626 = vsel %vm242, %v621, %v625
        %v627 = vld [vmem:[%s1 + $0x40] sm:$0xf]
        %v628 = vld [vmem:[%s1 + $0x44] sm:$0xf]
        %v629 = vld [vmem:[%s1 + $0x48] sm:$0xf]
        %v630 = vld [vmem:[%s1 + $0x4c] sm:$0xf]
        %v631 = vld [vmem:[%s1 + $0x50] sm:$0xf]
        %v632 = vld [vmem:[%s1 + $0x54] sm:$0xf]
        %v633 = vld [vmem:[%s1 + $0x58] sm:$0xf]
        %v634 = vld [vmem:[%s1 + $0x5c] sm:$0xf]
        %v635 = vld [vmem:[%s1 + $0x60] sm:$0xf]
        %v636 = vld [vmem:[%s1 + $0x64] sm:$0xf]
        %v637 = vld [vmem:[%s1 + $0x68] sm:$0xf]
        %v638 = vld [vmem:[%s1 + $0x6c] sm:$0xf]
        %v639 = vld [vmem:[%s1 + $0x70] sm:$0xf]
        %v640 = vld [vmem:[%s1 + $0x74] sm:$0xf]
        %v641 = vld [vmem:[%s1 + $0x78] sm:$0xf]
        %v642 = vld [vmem:[%s1 + $0x7c] sm:$0xf]
        %v643 = vunpack.c.l.b16 %v256
        %v644 = vunpack.c.l.b16 %v266
        %v645 = vunpack.c.l.b16 %v280
        %v646 = vunpack.c.l.b16 %v290
        %v647 = vunpack.c.l.b16 %v304
        %v648 = vunpack.c.l.b16 %v314
        %v649 = vunpack.c.l.b16 %v328
        %v650 = vunpack.c.l.b16 %v338
        %v651 = vunpack.c.l.b16 %v352
        %v652 = vunpack.c.l.b16 %v362
        %v653 = vunpack.c.l.b16 %v376
        %v654 = vunpack.c.l.b16 %v386
        %v655 = vunpack.c.l.b16 %v400
        %v656 = vunpack.c.l.b16 %v410
        %v657 = vunpack.c.l.b16 %v424
        %v658 = vunpack.c.l.b16 %v434
        %v659 = vunpack.c.l.b16 %v448
        %v660 = vunpack.c.l.b16 %v458
        %v661 = vunpack.c.l.b16 %v472
        %v662 = vunpack.c.l.b16 %v482
        %v663 = vunpack.c.l.b16 %v496
        %v664 = vunpack.c.l.b16 %v506
        %v665 = vunpack.c.l.b16 %v520
        %v666 = vunpack.c.l.b16 %v530
        %v667 = vunpack.c.l.b16 %v544
        %v668 = vunpack.c.l.b16 %v554
        %v669 = vunpack.c.l.b16 %v568
        %v670 = vunpack.c.l.b16 %v578
        %v671 = vunpack.c.l.b16 %v592
        %v672 = vunpack.c.l.b16 %v602
        %v673 = vunpack.c.l.b16 %v616
        %v674 = vunpack.c.l.b16 %v626
        %v675 = vpack.c.b16 %v644, %v643
        %v676 = vpack.c.b16 %v646, %v645
        %v677 = vpack.c.b16 %v648, %v647
        %v678 = vpack.c.b16 %v650, %v649
        %v679 = vpack.c.b16 %v652, %v651
        %v680 = vpack.c.b16 %v654, %v653
        %v681 = vpack.c.b16 %v656, %v655
        %v682 = vpack.c.b16 %v658, %v657
        %v683 = vpack.c.b16 %v660, %v659
        %v684 = vpack.c.b16 %v662, %v661
        %v685 = vpack.c.b16 %v664, %v663
        %v686 = vpack.c.b16 %v666, %v665
        %v687 = vpack.c.b16 %v668, %v667
        %v688 = vpack.c.b16 %v670, %v669
        %v689 = vpack.c.b16 %v672, %v671
        %v690 = vpack.c.b16 %v674, %v673
        %v723 = vunpack.c.l.b16 %v627
        %v724 = vunpack.c.l.b16 %v628
        %v725 = vunpack.c.l.b16 %v629
        %v726 = vunpack.c.l.b16 %v630
        %v727 = vunpack.c.l.b16 %v631
        %v728 = vunpack.c.l.b16 %v632
        %v729 = vunpack.c.l.b16 %v633
        %v730 = vunpack.c.l.b16 %v634
        %v731 = vunpack.c.l.b16 %v635
        %v732 = vunpack.c.l.b16 %v636
        %v733 = vunpack.c.l.b16 %v637
        %v734 = vunpack.c.l.b16 %v638
        %v735 = vunpack.c.l.b16 %v639
        %v736 = vunpack.c.l.b16 %v640
        %v737 = vunpack.c.l.b16 %v641
        %v738 = vunpack.c.l.b16 %v642
        %v739 = vpack.c.b16 %v724, %v723
        %v740 = vpack.c.b16 %v726, %v725
        %v741 = vpack.c.b16 %v728, %v727
        %v742 = vpack.c.b16 %v730, %v729
        %v743 = vpack.c.b16 %v732, %v731
        %v744 = vpack.c.b16 %v734, %v733
        %v745 = vpack.c.b16 %v736, %v735
        %v746 = vpack.c.b16 %v738, %v737
        %755 = vmatprep.subr.bf16.mxu0 0
        %756 = vmatpush1.bf16.msra.mxu0 %v739
        %757 = vmatprep.subr.bf16.mxu0 0
        %758 = vmatpush1.bf16.msra.mxu0 %v740
        %759 = vmatprep.subr.bf16.mxu0 0
        %760 = vmatpush1.bf16.msra.mxu0 %v741
        %761 = vmatprep.subr.bf16.mxu0 0
        %762 = vmatpush1.bf16.msra.mxu0 %v742
        %763 = vmatprep.subr.bf16.mxu0 0
        %764 = vmatpush1.bf16.msra.mxu0 %v743
        %765 = vmatprep.subr.bf16.mxu0 0
        %766 = vmatpush1.bf16.msra.mxu0 %v744
        %767 = vmatprep.subr.bf16.mxu0 0
        %768 = vmatpush1.bf16.msra.mxu0 %v745
        %769 = vmatprep.subr.bf16.mxu0 0
        %770 = vmatpush1.bf16.msra.mxu0 %v746
        %771 = vmatprep.subr.bf16.mxu0 0
        %772 = vmatpush1.bf16.msra.mxu0 0
        %773 = vmatprep.subr.bf16.mxu0 0
        %774 = vmatpush1.bf16.msra.mxu0 0
        %775 = vmatprep.subr.bf16.mxu0 0
        %776 = vmatpush1.bf16.msra.mxu0 0
        %777 = vmatprep.subr.bf16.mxu0 0
        %778 = vmatpush1.bf16.msra.mxu0 0
        %779 = vmatprep.subr.bf16.mxu0 0
        %780 = vmatpush1.bf16.msra.mxu0 0
        %781 = vmatprep.subr.bf16.mxu0 0
        %782 = vmatpush1.bf16.msra.mxu0 0
        %783 = vmatprep.subr.bf16.mxu0 0
        %784 = vmatpush1.bf16.msra.mxu0 0
        %785 = vmatprep.subr.bf16.mxu0 0
        %786 = vmatpush1.bf16.msra.mxu0 0
        %787 = vmatprep.mubr.bf16.mxu0 0
        %788 = vmatmul.mubr.bf16.gmra.mrb[0].mxu0 %v675
        %v789 = vpop.f32.mrb[0].mxu0
        %v790 = vadd.f32 0.0, %v789
        %v791 = vpop.f32.mrb[0].mxu0
        %v792 = vpop.f32.mrb[0].mxu0
        %v793 = vadd.f32 0.0, %v792
        %v794 = vpop.f32.mrb[0].mxu0
        %795 = vmatprep.mubr.bf16.mxu0 0
        %796 = vmatmul.mubr.bf16.gmra.mrb[0].mxu0 %v676
        %v797 = vpop.f32.mrb[0].mxu0
        %v798 = vadd.f32 0.0, %v797
        %v799 = vpop.f32.mrb[0].mxu0
        %v800 = vpop.f32.mrb[0].mxu0
        %v801 = vadd.f32 0.0, %v800
        %v802 = vpop.f32.mrb[0].mxu0
        %803 = vmatprep.mubr.bf16.mxu0 0
        %804 = vmatmul.mubr.bf16.gmra.mrb[0].mxu0 %v677
        %v805 = vpop.f32.mrb[0].mxu0
        %v806 = vadd.f32 0.0, %v805
        %v807 = vpop.f32.mrb[0].mxu0
        %v808 = vpop.f32.mrb[0].mxu0
        %v809 = vadd.f32 0.0, %v808
        %v810 = vpop.f32.mrb[0].mxu0
        %811 = vmatprep.mubr.bf16.mxu0 0
        %812 = vmatmul.mubr.bf16.gmra.mrb[0].mxu0 %v678
        %v813 = vpop.f32.mrb[0].mxu0
        %v814 = vadd.f32 0.0, %v813
        %v815 = vpop.f32.mrb[0].mxu0
        %v816 = vpop.f32.mrb[0].mxu0
        %v817 = vadd.f32 0.0, %v816
        %v818 = vpop.f32.mrb[0].mxu0
        %819 = vmatprep.mubr.bf16.mxu0 0
        %820 = vmatmul.mubr.bf16.gmra.mrb[0].mxu0 %v679
        %v821 = vpop.f32.mrb[0].mxu0
        %v822 = vadd.f32 0.0, %v821
        %v823 = vpop.f32.mrb[0].mxu0
        %v824 = vpop.f32.mrb[0].mxu0
        %v825 = vadd.f32 0.0, %v824
        %v826 = vpop.f32.mrb[0].mxu0
        %827 = vmatprep.mubr.bf16.mxu0 0
        %828 = vmatmul.mubr.bf16.gmra.mrb[0].mxu0 %v680
        %v829 = vpop.f32.mrb[0].mxu0
        %v830 = vadd.f32 0.0, %v829
        %v831 = vpop.f32.mrb[0].mxu0
        %v832 = vpop.f32.mrb[0].mxu0
        %v833 = vadd.f32 0.0, %v832
        %v834 = vpop.f32.mrb[0].mxu0
        %835 = vmatprep.mubr.bf16.mxu0 0
        %836 = vmatmul.mubr.bf16.gmra.mrb[0].mxu0 %v681
        %v837 = vpop.f32.mrb[0].mxu0
        %v838 = vadd.f32 0.0, %v837
        %v839 = vpop.f32.mrb[0].mxu0
        %v840 = vpop.f32.mrb[0].mxu0
        %v841 = vadd.f32 0.0, %v840
        %v842 = vpop.f32.mrb[0].mxu0
        %843 = vmatprep.mubr.bf16.mxu0 0
        %844 = vmatmul.mubr.bf16.gmra.mrb[0].mxu0 %v682
        %v845 = vpop.f32.mrb[0].mxu0
        %v846 = vadd.f32 0.0, %v845
        %v847 = vpop.f32.mrb[0].mxu0
        %v848 = vpop.f32.mrb[0].mxu0
        %v849 = vadd.f32 0.0, %v848
        %v850 = vpop.f32.mrb[0].mxu0
        %851 = vmatprep.mubr.bf16.mxu0 0
        %852 = vmatmul.mubr.bf16.gmra.mrb[0].mxu0 %v683
        %v853 = vpop.f32.mrb[0].mxu0
        %v854 = vadd.f32 0.0, %v853
        %v855 = vpop.f32.mrb[0].mxu0
        %v856 = vpop.f32.mrb[0].mxu0
        %v857 = vadd.f32 0.0, %v856
        %v858 = vpop.f32.mrb[0].mxu0
        %859 = vmatprep.mubr.bf16.mxu0 0
        %860 = vmatmul.mubr.bf16.gmra.mrb[0].mxu0 %v684
        %v861 = vpop.f32.mrb[0].mxu0
        %v862 = vadd.f32 0.0, %v861
        %v863 = vpop.f32.mrb[0].mxu0
        %v864 = vpop.f32.mrb[0].mxu0
        %v865 = vadd.f32 0.0, %v864
        %v866 = vpop.f32.mrb[0].mxu0
        %867 = vmatprep.mubr.bf16.mxu0 0
        %868 = vmatmul.mubr.bf16.gmra.mrb[0].mxu0 %v685
        %v869 = vpop.f32.mrb[0].mxu0
        %v870 = vadd.f32 0.0, %v869
        %v871 = vpop.f32.mrb[0].mxu0
        %v872 = vpop.f32.mrb[0].mxu0
        %v873 = vadd.f32 0.0, %v872
        %v874 = vpop.f32.mrb[0].mxu0
        %875 = vmatprep.mubr.bf16.mxu0 0
        %876 = vmatmul.mubr.bf16.gmra.mrb[0].mxu0 %v686
        %v877 = vpop.f32.mrb[0].mxu0
        %v878 = vadd.f32 0.0, %v877
        %v879 = vpop.f32.mrb[0].mxu0
        %v880 = vpop.f32.mrb[0].mxu0
        %v881 = vadd.f32 0.0, %v880
        %v882 = vpop.f32.mrb[0].mxu0
        %883 = vmatprep.mubr.bf16.mxu0 0
        %884 = vmatmul.mubr.bf16.gmra.mrb[0].mxu0 %v687
        %v885 = vpop.f32.mrb[0].mxu0
        %v886 = vadd.f32 0.0, %v885
        %v887 = vpop.f32.mrb[0].mxu0
        %v888 = vpop.f32.mrb[0].mxu0
        %v889 = vadd.f32 0.0, %v888
        %v890 = vpop.f32.mrb[0].mxu0
        %891 = vmatprep.mubr.bf16.mxu0 0
        %892 = vmatmul.mubr.bf16.gmra.mrb[0].mxu0 %v688
        %v893 = vpop.f32.mrb[0].mxu0
        %v894 = vadd.f32 0.0, %v893
        %v895 = vpop.f32.mrb[0].mxu0
        %v896 = vpop.f32.mrb[0].mxu0
        %v897 = vadd.f32 0.0, %v896
        %v898 = vpop.f32.mrb[0].mxu0
        %899 = vmatprep.mubr.bf16.mxu0 0
        %900 = vmatmul.mubr.bf16.gmra.mrb[0].mxu0 %v689
        %v901 = vpop.f32.mrb[0].mxu0
        %v902 = vadd.f32 0.0, %v901
        %v903 = vpop.f32.mrb[0].mxu0
        %v904 = vpop.f32.mrb[0].mxu0
        %v905 = vadd.f32 0.0, %v904
        %v906 = vpop.f32.mrb[0].mxu0
        %907 = vmatprep.mubr.bf16.mxu0 0
        %908 = vmatmul.mubr.bf16.gmra.mrb[0].mxu0 %v690
        %v909 = vpop.f32.mrb[0].mxu0
        %v910 = vadd.f32 0.0, %v909
        %v911 = vpop.f32.mrb[0].mxu0
        %v912 = vpop.f32.mrb[0].mxu0
        %v913 = vadd.f32 0.0, %v912
        %v914 = vpop.f32.mrb[0].mxu0
        %915 = vdwg.mxu0
        %v948 = vunpack.c.l.b16 %v170
        %v949 = vunpack.c.l.b16 %v171
        %v950 = vunpack.c.l.b16 %v173
        %v951 = vunpack.c.l.b16 %v174
        %v952 = vunpack.c.l.b16 %v176
        %v953 = vunpack.c.l.b16 %v177
        %v954 = vunpack.c.l.b16 %v179
        %v955 = vunpack.c.l.b16 %v180
        %v956 = vunpack.c.l.b16 %v182
        %v957 = vunpack.c.l.b16 %v183
        %v958 = vunpack.c.l.b16 %v185
        %v959 = vunpack.c.l.b16 %v186
        %v960 = vunpack.c.l.b16 %v188
        %v961 = vunpack.c.l.b16 %v189
        %v962 = vunpack.c.l.b16 %v191
        %v963 = vunpack.c.l.b16 %v192
        %v964 = vunpack.c.l.b16 %v194
        %v965 = vunpack.c.l.b16 %v195
        %v966 = vunpack.c.l.b16 %v197
        %v967 = vunpack.c.l.b16 %v198
        %v968 = vunpack.c.l.b16 %v200
        %v969 = vunpack.c.l.b16 %v201
        %v970 = vunpack.c.l.b16 %v203
        %v971 = vunpack.c.l.b16 %v204
        %v972 = vunpack.c.l.b16 %v206
        %v973 = vunpack.c.l.b16 %v207
        %v974 = vunpack.c.l.b16 %v209
        %v975 = vunpack.c.l.b16 %v210
        %v976 = vunpack.c.l.b16 %v212
        %v977 = vunpack.c.l.b16 %v213
        %v978 = vunpack.c.l.b16 %v215
        %v979 = vunpack.c.l.b16 %v216
        %v980 = vpack.c.b16 %v949, %v948
        %v981 = vpack.c.b16 %v951, %v950
        %v982 = vpack.c.b16 %v953, %v952
        %v983 = vpack.c.b16 %v955, %v954
        %v984 = vpack.c.b16 %v957, %v956
        %v985 = vpack.c.b16 %v959, %v958
        %v986 = vpack.c.b16 %v961, %v960
        %v987 = vpack.c.b16 %v963, %v962
        %v988 = vpack.c.b16 %v965, %v964
        %v989 = vpack.c.b16 %v967, %v966
        %v990 = vpack.c.b16 %v969, %v968
        %v991 = vpack.c.b16 %v971, %v970
        %v992 = vpack.c.b16 %v973, %v972
        %v993 = vpack.c.b16 %v975, %v974
        %v994 = vpack.c.b16 %v977, %v976
        %v995 = vpack.c.b16 %v979, %v978
        %v1028 = vunpack.c.l.b16 %v224
        %v1029 = vunpack.c.l.b16 %v225
        %v1030 = vunpack.c.l.b16 %v226
        %v1031 = vunpack.c.l.b16 %v227
        %v1032 = vunpack.c.l.b16 %v228
        %v1033 = vunpack.c.l.b16 %v229
        %v1034 = vunpack.c.l.b16 %v230
        %v1035 = vunpack.c.l.b16 %v231
        %v1036 = vunpack.c.l.b16 %v232
        %v1037 = vunpack.c.l.b16 %v233
        %v1038 = vunpack.c.l.b16 %v234
        %v1039 = vunpack.c.l.b16 %v235
        %v1040 = vunpack.c.l.b16 %v236
        %v1041 = vunpack.c.l.b16 %v237
        %v1042 = vunpack.c.l.b16 %v238
        %v1043 = vunpack.c.l.b16 %v239
        %v1044 = vpack.c.b16 %v1029, %v1028
        %v1045 = vpack.c.b16 %v1031, %v1030
        %v1046 = vpack.c.b16 %v1033, %v1032
        %v1047 = vpack.c.b16 %v1035, %v1034
        %v1048 = vpack.c.b16 %v1037, %v1036
        %v1049 = vpack.c.b16 %v1039, %v1038
        %v1050 = vpack.c.b16 %v1041, %v1040
        %v1051 = vpack.c.b16 %v1043, %v1042
        %1060 = vmatprep.subr.bf16.mxu0 0
        %1061 = vmatpush1.bf16.msra.mxu0 %v1044
        %1062 = vmatprep.subr.bf16.mxu0 0
        %1063 = vmatpush1.bf16.msra.mxu0 %v1045
        %1064 = vmatprep.subr.bf16.mxu0 0
        %1065 = vmatpush1.bf16.msra.mxu0 %v1046
        %1066 = vmatprep.subr.bf16.mxu0 0
        %1067 = vmatpush1.bf16.msra.mxu0 %v1047
        %1068 = vmatprep.subr.bf16.mxu0 0
        %1069 = vmatpush1.bf16.msra.mxu0 %v1048
        %1070 = vmatprep.subr.bf16.mxu0 0
        %1071 = vmatpush1.bf16.msra.mxu0 %v1049
        %1072 = vmatprep.subr.bf16.mxu0 0
        %1073 = vmatpush1.bf16.msra.mxu0 %v1050
        %1074 = vmatprep.subr.bf16.mxu0 0
        %1075 = vmatpush1.bf16.msra.mxu0 %v1051
        %1076 = vmatprep.subr.bf16.mxu0 0
        %1077 = vmatpush1.bf16.msra.mxu0 0
        %1078 = vmatprep.subr.bf16.mxu0 0
        %1079 = vmatpush1.bf16.msra.mxu0 0
        %1080 = vmatprep.subr.bf16.mxu0 0
        %1081 = vmatpush1.bf16.msra.mxu0 0
        %1082 = vmatprep.subr.bf16.mxu0 0
        %1083 = vmatpush1.bf16.msra.mxu0 0
        %1084 = vmatprep.subr.bf16.mxu0 0
        %1085 = vmatpush1.bf16.msra.mxu0 0
        %1086 = vmatprep.subr.bf16.mxu0 0
        %1087 = vmatpush1.bf16.msra.mxu0 0
        %1088 = vmatprep.subr.bf16.mxu0 0
        %1089 = vmatpush1.bf16.msra.mxu0 0
        %1090 = vmatprep.subr.bf16.mxu0 0
        %1091 = vmatpush1.bf16.msra.mxu0 0
        %1092 = vmatprep.mubr.bf16.mxu0 0
        %1093 = vmatmul.mubr.bf16.gmra.mrb[0].mxu0 %v980
        %v1094 = vpop.f32.mrb[0].mxu0
        %v1095 = vadd.f32 %v790, %v1094
        %v1096 = vpop.f32.mrb[0].mxu0
        %v1097 = vpop.f32.mrb[0].mxu0
        %v1098 = vadd.f32 %v793, %v1097
        %v1099 = vpop.f32.mrb[0].mxu0
        %1100 = vmatprep.mubr.bf16.mxu0 0
        %1101 = vmatmul.mubr.bf16.gmra.mrb[0].mxu0 %v981
        %v1102 = vpop.f32.mrb[0].mxu0
        %v1103 = vadd.f32 %v798, %v1102
        %v1104 = vpop.f32.mrb[0].mxu0
        %v1105 = vpop.f32.mrb[0].mxu0
        %v1106 = vadd.f32 %v801, %v1105
        %v1107 = vpop.f32.mrb[0].mxu0
        %1108 = vmatprep.mubr.bf16.mxu0 0
        %1109 = vmatmul.mubr.bf16.gmra.mrb[0].mxu0 %v982
        %v1110 = vpop.f32.mrb[0].mxu0
        %v1111 = vadd.f32 %v806, %v1110
        %v1112 = vpop.f32.mrb[0].mxu0
        %v1113 = vpop.f32.mrb[0].mxu0
        %v1114 = vadd.f32 %v809, %v1113
        %v1115 = vpop.f32.mrb[0].mxu0
        %1116 = vmatprep.mubr.bf16.mxu0 0
        %1117 = vmatmul.mubr.bf16.gmra.mrb[0].mxu0 %v983
        %v1118 = vpop.f32.mrb[0].mxu0
        %v1119 = vadd.f32 %v814, %v1118
        %v1120 = vpop.f32.mrb[0].mxu0
        %v1121 = vpop.f32.mrb[0].mxu0
        %v1122 = vadd.f32 %v817, %v1121
        %v1123 = vpop.f32.mrb[0].mxu0
        %1124 = vmatprep.mubr.bf16.mxu0 0
        %1125 = vmatmul.mubr.bf16.gmra.mrb[0].mxu0 %v984
        %v1126 = vpop.f32.mrb[0].mxu0
        %v1127 = vadd.f32 %v822, %v1126
        %v1128 = vpop.f32.mrb[0].mxu0
        %v1129 = vpop.f32.mrb[0].mxu0
        %v1130 = vadd.f32 %v825, %v1129
        %v1131 = vpop.f32.mrb[0].mxu0
        %1132 = vmatprep.mubr.bf16.mxu0 0
        %1133 = vmatmul.mubr.bf16.gmra.mrb[0].mxu0 %v985
        %v1134 = vpop.f32.mrb[0].mxu0
        %v1135 = vadd.f32 %v830, %v1134
        %v1136 = vpop.f32.mrb[0].mxu0
        %v1137 = vpop.f32.mrb[0].mxu0
        %v1138 = vadd.f32 %v833, %v1137
        %v1139 = vpop.f32.mrb[0].mxu0
        %1140 = vmatprep.mubr.bf16.mxu0 0
        %1141 = vmatmul.mubr.bf16.gmra.mrb[0].mxu0 %v986
        %v1142 = vpop.f32.mrb[0].mxu0
        %v1143 = vadd.f32 %v838, %v1142
        %v1144 = vpop.f32.mrb[0].mxu0
        %v1145 = vpop.f32.mrb[0].mxu0
        %v1146 = vadd.f32 %v841, %v1145
        %v1147 = vpop.f32.mrb[0].mxu0
        %1148 = vmatprep.mubr.bf16.mxu0 0
        %1149 = vmatmul.mubr.bf16.gmra.mrb[0].mxu0 %v987
        %v1150 = vpop.f32.mrb[0].mxu0
        %v1151 = vadd.f32 %v846, %v1150
        %v1152 = vpop.f32.mrb[0].mxu0
        %v1153 = vpop.f32.mrb[0].mxu0
        %v1154 = vadd.f32 %v849, %v1153
        %v1155 = vpop.f32.mrb[0].mxu0
        %1156 = vmatprep.mubr.bf16.mxu0 0
        %1157 = vmatmul.mubr.bf16.gmra.mrb[0].mxu0 %v988
        %v1158 = vpop.f32.mrb[0].mxu0
        %v1159 = vadd.f32 %v854, %v1158
        %v1160 = vpop.f32.mrb[0].mxu0
        %v1161 = vpop.f32.mrb[0].mxu0
        %v1162 = vadd.f32 %v857, %v1161
        %v1163 = vpop.f32.mrb[0].mxu0
        %1164 = vmatprep.mubr.bf16.mxu0 0
        %1165 = vmatmul.mubr.bf16.gmra.mrb[0].mxu0 %v989
        %v1166 = vpop.f32.mrb[0].mxu0
        %v1167 = vadd.f32 %v862, %v1166
        %v1168 = vpop.f32.mrb[0].mxu0
        %v1169 = vpop.f32.mrb[0].mxu0
        %v1170 = vadd.f32 %v865, %v1169
        %v1171 = vpop.f32.mrb[0].mxu0
        %1172 = vmatprep.mubr.bf16.mxu0 0
        %1173 = vmatmul.mubr.bf16.gmra.mrb[0].mxu0 %v990
        %v1174 = vpop.f32.mrb[0].mxu0
        %v1175 = vadd.f32 %v870, %v1174
        %v1176 = vpop.f32.mrb[0].mxu0
        %v1177 = vpop.f32.mrb[0].mxu0
        %v1178 = vadd.f32 %v873, %v1177
        %v1179 = vpop.f32.mrb[0].mxu0
        %1180 = vmatprep.mubr.bf16.mxu0 0
        %1181 = vmatmul.mubr.bf16.gmra.mrb[0].mxu0 %v991
        %v1182 = vpop.f32.mrb[0].mxu0
        %v1183 = vadd.f32 %v878, %v1182
        %v1184 = vpop.f32.mrb[0].mxu0
        %v1185 = vpop.f32.mrb[0].mxu0
        %v1186 = vadd.f32 %v881, %v1185
        %v1187 = vpop.f32.mrb[0].mxu0
        %1188 = vmatprep.mubr.bf16.mxu0 0
        %1189 = vmatmul.mubr.bf16.gmra.mrb[0].mxu0 %v992
        %v1190 = vpop.f32.mrb[0].mxu0
        %v1191 = vadd.f32 %v886, %v1190
        %v1192 = vpop.f32.mrb[0].mxu0
        %v1193 = vpop.f32.mrb[0].mxu0
        %v1194 = vadd.f32 %v889, %v1193
        %v1195 = vpop.f32.mrb[0].mxu0
        %1196 = vmatprep.mubr.bf16.mxu0 0
        %1197 = vmatmul.mubr.bf16.gmra.mrb[0].mxu0 %v993
        %v1198 = vpop.f32.mrb[0].mxu0
        %v1199 = vadd.f32 %v894, %v1198
        %v1200 = vpop.f32.mrb[0].mxu0
        %v1201 = vpop.f32.mrb[0].mxu0
        %v1202 = vadd.f32 %v897, %v1201
        %v1203 = vpop.f32.mrb[0].mxu0
        %1204 = vmatprep.mubr.bf16.mxu0 0
        %1205 = vmatmul.mubr.bf16.gmra.mrb[0].mxu0 %v994
        %v1206 = vpop.f32.mrb[0].mxu0
        %v1207 = vadd.f32 %v902, %v1206
        %v1208 = vpop.f32.mrb[0].mxu0
        %v1209 = vpop.f32.mrb[0].mxu0
        %v1210 = vadd.f32 %v905, %v1209
        %v1211 = vpop.f32.mrb[0].mxu0
        %1212 = vmatprep.mubr.bf16.mxu0 0
        %1213 = vmatmul.mubr.bf16.gmra.mrb[0].mxu0 %v995
        %v1214 = vpop.f32.mrb[0].mxu0
        %v1215 = vadd.f32 %v910, %v1214
        %v1216 = vpop.f32.mrb[0].mxu0
        %v1217 = vpop.f32.mrb[0].mxu0
        %v1218 = vadd.f32 %v913, %v1217
        %v1219 = vpop.f32.mrb[0].mxu0
        %1220 = vdwg.mxu0
        %vm1237 = vcmask 1042432
        %vm1238 = vcmask 1046532
        %vm1239 = vmor %vm1237, %vm1238
        %v1240 = vrot.slane %v170, 5
        %v1241 = vrot.slane %v1240, 4
        %v1242 = vrot.slane %v171, 5
        %v1243 = vsel %vm1239, %v1241, %v1242
        %v1244 = vrot.slane %v1242, 4
        %v1245 = vrot.slane %v172, 5
        %v1246 = vsel %vm1239, %v1244, %v1245
        %v1247 = vrot.slane %v173, 5
        %v1248 = vrot.slane %v1247, 4
        %v1249 = vrot.slane %v174, 5
        %v1250 = vsel %vm1239, %v1248, %v1249
        %v1251 = vrot.slane %v1249, 4
        %v1252 = vrot.slane %v175, 5
        %v1253 = vsel %vm1239, %v1251, %v1252
        %v1254 = vrot.slane %v176, 5
        %v1255 = vrot.slane %v1254, 4
        %v1256 = vrot.slane %v177, 5
        %v1257 = vsel %vm1239, %v1255, %v1256
        %v1258 = vrot.slane %v1256, 4
        %v1259 = vrot.slane %v178, 5
        %v1260 = vsel %vm1239, %v1258, %v1259
        %v1261 = vrot.slane %v179, 5
        %v1262 = vrot.slane %v1261, 4
        %v1263 = vrot.slane %v180, 5
        %v1264 = vsel %vm1239, %v1262, %v1263
        %v1265 = vrot.slane %v1263, 4
        %v1266 = vrot.slane %v181, 5
        %v1267 = vsel %vm1239, %v1265, %v1266
        %v1268 = vrot.slane %v182, 5
        %v1269 = vrot.slane %v1268, 4
        %v1270 = vrot.slane %v183, 5
        %v1271 = vsel %vm1239, %v1269, %v1270
        %v1272 = vrot.slane %v1270, 4
        %v1273 = vrot.slane %v184, 5
        %v1274 = vsel %vm1239, %v1272, %v1273
        %v1275 = vrot.slane %v185, 5
        %v1276 = vrot.slane %v1275, 4
        %v1277 = vrot.slane %v186, 5
        %v1278 = vsel %vm1239, %v1276, %v1277
        %v1279 = vrot.slane %v1277, 4
        %v1280 = vrot.slane %v187, 5
        %v1281 = vsel %vm1239, %v1279, %v1280
        %v1282 = vrot.slane %v188, 5
        %v1283 = vrot.slane %v1282, 4
        %v1284 = vrot.slane %v189, 5
        %v1285 = vsel %vm1239, %v1283, %v1284
        %v1286 = vrot.slane %v1284, 4
        %v1287 = vrot.slane %v190, 5
        %v1288 = vsel %vm1239, %v1286, %v1287
        %v1289 = vrot.slane %v191, 5
        %v1290 = vrot.slane %v1289, 4
        %v1291 = vrot.slane %v192, 5
        %v1292 = vsel %vm1239, %v1290, %v1291
        %v1293 = vrot.slane %v1291, 4
        %v1294 = vrot.slane %v193, 5
        %v1295 = vsel %vm1239, %v1293, %v1294
        %v1296 = vrot.slane %v194, 5
        %v1297 = vrot.slane %v1296, 4
        %v1298 = vrot.slane %v195, 5
        %v1299 = vsel %vm1239, %v1297, %v1298
        %v1300 = vrot.slane %v1298, 4
        %v1301 = vrot.slane %v196, 5
        %v1302 = vsel %vm1239, %v1300, %v1301
        %v1303 = vrot.slane %v197, 5
        %v1304 = vrot.slane %v1303, 4
        %v1305 = vrot.slane %v198, 5
        %v1306 = vsel %vm1239, %v1304, %v1305
        %v1307 = vrot.slane %v1305, 4
        %v1308 = vrot.slane %v199, 5
        %v1309 = vsel %vm1239, %v1307, %v1308
        %v1310 = vrot.slane %v200, 5
        %v1311 = vrot.slane %v1310, 4
        %v1312 = vrot.slane %v201, 5
        %v1313 = vsel %vm1239, %v1311, %v1312
        %v1314 = vrot.slane %v1312, 4
        %v1315 = vrot.slane %v202, 5
        %v1316 = vsel %vm1239, %v1314, %v1315
        %v1317 = vrot.slane %v203, 5
        %v1318 = vrot.slane %v1317, 4
        %v1319 = vrot.slane %v204, 5
        %v1320 = vsel %vm1239, %v1318, %v1319
        %v1321 = vrot.slane %v1319, 4
        %v1322 = vrot.slane %v205, 5
        %v1323 = vsel %vm1239, %v1321, %v1322
        %v1324 = vrot.slane %v206, 5
        %v1325 = vrot.slane %v1324, 4
        %v1326 = vrot.slane %v207, 5
        %v1327 = vsel %vm1239, %v1325, %v1326
        %v1328 = vrot.slane %v1326, 4
        %v1329 = vrot.slane %v208, 5
        %v1330 = vsel %vm1239, %v1328, %v1329
        %v1331 = vrot.slane %v209, 5
        %v1332 = vrot.slane %v1331, 4
        %v1333 = vrot.slane %v210, 5
        %v1334 = vsel %vm1239, %v1332, %v1333
        %v1335 = vrot.slane %v1333, 4
        %v1336 = vrot.slane %v211, 5
        %v1337 = vsel %vm1239, %v1335, %v1336
        %v1338 = vrot.slane %v212, 5
        %v1339 = vrot.slane %v1338, 4
        %v1340 = vrot.slane %v213, 5
        %v1341 = vsel %vm1239, %v1339, %v1340
        %v1342 = vrot.slane %v1340, 4
        %v1343 = vrot.slane %v214, 5
        %v1344 = vsel %vm1239, %v1342, %v1343
        %v1345 = vrot.slane %v215, 5
        %v1346 = vrot.slane %v1345, 4
        %v1347 = vrot.slane %v216, 5
        %v1348 = vsel %vm1239, %v1346, %v1347
        %v1349 = vrot.slane %v1347, 4
        %v1350 = vrot.slane %v217, 5
        %v1351 = vsel %vm1239, %v1349, %v1350
        %v1352 = vld [vmem:[%s1 + $0x80] sm:$0xf]
        %v1353 = vld [vmem:[%s1 + $0x84] sm:$0xf]
        %v1354 = vld [vmem:[%s1 + $0x88] sm:$0xf]
        %v1355 = vld [vmem:[%s1 + $0x8c] sm:$0xf]
        %v1356 = vld [vmem:[%s1 + $0x90] sm:$0xf]
        %v1357 = vld [vmem:[%s1 + $0x94] sm:$0xf]
        %v1358 = vld [vmem:[%s1 + $0x98] sm:$0xf]
        %v1359 = vld [vmem:[%s1 + $0x9c] sm:$0xf]
        %v1360 = vld [vmem:[%s1 + $0xa0] sm:$0xf]
        %v1361 = vld [vmem:[%s1 + $0xa4] sm:$0xf]
        %v1362 = vld [vmem:[%s1 + $0xa8] sm:$0xf]
        %v1363 = vld [vmem:[%s1 + $0xac] sm:$0xf]
        %v1364 = vld [vmem:[%s1 + $0xb0] sm:$0xf]
        %v1365 = vld [vmem:[%s1 + $0xb4] sm:$0xf]
        %v1366 = vld [vmem:[%s1 + $0xb8] sm:$0xf]
        %v1367 = vld [vmem:[%s1 + $0xbc] sm:$0xf]
        %v1368 = vunpack.c.l.b16 %v1243
        %v1369 = vunpack.c.l.b16 %v1246
        %v1370 = vunpack.c.l.b16 %v1250
        %v1371 = vunpack.c.l.b16 %v1253
        %v1372 = vunpack.c.l.b16 %v1257
        %v1373 = vunpack.c.l.b16 %v1260
        %v1374 = vunpack.c.l.b16 %v1264
        %v1375 = vunpack.c.l.b16 %v1267
        %v1376 = vunpack.c.l.b16 %v1271
        %v1377 = vunpack.c.l.b16 %v1274
        %v1378 = vunpack.c.l.b16 %v1278
        %v1379 = vunpack.c.l.b16 %v1281
        %v1380 = vunpack.c.l.b16 %v1285
        %v1381 = vunpack.c.l.b16 %v1288
        %v1382 = vunpack.c.l.b16 %v1292
        %v1383 = vunpack.c.l.b16 %v1295
        %v1384 = vunpack.c.l.b16 %v1299
        %v1385 = vunpack.c.l.b16 %v1302
        %v1386 = vunpack.c.l.b16 %v1306
        %v1387 = vunpack.c.l.b16 %v1309
        %v1388 = vunpack.c.l.b16 %v1313
        %v1389 = vunpack.c.l.b16 %v1316
        %v1390 = vunpack.c.l.b16 %v1320
        %v1391 = vunpack.c.l.b16 %v1323
        %v1392 = vunpack.c.l.b16 %v1327
        %v1393 = vunpack.c.l.b16 %v1330
        %v1394 = vunpack.c.l.b16 %v1334
        %v1395 = vunpack.c.l.b16 %v1337
        %v1396 = vunpack.c.l.b16 %v1341
        %v1397 = vunpack.c.l.b16 %v1344
        %v1398 = vunpack.c.l.b16 %v1348
        %v1399 = vunpack.c.l.b16 %v1351
        %v1400 = vpack.c.b16 %v1369, %v1368
        %v1401 = vpack.c.b16 %v1371, %v1370
        %v1402 = vpack.c.b16 %v1373, %v1372
        %v1403 = vpack.c.b16 %v1375, %v1374
        %v1404 = vpack.c.b16 %v1377, %v1376
        %v1405 = vpack.c.b16 %v1379, %v1378
        %v1406 = vpack.c.b16 %v1381, %v1380
        %v1407 = vpack.c.b16 %v1383, %v1382
        %v1408 = vpack.c.b16 %v1385, %v1384
        %v1409 = vpack.c.b16 %v1387, %v1386
        %v1410 = vpack.c.b16 %v1389, %v1388
        %v1411 = vpack.c.b16 %v1391, %v1390
        %v1412 = vpack.c.b16 %v1393, %v1392
        %v1413 = vpack.c.b16 %v1395, %v1394
        %v1414 = vpack.c.b16 %v1397, %v1396
        %v1415 = vpack.c.b16 %v1399, %v1398
        %v1448 = vunpack.c.l.b16 %v1352
        %v1449 = vunpack.c.l.b16 %v1353
        %v1450 = vunpack.c.l.b16 %v1354
        %v1451 = vunpack.c.l.b16 %v1355
        %v1452 = vunpack.c.l.b16 %v1356
        %v1453 = vunpack.c.l.b16 %v1357
        %v1454 = vunpack.c.l.b16 %v1358
        %v1455 = vunpack.c.l.b16 %v1359
        %v1456 = vunpack.c.l.b16 %v1360
        %v1457 = vunpack.c.l.b16 %v1361
        %v1458 = vunpack.c.l.b16 %v1362
        %v1459 = vunpack.c.l.b16 %v1363
        %v1460 = vunpack.c.l.b16 %v1364
        %v1461 = vunpack.c.l.b16 %v1365
        %v1462 = vunpack.c.l.b16 %v1366
        %v1463 = vunpack.c.l.b16 %v1367
        %v1464 = vpack.c.b16 %v1449, %v1448
        %v1465 = vpack.c.b16 %v1451, %v1450
        %v1466 = vpack.c.b16 %v1453, %v1452
        %v1467 = vpack.c.b16 %v1455, %v1454
        %v1468 = vpack.c.b16 %v1457, %v1456
        %v1469 = vpack.c.b16 %v1459, %v1458
        %v1470 = vpack.c.b16 %v1461, %v1460
        %v1471 = vpack.c.b16 %v1463, %v1462
        %1480 = vmatprep.subr.bf16.mxu0 0
        %1481 = vmatpush1.bf16.msra.mxu0 %v1464
        %1482 = vmatprep.subr.bf16.mxu0 0
        %1483 = vmatpush1.bf16.msra.mxu0 %v1465
        %1484 = vmatprep.subr.bf16.mxu0 0
        %1485 = vmatpush1.bf16.msra.mxu0 %v1466
        %1486 = vmatprep.subr.bf16.mxu0 0
        %1487 = vmatpush1.bf16.msra.mxu0 %v1467
        %1488 = vmatprep.subr.bf16.mxu0 0
        %1489 = vmatpush1.bf16.msra.mxu0 %v1468
        %1490 = vmatprep.subr.bf16.mxu0 0
        %1491 = vmatpush1.bf16.msra.mxu0 %v1469
        %1492 = vmatprep.subr.bf16.mxu0 0
        %1493 = vmatpush1.bf16.msra.mxu0 %v1470
        %1494 = vmatprep.subr.bf16.mxu0 0
        %1495 = vmatpush1.bf16.msra.mxu0 %v1471
        %1496 = vmatprep.subr.bf16.mxu0 0
        %1497 = vmatpush1.bf16.msra.mxu0 0
        %1498 = vmatprep.subr.bf16.mxu0 0
        %1499 = vmatpush1.bf16.msra.mxu0 0
        %1500 = vmatprep.subr.bf16.mxu0 0
        %1501 = vmatpush1.bf16.msra.mxu0 0
        %1502 = vmatprep.subr.bf16.mxu0 0
        %1503 = vmatpush1.bf16.msra.mxu0 0
        %1504 = vmatprep.subr.bf16.mxu0 0
        %1505 = vmatpush1.bf16.msra.mxu0 0
        %1506 = vmatprep.subr.bf16.mxu0 0
        %1507 = vmatpush1.bf16.msra.mxu0 0
        %1508 = vmatprep.subr.bf16.mxu0 0
        %1509 = vmatpush1.bf16.msra.mxu0 0
        %1510 = vmatprep.subr.bf16.mxu0 0
        %1511 = vmatpush1.bf16.msra.mxu0 0
        %1512 = vmatprep.mubr.bf16.mxu0 0
        %1513 = vmatmul.mubr.bf16.gmra.mrb[0].mxu0 %v1400
        %v1514 = vpop.f32.mrb[0].mxu0
        %v1515 = vadd.f32 0.0, %v1514
        %v1516 = vpop.f32.mrb[0].mxu0
        %v1517 = vpop.f32.mrb[0].mxu0
        %v1518 = vadd.f32 0.0, %v1517
        %v1519 = vpop.f32.mrb[0].mxu0
        %1520 = vmatprep.mubr.bf16.mxu0 0
        %1521 = vmatmul.mubr.bf16.gmra.mrb[0].mxu0 %v1401
        %v1522 = vpop.f32.mrb[0].mxu0
        %v1523 = vadd.f32 0.0, %v1522
        %v1524 = vpop.f32.mrb[0].mxu0
        %v1525 = vpop.f32.mrb[0].mxu0
        %v1526 = vadd.f32 0.0, %v1525
        %v1527 = vpop.f32.mrb[0].mxu0
        %1528 = vmatprep.mubr.bf16.mxu0 0
        %1529 = vmatmul.mubr.bf16.gmra.mrb[0].mxu0 %v1402
        %v1530 = vpop.f32.mrb[0].mxu0
        %v1531 = vadd.f32 0.0, %v1530
        %v1532 = vpop.f32.mrb[0].mxu0
        %v1533 = vpop.f32.mrb[0].mxu0
        %v1534 = vadd.f32 0.0, %v1533
        %v1535 = vpop.f32.mrb[0].mxu0
        %1536 = vmatprep.mubr.bf16.mxu0 0
        %1537 = vmatmul.mubr.bf16.gmra.mrb[0].mxu0 %v1403
        %v1538 = vpop.f32.mrb[0].mxu0
        %v1539 = vadd.f32 0.0, %v1538
        %v1540 = vpop.f32.mrb[0].mxu0
        %v1541 = vpop.f32.mrb[0].mxu0
        %v1542 = vadd.f32 0.0, %v1541
        %v1543 = vpop.f32.mrb[0].mxu0
        %1544 = vmatprep.mubr.bf16.mxu0 0
        %1545 = vmatmul.mubr.bf16.gmra.mrb[0].mxu0 %v1404
        %v1546 = vpop.f32.mrb[0].mxu0
        %v1547 = vadd.f32 0.0, %v1546
        %v1548 = vpop.f32.mrb[0].mxu0
        %v1549 = vpop.f32.mrb[0].mxu0
        %v1550 = vadd.f32 0.0, %v1549
        %v1551 = vpop.f32.mrb[0].mxu0
        %1552 = vmatprep.mubr.bf16.mxu0 0
        %1553 = vmatmul.mubr.bf16.gmra.mrb[0].mxu0 %v1405
        %v1554 = vpop.f32.mrb[0].mxu0
        %v1555 = vadd.f32 0.0, %v1554
        %v1556 = vpop.f32.mrb[0].mxu0
        %v1557 = vpop.f32.mrb[0].mxu0
        %v1558 = vadd.f32 0.0, %v1557
        %v1559 = vpop.f32.mrb[0].mxu0
        %1560 = vmatprep.mubr.bf16.mxu0 0
        %1561 = vmatmul.mubr.bf16.gmra.mrb[0].mxu0 %v1406
        %v1562 = vpop.f32.mrb[0].mxu0
        %v1563 = vadd.f32 0.0, %v1562
        %v1564 = vpop.f32.mrb[0].mxu0
        %v1565 = vpop.f32.mrb[0].mxu0
        %v1566 = vadd.f32 0.0, %v1565
        %v1567 = vpop.f32.mrb[0].mxu0
        %1568 = vmatprep.mubr.bf16.mxu0 0
        %1569 = vmatmul.mubr.bf16.gmra.mrb[0].mxu0 %v1407
        %v1570 = vpop.f32.mrb[0].mxu0
        %v1571 = vadd.f32 0.0, %v1570
        %v1572 = vpop.f32.mrb[0].mxu0
        %v1573 = vpop.f32.mrb[0].mxu0
        %v1574 = vadd.f32 0.0, %v1573
        %v1575 = vpop.f32.mrb[0].mxu0
        %1576 = vmatprep.mubr.bf16.mxu0 0
        %1577 = vmatmul.mubr.bf16.gmra.mrb[0].mxu0 %v1408
        %v1578 = vpop.f32.mrb[0].mxu0
        %v1579 = vadd.f32 0.0, %v1578
        %v1580 = vpop.f32.mrb[0].mxu0
        %v1581 = vpop.f32.mrb[0].mxu0
        %v1582 = vadd.f32 0.0, %v1581
        %v1583 = vpop.f32.mrb[0].mxu0
        %1584 = vmatprep.mubr.bf16.mxu0 0
        %1585 = vmatmul.mubr.bf16.gmra.mrb[0].mxu0 %v1409
        %v1586 = vpop.f32.mrb[0].mxu0
        %v1587 = vadd.f32 0.0, %v1586
        %v1588 = vpop.f32.mrb[0].mxu0
        %v1589 = vpop.f32.mrb[0].mxu0
        %v1590 = vadd.f32 0.0, %v1589
        %v1591 = vpop.f32.mrb[0].mxu0
        %1592 = vmatprep.mubr.bf16.mxu0 0
        %1593 = vmatmul.mubr.bf16.gmra.mrb[0].mxu0 %v1410
        %v1594 = vpop.f32.mrb[0].mxu0
        %v1595 = vadd.f32 0.0, %v1594
        %v1596 = vpop.f32.mrb[0].mxu0
        %v1597 = vpop.f32.mrb[0].mxu0
        %v1598 = vadd.f32 0.0, %v1597
        %v1599 = vpop.f32.mrb[0].mxu0
        %1600 = vmatprep.mubr.bf16.mxu0 0
        %1601 = vmatmul.mubr.bf16.gmra.mrb[0].mxu0 %v1411
        %v1602 = vpop.f32.mrb[0].mxu0
        %v1603 = vadd.f32 0.0, %v1602
        %v1604 = vpop.f32.mrb[0].mxu0
        %v1605 = vpop.f32.mrb[0].mxu0
        %v1606 = vadd.f32 0.0, %v1605
        %v1607 = vpop.f32.mrb[0].mxu0
        %1608 = vmatprep.mubr.bf16.mxu0 0
        %1609 = vmatmul.mubr.bf16.gmra.mrb[0].mxu0 %v1412
        %v1610 = vpop.f32.mrb[0].mxu0
        %v1611 = vadd.f32 0.0, %v1610
        %v1612 = vpop.f32.mrb[0].mxu0
        %v1613 = vpop.f32.mrb[0].mxu0
        %v1614 = vadd.f32 0.0, %v1613
        %v1615 = vpop.f32.mrb[0].mxu0
        %1616 = vmatprep.mubr.bf16.mxu0 0
        %1617 = vmatmul.mubr.bf16.gmra.mrb[0].mxu0 %v1413
        %v1618 = vpop.f32.mrb[0].mxu0
        %v1619 = vadd.f32 0.0, %v1618
        %v1620 = vpop.f32.mrb[0].mxu0
        %v1621 = vpop.f32.mrb[0].mxu0
        %v1622 = vadd.f32 0.0, %v1621
        %v1623 = vpop.f32.mrb[0].mxu0
        %1624 = vmatprep.mubr.bf16.mxu0 0
        %1625 = vmatmul.mubr.bf16.gmra.mrb[0].mxu0 %v1414
        %v1626 = vpop.f32.mrb[0].mxu0
        %v1627 = vadd.f32 0.0, %v1626
        %v1628 = vpop.f32.mrb[0].mxu0
        %v1629 = vpop.f32.mrb[0].mxu0
        %v1630 = vadd.f32 0.0, %v1629
        %v1631 = vpop.f32.mrb[0].mxu0
        %1632 = vmatprep.mubr.bf16.mxu0 0
        %1633 = vmatmul.mubr.bf16.gmra.mrb[0].mxu0 %v1415
        %v1634 = vpop.f32.mrb[0].mxu0
        %v1635 = vadd.f32 0.0, %v1634
        %v1636 = vpop.f32.mrb[0].mxu0
        %v1637 = vpop.f32.mrb[0].mxu0
        %v1638 = vadd.f32 0.0, %v1637
        %v1639 = vpop.f32.mrb[0].mxu0
        %1640 = vdwg.mxu0
        %v1641 = vadd.f32 %v1095, %v1515
        %v1642 = vadd.f32 %v1098, %v1518
        %v1643 = vadd.f32 %v1103, %v1523
        %v1644 = vadd.f32 %v1106, %v1526
        %v1645 = vadd.f32 %v1111, %v1531
        %v1646 = vadd.f32 %v1114, %v1534
        %v1647 = vadd.f32 %v1119, %v1539
        %v1648 = vadd.f32 %v1122, %v1542
        %v1649 = vadd.f32 %v1127, %v1547
        %v1650 = vadd.f32 %v1130, %v1550
        %v1651 = vadd.f32 %v1135, %v1555
        %v1652 = vadd.f32 %v1138, %v1558
        %v1653 = vadd.f32 %v1143, %v1563
        %v1654 = vadd.f32 %v1146, %v1566
        %v1655 = vadd.f32 %v1151, %v1571
        %v1656 = vadd.f32 %v1154, %v1574
        %v1657 = vadd.f32 %v1159, %v1579
        %v1658 = vadd.f32 %v1162, %v1582
        %v1659 = vadd.f32 %v1167, %v1587
        %v1660 = vadd.f32 %v1170, %v1590
        %v1661 = vadd.f32 %v1175, %v1595
        %v1662 = vadd.f32 %v1178, %v1598
        %v1663 = vadd.f32 %v1183, %v1603
        %v1664 = vadd.f32 %v1186, %v1606
        %v1665 = vadd.f32 %v1191, %v1611
        %v1666 = vadd.f32 %v1194, %v1614
        %v1667 = vadd.f32 %v1199, %v1619
        %v1668 = vadd.f32 %v1202, %v1622
        %v1669 = vadd.f32 %v1207, %v1627
        %v1670 = vadd.f32 %v1210, %v1630
        %v1671 = vadd.f32 %v1215, %v1635
        %v1672 = vadd.f32 %v1218, %v1638
        %v1673 = vld [vmem:[%s1 + $0xc0] sm:$0xf]
        %v1674 = vld [vmem:[%s1 + $0xc4] sm:$0xf]
        %v1675 = vld [vmem:[%s1 + $0xc8] sm:$0xf]
        %v1676 = vld [vmem:[%s1 + $0xcc] sm:$0xf]
        %v1677 = vld [vmem:[%s1 + $0xd0] sm:$0xf]
        %v1678 = vld [vmem:[%s1 + $0xd4] sm:$0xf]
        %v1679 = vld [vmem:[%s1 + $0xd8] sm:$0xf]
        %v1680 = vld [vmem:[%s1 + $0xdc] sm:$0xf]
        %v1681 = vld [vmem:[%s1 + $0xe0] sm:$0xf]
        %v1682 = vld [vmem:[%s1 + $0xe4] sm:$0xf]
        %v1683 = vld [vmem:[%s1 + $0xe8] sm:$0xf]
        %v1684 = vld [vmem:[%s1 + $0xec] sm:$0xf]
        %v1685 = vld [vmem:[%s1 + $0xf0] sm:$0xf]
        %v1686 = vld [vmem:[%s1 + $0xf4] sm:$0xf]
        %v1687 = vld [vmem:[%s1 + $0xf8] sm:$0xf]
        %v1688 = vld [vmem:[%s1 + $0xfc] sm:$0xf]
        %v1691 = vunpack.c.l.b16 %v218
        %v1692 = vunpack.c.l.b16 %v219
        %v1693 = vpack.c.b16 %v1692, %v1691
        %v1711 = vunpack.c.l.b16 %v1673
        %v1712 = vunpack.c.l.b16 %v1674
        %v1713 = vunpack.c.l.b16 %v1675
        %v1714 = vunpack.c.l.b16 %v1676
        %v1715 = vunpack.c.l.b16 %v1677
        %v1716 = vunpack.c.l.b16 %v1678
        %v1717 = vunpack.c.l.b16 %v1679
        %v1718 = vunpack.c.l.b16 %v1680
        %v1719 = vunpack.c.l.b16 %v1681
        %v1720 = vunpack.c.l.b16 %v1682
        %v1721 = vunpack.c.l.b16 %v1683
        %v1722 = vunpack.c.l.b16 %v1684
        %v1723 = vunpack.c.l.b16 %v1685
        %v1724 = vunpack.c.l.b16 %v1686
        %v1725 = vunpack.c.l.b16 %v1687
        %v1726 = vunpack.c.l.b16 %v1688
        %v1727 = vpack.c.b16 %v1712, %v1711
        %v1728 = vpack.c.b16 %v1714, %v1713
        %v1729 = vpack.c.b16 %v1716, %v1715
        %v1730 = vpack.c.b16 %v1718, %v1717
        %v1731 = vpack.c.b16 %v1720, %v1719
        %v1732 = vpack.c.b16 %v1722, %v1721
        %v1733 = vpack.c.b16 %v1724, %v1723
        %v1734 = vpack.c.b16 %v1726, %v1725
        %1743 = vmatprep.subr.bf16.mxu0 0
        %1744 = vmatpush1.bf16.msra.mxu0 %v1727
        %1745 = vmatprep.subr.bf16.mxu0 0
        %1746 = vmatpush1.bf16.msra.mxu0 %v1728
        %1747 = vmatprep.subr.bf16.mxu0 0
        %1748 = vmatpush1.bf16.msra.mxu0 %v1729
        %1749 = vmatprep.subr.bf16.mxu0 0
        %1750 = vmatpush1.bf16.msra.mxu0 %v1730
        %1751 = vmatprep.subr.bf16.mxu0 0
        %1752 = vmatpush1.bf16.msra.mxu0 %v1731
        %1753 = vmatprep.subr.bf16.mxu0 0
        %1754 = vmatpush1.bf16.msra.mxu0 %v1732
        %1755 = vmatprep.subr.bf16.mxu0 0
        %1756 = vmatpush1.bf16.msra.mxu0 %v1733
        %1757 = vmatprep.subr.bf16.mxu0 0
        %1758 = vmatpush1.bf16.msra.mxu0 %v1734
        %1759 = vmatprep.subr.bf16.mxu0 0
        %1760 = vmatpush1.bf16.msra.mxu0 0
        %1761 = vmatprep.subr.bf16.mxu0 0
        %1762 = vmatpush1.bf16.msra.mxu0 0
        %1763 = vmatprep.subr.bf16.mxu0 0
        %1764 = vmatpush1.bf16.msra.mxu0 0
        %1765 = vmatprep.subr.bf16.mxu0 0
        %1766 = vmatpush1.bf16.msra.mxu0 0
        %1767 = vmatprep.subr.bf16.mxu0 0
        %1768 = vmatpush1.bf16.msra.mxu0 0
        %1769 = vmatprep.subr.bf16.mxu0 0
        %1770 = vmatpush1.bf16.msra.mxu0 0
        %1771 = vmatprep.subr.bf16.mxu0 0
        %1772 = vmatpush1.bf16.msra.mxu0 0
        %1773 = vmatprep.subr.bf16.mxu0 0
        %1774 = vmatpush1.bf16.msra.mxu0 0
        %1775 = vmatprep.mubr.bf16.mxu0 0
        %1776 = vmatmul.mubr.bf16.gmra.mrb[0].mxu0 %v981
        %v1777 = vpop.f32.mrb[0].mxu0
        %v1778 = vadd.f32 0.0, %v1777
        %v1779 = vpop.f32.mrb[0].mxu0
        %v1780 = vpop.f32.mrb[0].mxu0
        %v1781 = vadd.f32 0.0, %v1780
        %v1782 = vpop.f32.mrb[0].mxu0
        %1783 = vmatprep.mubr.bf16.mxu0 0
        %1784 = vmatmul.mubr.bf16.gmra.mrb[0].mxu0 %v982
        %v1785 = vpop.f32.mrb[0].mxu0
        %v1786 = vadd.f32 0.0, %v1785
        %v1787 = vpop.f32.mrb[0].mxu0
        %v1788 = vpop.f32.mrb[0].mxu0
        %v1789 = vadd.f32 0.0, %v1788
        %v1790 = vpop.f32.mrb[0].mxu0
        %1791 = vmatprep.mubr.bf16.mxu0 0
        %1792 = vmatmul.mubr.bf16.gmra.mrb[0].mxu0 %v983
        %v1793 = vpop.f32.mrb[0].mxu0
        %v1794 = vadd.f32 0.0, %v1793
        %v1795 = vpop.f32.mrb[0].mxu0
        %v1796 = vpop.f32.mrb[0].mxu0
        %v1797 = vadd.f32 0.0, %v1796
        %v1798 = vpop.f32.mrb[0].mxu0
        %1799 = vmatprep.mubr.bf16.mxu0 0
        %1800 = vmatmul.mubr.bf16.gmra.mrb[0].mxu0 %v984
        %v1801 = vpop.f32.mrb[0].mxu0
        %v1802 = vadd.f32 0.0, %v1801
        %v1803 = vpop.f32.mrb[0].mxu0
        %v1804 = vpop.f32.mrb[0].mxu0
        %v1805 = vadd.f32 0.0, %v1804
        %v1806 = vpop.f32.mrb[0].mxu0
        %1807 = vmatprep.mubr.bf16.mxu0 0
        %1808 = vmatmul.mubr.bf16.gmra.mrb[0].mxu0 %v985
        %v1809 = vpop.f32.mrb[0].mxu0
        %v1810 = vadd.f32 0.0, %v1809
        %v1811 = vpop.f32.mrb[0].mxu0
        %v1812 = vpop.f32.mrb[0].mxu0
        %v1813 = vadd.f32 0.0, %v1812
        %v1814 = vpop.f32.mrb[0].mxu0
        %1815 = vmatprep.mubr.bf16.mxu0 0
        %1816 = vmatmul.mubr.bf16.gmra.mrb[0].mxu0 %v986
        %v1817 = vpop.f32.mrb[0].mxu0
        %v1818 = vadd.f32 0.0, %v1817
        %v1819 = vpop.f32.mrb[0].mxu0
        %v1820 = vpop.f32.mrb[0].mxu0
        %v1821 = vadd.f32 0.0, %v1820
        %v1822 = vpop.f32.mrb[0].mxu0
        %1823 = vmatprep.mubr.bf16.mxu0 0
        %1824 = vmatmul.mubr.bf16.gmra.mrb[0].mxu0 %v987
        %v1825 = vpop.f32.mrb[0].mxu0
        %v1826 = vadd.f32 0.0, %v1825
        %v1827 = vpop.f32.mrb[0].mxu0
        %v1828 = vpop.f32.mrb[0].mxu0
        %v1829 = vadd.f32 0.0, %v1828
        %v1830 = vpop.f32.mrb[0].mxu0
        %1831 = vmatprep.mubr.bf16.mxu0 0
        %1832 = vmatmul.mubr.bf16.gmra.mrb[0].mxu0 %v988
        %v1833 = vpop.f32.mrb[0].mxu0
        %v1834 = vadd.f32 0.0, %v1833
        %v1835 = vpop.f32.mrb[0].mxu0
        %v1836 = vpop.f32.mrb[0].mxu0
        %v1837 = vadd.f32 0.0, %v1836
        %v1838 = vpop.f32.mrb[0].mxu0
        %1839 = vmatprep.mubr.bf16.mxu0 0
        %1840 = vmatmul.mubr.bf16.gmra.mrb[0].mxu0 %v989
        %v1841 = vpop.f32.mrb[0].mxu0
        %v1842 = vadd.f32 0.0, %v1841
        %v1843 = vpop.f32.mrb[0].mxu0
        %v1844 = vpop.f32.mrb[0].mxu0
        %v1845 = vadd.f32 0.0, %v1844
        %v1846 = vpop.f32.mrb[0].mxu0
        %1847 = vmatprep.mubr.bf16.mxu0 0
        %1848 = vmatmul.mubr.bf16.gmra.mrb[0].mxu0 %v990
        %v1849 = vpop.f32.mrb[0].mxu0
        %v1850 = vadd.f32 0.0, %v1849
        %v1851 = vpop.f32.mrb[0].mxu0
        %v1852 = vpop.f32.mrb[0].mxu0
        %v1853 = vadd.f32 0.0, %v1852
        %v1854 = vpop.f32.mrb[0].mxu0
        %1855 = vmatprep.mubr.bf16.mxu0 0
        %1856 = vmatmul.mubr.bf16.gmra.mrb[0].mxu0 %v991
        %v1857 = vpop.f32.mrb[0].mxu0
        %v1858 = vadd.f32 0.0, %v1857
        %v1859 = vpop.f32.mrb[0].mxu0
        %v1860 = vpop.f32.mrb[0].mxu0
        %v1861 = vadd.f32 0.0, %v1860
        %v1862 = vpop.f32.mrb[0].mxu0
        %1863 = vmatprep.mubr.bf16.mxu0 0
        %1864 = vmatmul.mubr.bf16.gmra.mrb[0].mxu0 %v992
        %v1865 = vpop.f32.mrb[0].mxu0
        %v1866 = vadd.f32 0.0, %v1865
        %v1867 = vpop.f32.mrb[0].mxu0
        %v1868 = vpop.f32.mrb[0].mxu0
        %v1869 = vadd.f32 0.0, %v1868
        %v1870 = vpop.f32.mrb[0].mxu0
        %1871 = vmatprep.mubr.bf16.mxu0 0
        %1872 = vmatmul.mubr.bf16.gmra.mrb[0].mxu0 %v993
        %v1873 = vpop.f32.mrb[0].mxu0
        %v1874 = vadd.f32 0.0, %v1873
        %v1875 = vpop.f32.mrb[0].mxu0
        %v1876 = vpop.f32.mrb[0].mxu0
        %v1877 = vadd.f32 0.0, %v1876
        %v1878 = vpop.f32.mrb[0].mxu0
        %1879 = vmatprep.mubr.bf16.mxu0 0
        %1880 = vmatmul.mubr.bf16.gmra.mrb[0].mxu0 %v994
        %v1881 = vpop.f32.mrb[0].mxu0
        %v1882 = vadd.f32 0.0, %v1881
        %v1883 = vpop.f32.mrb[0].mxu0
        %v1884 = vpop.f32.mrb[0].mxu0
        %v1885 = vadd.f32 0.0, %v1884
        %v1886 = vpop.f32.mrb[0].mxu0
        %1887 = vmatprep.mubr.bf16.mxu0 0
        %1888 = vmatmul.mubr.bf16.gmra.mrb[0].mxu0 %v995
        %v1889 = vpop.f32.mrb[0].mxu0
        %v1890 = vadd.f32 0.0, %v1889
        %v1891 = vpop.f32.mrb[0].mxu0
        %v1892 = vpop.f32.mrb[0].mxu0
        %v1893 = vadd.f32 0.0, %v1892
        %v1894 = vpop.f32.mrb[0].mxu0
        %1895 = vmatprep.mubr.bf16.mxu0 0
        %1896 = vmatmul.mubr.bf16.gmra.mrb[0].mxu0 %v1693
        %v1897 = vpop.f32.mrb[0].mxu0
        %v1898 = vadd.f32 0.0, %v1897
        %v1899 = vpop.f32.mrb[0].mxu0
        %v1900 = vpop.f32.mrb[0].mxu0
        %v1901 = vadd.f32 0.0, %v1900
        %v1902 = vpop.f32.mrb[0].mxu0
        %1903 = vdwg.mxu0
        %v1904 = vadd.f32 %v1641, %v1778
        %v1905 = vadd.f32 %v1642, %v1781
        %v1906 = vadd.f32 %v1643, %v1786
        %v1907 = vadd.f32 %v1644, %v1789
        %v1908 = vadd.f32 %v1645, %v1794
        %v1909 = vadd.f32 %v1646, %v1797
        %v1910 = vadd.f32 %v1647, %v1802
        %v1911 = vadd.f32 %v1648, %v1805
        %v1912 = vadd.f32 %v1649, %v1810
        %v1913 = vadd.f32 %v1650, %v1813
        %v1914 = vadd.f32 %v1651, %v1818
        %v1915 = vadd.f32 %v1652, %v1821
        %v1916 = vadd.f32 %v1653, %v1826
        %v1917 = vadd.f32 %v1654, %v1829
        %v1918 = vadd.f32 %v1655, %v1834
        %v1919 = vadd.f32 %v1656, %v1837
        %v1920 = vadd.f32 %v1657, %v1842
        %v1921 = vadd.f32 %v1658, %v1845
        %v1922 = vadd.f32 %v1659, %v1850
        %v1923 = vadd.f32 %v1660, %v1853
        %v1924 = vadd.f32 %v1661, %v1858
        %v1925 = vadd.f32 %v1662, %v1861
        %v1926 = vadd.f32 %v1663, %v1866
        %v1927 = vadd.f32 %v1664, %v1869
        %v1928 = vadd.f32 %v1665, %v1874
        %v1929 = vadd.f32 %v1666, %v1877
        %v1930 = vadd.f32 %v1667, %v1882
        %v1931 = vadd.f32 %v1668, %v1885
        %v1932 = vadd.f32 %v1669, %v1890
        %v1933 = vadd.f32 %v1670, %v1893
        %v1934 = vadd.f32 %v1671, %v1898
        %v1935 = vadd.f32 %v1672, %v1901
        %v1937 = vshrl.u32 %v218, 16
        %v1939 = vrot.slane %v1937, 4
        %v1940 = vshll.u32 %v218, 16
        %v1942 = vrot.slane %v1940, 5
        %v1943 = vor.u32 %v1939, %v1942
        %v1944 = vrot.slane %v1943, 4
        %v1946 = vshll.u32 %v219, 16
        %v1948 = vrot.slane %v1946, 5
        %v1949 = vsel %vm242, %v1944, %v1948
        %v1950 = vshrl.u32 %v219, 16
        %v1952 = vrot.slane %v1950, 4
        %v1953 = vor.u32 %v1952, %v1948
        %v1954 = vrot.slane %v1953, 4
        %v1956 = vshll.u32 %v220, 16
        %v1958 = vrot.slane %v1956, 5
        %v1959 = vsel %vm242, %v1954, %v1958
        %v1960 = vld [vmem:[%s1 + $0x100] sm:$0xf]
        %v1961 = vld [vmem:[%s1 + $0x104] sm:$0xf]
        %v1962 = vld [vmem:[%s1 + $0x108] sm:$0xf]
        %v1963 = vld [vmem:[%s1 + $0x10c] sm:$0xf]
        %v1964 = vld [vmem:[%s1 + $0x110] sm:$0xf]
        %v1965 = vld [vmem:[%s1 + $0x114] sm:$0xf]
        %v1966 = vld [vmem:[%s1 + $0x118] sm:$0xf]
        %v1967 = vld [vmem:[%s1 + $0x11c] sm:$0xf]
        %v1968 = vld [vmem:[%s1 + $0x120] sm:$0xf]
        %v1969 = vld [vmem:[%s1 + $0x124] sm:$0xf]
        %v1970 = vld [vmem:[%s1 + $0x128] sm:$0xf]
        %v1971 = vld [vmem:[%s1 + $0x12c] sm:$0xf]
        %v1972 = vld [vmem:[%s1 + $0x130] sm:$0xf]
        %v1973 = vld [vmem:[%s1 + $0x134] sm:$0xf]
        %v1974 = vld [vmem:[%s1 + $0x138] sm:$0xf]
        %v1975 = vld [vmem:[%s1 + $0x13c] sm:$0xf]
        %v1976 = vunpack.c.l.b16 %v1949
        %v1977 = vunpack.c.l.b16 %v1959
        %v1978 = vpack.c.b16 %v1977, %v1976
        %v1996 = vunpack.c.l.b16 %v1960
        %v1997 = vunpack.c.l.b16 %v1961
        %v1998 = vunpack.c.l.b16 %v1962
        %v1999 = vunpack.c.l.b16 %v1963
        %v2000 = vunpack.c.l.b16 %v1964
        %v2001 = vunpack.c.l.b16 %v1965
        %v2002 = vunpack.c.l.b16 %v1966
        %v2003 = vunpack.c.l.b16 %v1967
        %v2004 = vunpack.c.l.b16 %v1968
        %v2005 = vunpack.c.l.b16 %v1969
        %v2006 = vunpack.c.l.b16 %v1970
        %v2007 = vunpack.c.l.b16 %v1971
        %v2008 = vunpack.c.l.b16 %v1972
        %v2009 = vunpack.c.l.b16 %v1973
        %v2010 = vunpack.c.l.b16 %v1974
        %v2011 = vunpack.c.l.b16 %v1975
        %v2012 = vpack.c.b16 %v1997, %v1996
        %v2013 = vpack.c.b16 %v1999, %v1998
        %v2014 = vpack.c.b16 %v2001, %v2000
        %v2015 = vpack.c.b16 %v2003, %v2002
        %v2016 = vpack.c.b16 %v2005, %v2004
        %v2017 = vpack.c.b16 %v2007, %v2006
        %v2018 = vpack.c.b16 %v2009, %v2008
        %v2019 = vpack.c.b16 %v2011, %v2010
        %2028 = vmatprep.subr.bf16.mxu0 0
        %2029 = vmatpush1.bf16.msra.mxu0 %v2012
        %2030 = vmatprep.subr.bf16.mxu0 0
        %2031 = vmatpush1.bf16.msra.mxu0 %v2013
        %2032 = vmatprep.subr.bf16.mxu0 0
        %2033 = vmatpush1.bf16.msra.mxu0 %v2014
        %2034 = vmatprep.subr.bf16.mxu0 0
        %2035 = vmatpush1.bf16.msra.mxu0 %v2015
        %2036 = vmatprep.subr.bf16.mxu0 0
        %2037 = vmatpush1.bf16.msra.mxu0 %v2016
        %2038 = vmatprep.subr.bf16.mxu0 0
        %2039 = vmatpush1.bf16.msra.mxu0 %v2017
        %2040 = vmatprep.subr.bf16.mxu0 0
        %2041 = vmatpush1.bf16.msra.mxu0 %v2018
        %2042 = vmatprep.subr.bf16.mxu0 0
        %2043 = vmatpush1.bf16.msra.mxu0 %v2019
        %2044 = vmatprep.subr.bf16.mxu0 0
        %2045 = vmatpush1.bf16.msra.mxu0 0
        %2046 = vmatprep.subr.bf16.mxu0 0
        %2047 = vmatpush1.bf16.msra.mxu0 0
        %2048 = vmatprep.subr.bf16.mxu0 0
        %2049 = vmatpush1.bf16.msra.mxu0 0
        %2050 = vmatprep.subr.bf16.mxu0 0
        %2051 = vmatpush1.bf16.msra.mxu0 0
        %2052 = vmatprep.subr.bf16.mxu0 0
        %2053 = vmatpush1.bf16.msra.mxu0 0
        %2054 = vmatprep.subr.bf16.mxu0 0
        %2055 = vmatpush1.bf16.msra.mxu0 0
        %2056 = vmatprep.subr.bf16.mxu0 0
        %2057 = vmatpush1.bf16.msra.mxu0 0
        %2058 = vmatprep.subr.bf16.mxu0 0
        %2059 = vmatpush1.bf16.msra.mxu0 0
        %2060 = vmatprep.mubr.bf16.mxu0 0
        %2061 = vmatmul.mubr.bf16.gmra.mrb[0].mxu0 %v676
        %v2062 = vpop.f32.mrb[0].mxu0
        %v2063 = vadd.f32 0.0, %v2062
        %v2064 = vpop.f32.mrb[0].mxu0
        %v2065 = vpop.f32.mrb[0].mxu0
        %v2066 = vadd.f32 0.0, %v2065
        %v2067 = vpop.f32.mrb[0].mxu0
        %2068 = vmatprep.mubr.bf16.mxu0 0
        %2069 = vmatmul.mubr.bf16.gmra.mrb[0].mxu0 %v677
        %v2070 = vpop.f32.mrb[0].mxu0
        %v2071 = vadd.f32 0.0, %v2070
        %v2072 = vpop.f32.mrb[0].mxu0
        %v2073 = vpop.f32.mrb[0].mxu0
        %v2074 = vadd.f32 0.0, %v2073
        %v2075 = vpop.f32.mrb[0].mxu0
        %2076 = vmatprep.mubr.bf16.mxu0 0
        %2077 = vmatmul.mubr.bf16.gmra.mrb[0].mxu0 %v678
        %v2078 = vpop.f32.mrb[0].mxu0
        %v2079 = vadd.f32 0.0, %v2078
        %v2080 = vpop.f32.mrb[0].mxu0
        %v2081 = vpop.f32.mrb[0].mxu0
        %v2082 = vadd.f32 0.0, %v2081
        %v2083 = vpop.f32.mrb[0].mxu0
        %2084 = vmatprep.mubr.bf16.mxu0 0
        %2085 = vmatmul.mubr.bf16.gmra.mrb[0].mxu0 %v679
        %v2086 = vpop.f32.mrb[0].mxu0
        %v2087 = vadd.f32 0.0, %v2086
        %v2088 = vpop.f32.mrb[0].mxu0
        %v2089 = vpop.f32.mrb[0].mxu0
        %v2090 = vadd.f32 0.0, %v2089
        %v2091 = vpop.f32.mrb[0].mxu0
        %2092 = vmatprep.mubr.bf16.mxu0 0
        %2093 = vmatmul.mubr.bf16.gmra.mrb[0].mxu0 %v680
        %v2094 = vpop.f32.mrb[0].mxu0
        %v2095 = vadd.f32 0.0, %v2094
        %v2096 = vpop.f32.mrb[0].mxu0
        %v2097 = vpop.f32.mrb[0].mxu0
        %v2098 = vadd.f32 0.0, %v2097
        %v2099 = vpop.f32.mrb[0].mxu0
        %2100 = vmatprep.mubr.bf16.mxu0 0
        %2101 = vmatmul.mubr.bf16.gmra.mrb[0].mxu0 %v681
        %v2102 = vpop.f32.mrb[0].mxu0
        %v2103 = vadd.f32 0.0, %v2102
        %v2104 = vpop.f32.mrb[0].mxu0
        %v2105 = vpop.f32.mrb[0].mxu0
        %v2106 = vadd.f32 0.0, %v2105
        %v2107 = vpop.f32.mrb[0].mxu0
        %2108 = vmatprep.mubr.bf16.mxu0 0
        %2109 = vmatmul.mubr.bf16.gmra.mrb[0].mxu0 %v682
        %v2110 = vpop.f32.mrb[0].mxu0
        %v2111 = vadd.f32 0.0, %v2110
        %v2112 = vpop.f32.mrb[0].mxu0
        %v2113 = vpop.f32.mrb[0].mxu0
        %v2114 = vadd.f32 0.0, %v2113
        %v2115 = vpop.f32.mrb[0].mxu0
        %2116 = vmatprep.mubr.bf16.mxu0 0
        %2117 = vmatmul.mubr.bf16.gmra.mrb[0].mxu0 %v683
        %v2118 = vpop.f32.mrb[0].mxu0
        %v2119 = vadd.f32 0.0, %v2118
        %v2120 = vpop.f32.mrb[0].mxu0
        %v2121 = vpop.f32.mrb[0].mxu0
        %v2122 = vadd.f32 0.0, %v2121
        %v2123 = vpop.f32.mrb[0].mxu0
        %2124 = vmatprep.mubr.bf16.mxu0 0
        %2125 = vmatmul.mubr.bf16.gmra.mrb[0].mxu0 %v684
        %v2126 = vpop.f32.mrb[0].mxu0
        %v2127 = vadd.f32 0.0, %v2126
        %v2128 = vpop.f32.mrb[0].mxu0
        %v2129 = vpop.f32.mrb[0].mxu0
        %v2130 = vadd.f32 0.0, %v2129
        %v2131 = vpop.f32.mrb[0].mxu0
        %2132 = vmatprep.mubr.bf16.mxu0 0
        %2133 = vmatmul.mubr.bf16.gmra.mrb[0].mxu0 %v685
        %v2134 = vpop.f32.mrb[0].mxu0
        %v2135 = vadd.f32 0.0, %v2134
        %v2136 = vpop.f32.mrb[0].mxu0
        %v2137 = vpop.f32.mrb[0].mxu0
        %v2138 = vadd.f32 0.0, %v2137
        %v2139 = vpop.f32.mrb[0].mxu0
        %2140 = vmatprep.mubr.bf16.mxu0 0
        %2141 = vmatmul.mubr.bf16.gmra.mrb[0].mxu0 %v686
        %v2142 = vpop.f32.mrb[0].mxu0
        %v2143 = vadd.f32 0.0, %v2142
        %v2144 = vpop.f32.mrb[0].mxu0
        %v2145 = vpop.f32.mrb[0].mxu0
        %v2146 = vadd.f32 0.0, %v2145
        %v2147 = vpop.f32.mrb[0].mxu0
        %2148 = vmatprep.mubr.bf16.mxu0 0
        %2149 = vmatmul.mubr.bf16.gmra.mrb[0].mxu0 %v687
        %v2150 = vpop.f32.mrb[0].mxu0
        %v2151 = vadd.f32 0.0, %v2150
        %v2152 = vpop.f32.mrb[0].mxu0
        %v2153 = vpop.f32.mrb[0].mxu0
        %v2154 = vadd.f32 0.0, %v2153
        %v2155 = vpop.f32.mrb[0].mxu0
        %2156 = vmatprep.mubr.bf16.mxu0 0
        %2157 = vmatmul.mubr.bf16.gmra.mrb[0].mxu0 %v688
        %v2158 = vpop.f32.mrb[0].mxu0
        %v2159 = vadd.f32 0.0, %v2158
        %v2160 = vpop.f32.mrb[0].mxu0
        %v2161 = vpop.f32.mrb[0].mxu0
        %v2162 = vadd.f32 0.0, %v2161
        %v2163 = vpop.f32.mrb[0].mxu0
        %2164 = vmatprep.mubr.bf16.mxu0 0
        %2165 = vmatmul.mubr.bf16.gmra.mrb[0].mxu0 %v689
        %v2166 = vpop.f32.mrb[0].mxu0
        %v2167 = vadd.f32 0.0, %v2166
        %v2168 = vpop.f32.mrb[0].mxu0
        %v2169 = vpop.f32.mrb[0].mxu0
        %v2170 = vadd.f32 0.0, %v2169
        %v2171 = vpop.f32.mrb[0].mxu0
        %2172 = vmatprep.mubr.bf16.mxu0 0
        %2173 = vmatmul.mubr.bf16.gmra.mrb[0].mxu0 %v690
        %v2174 = vpop.f32.mrb[0].mxu0
        %v2175 = vadd.f32 0.0, %v2174
        %v2176 = vpop.f32.mrb[0].mxu0
        %v2177 = vpop.f32.mrb[0].mxu0
        %v2178 = vadd.f32 0.0, %v2177
        %v2179 = vpop.f32.mrb[0].mxu0
        %2180 = vmatprep.mubr.bf16.mxu0 0
        %2181 = vmatmul.mubr.bf16.gmra.mrb[0].mxu0 %v1978
        %v2182 = vpop.f32.mrb[0].mxu0
        %v2183 = vadd.f32 0.0, %v2182
        %v2184 = vpop.f32.mrb[0].mxu0
        %v2185 = vpop.f32.mrb[0].mxu0
        %v2186 = vadd.f32 0.0, %v2185
        %v2187 = vpop.f32.mrb[0].mxu0
        %2188 = vdwg.mxu0
        %v2189 = vadd.f32 %v1904, %v2063
        %v2190 = vadd.f32 %v1905, %v2066
        %v2191 = vadd.f32 %v1906, %v2071
        %v2192 = vadd.f32 %v1907, %v2074
        %v2193 = vadd.f32 %v1908, %v2079
        %v2194 = vadd.f32 %v1909, %v2082
        %v2195 = vadd.f32 %v1910, %v2087
        %v2196 = vadd.f32 %v1911, %v2090
        %v2197 = vadd.f32 %v1912, %v2095
        %v2198 = vadd.f32 %v1913, %v2098
        %v2199 = vadd.f32 %v1914, %v2103
        %v2200 = vadd.f32 %v1915, %v2106
        %v2201 = vadd.f32 %v1916, %v2111
        %v2202 = vadd.f32 %v1917, %v2114
        %v2203 = vadd.f32 %v1918, %v2119
        %v2204 = vadd.f32 %v1919, %v2122
        %v2205 = vadd.f32 %v1920, %v2127
        %v2206 = vadd.f32 %v1921, %v2130
        %v2207 = vadd.f32 %v1922, %v2135
        %v2208 = vadd.f32 %v1923, %v2138
        %v2209 = vadd.f32 %v1924, %v2143
        %v2210 = vadd.f32 %v1925, %v2146
        %v2211 = vadd.f32 %v1926, %v2151
        %v2212 = vadd.f32 %v1927, %v2154
        %v2213 = vadd.f32 %v1928, %v2159
        %v2214 = vadd.f32 %v1929, %v2162
        %v2215 = vadd.f32 %v1930, %v2167
        %v2216 = vadd.f32 %v1931, %v2170
        %v2217 = vadd.f32 %v1932, %v2175
        %v2218 = vadd.f32 %v1933, %v2178
        %v2219 = vadd.f32 %v1934, %v2183
        %v2220 = vadd.f32 %v1935, %v2186
        %v2222 = vrot.slane %v218, 5
        %v2223 = vrot.slane %v2222, 4
        %v2224 = vrot.slane %v219, 5
        %v2225 = vsel %vm1239, %v2223, %v2224
        %v2226 = vrot.slane %v2224, 4
        %v2227 = vrot.slane %v220, 5
        %v2228 = vsel %vm1239, %v2226, %v2227
        %v2229 = vld [vmem:[%s1 + $0x140] sm:$0xf]
        %v2230 = vld [vmem:[%s1 + $0x144] sm:$0xf]
        %v2231 = vld [vmem:[%s1 + $0x148] sm:$0xf]
        %v2232 = vld [vmem:[%s1 + $0x14c] sm:$0xf]
        %v2233 = vld [vmem:[%s1 + $0x150] sm:$0xf]
        %v2234 = vld [vmem:[%s1 + $0x154] sm:$0xf]
        %v2235 = vld [vmem:[%s1 + $0x158] sm:$0xf]
        %v2236 = vld [vmem:[%s1 + $0x15c] sm:$0xf]
        %v2237 = vld [vmem:[%s1 + $0x160] sm:$0xf]
        %v2238 = vld [vmem:[%s1 + $0x164] sm:$0xf]
        %v2239 = vld [vmem:[%s1 + $0x168] sm:$0xf]
        %v2240 = vld [vmem:[%s1 + $0x16c] sm:$0xf]
        %v2241 = vld [vmem:[%s1 + $0x170] sm:$0xf]
        %v2242 = vld [vmem:[%s1 + $0x174] sm:$0xf]
        %v2243 = vld [vmem:[%s1 + $0x178] sm:$0xf]
        %v2244 = vld [vmem:[%s1 + $0x17c] sm:$0xf]
        %v2245 = vunpack.c.l.b16 %v2225
        %v2246 = vunpack.c.l.b16 %v2228
        %v2247 = vpack.c.b16 %v2246, %v2245
        %v2265 = vunpack.c.l.b16 %v2229
        %v2266 = vunpack.c.l.b16 %v2230
        %v2267 = vunpack.c.l.b16 %v2231
        %v2268 = vunpack.c.l.b16 %v2232
        %v2269 = vunpack.c.l.b16 %v2233
        %v2270 = vunpack.c.l.b16 %v2234
        %v2271 = vunpack.c.l.b16 %v2235
        %v2272 = vunpack.c.l.b16 %v2236
        %v2273 = vunpack.c.l.b16 %v2237
        %v2274 = vunpack.c.l.b16 %v2238
        %v2275 = vunpack.c.l.b16 %v2239
        %v2276 = vunpack.c.l.b16 %v2240
        %v2277 = vunpack.c.l.b16 %v2241
        %v2278 = vunpack.c.l.b16 %v2242
        %v2279 = vunpack.c.l.b16 %v2243
        %v2280 = vunpack.c.l.b16 %v2244
        %v2281 = vpack.c.b16 %v2266, %v2265
        %v2282 = vpack.c.b16 %v2268, %v2267
        %v2283 = vpack.c.b16 %v2270, %v2269
        %v2284 = vpack.c.b16 %v2272, %v2271
        %v2285 = vpack.c.b16 %v2274, %v2273
        %v2286 = vpack.c.b16 %v2276, %v2275
        %v2287 = vpack.c.b16 %v2278, %v2277
        %v2288 = vpack.c.b16 %v2280, %v2279
        %2297 = vmatprep.subr.bf16.mxu0 0
        %2298 = vmatpush1.bf16.msra.mxu0 %v2281
        %2299 = vmatprep.subr.bf16.mxu0 0
        %2300 = vmatpush1.bf16.msra.mxu0 %v2282
        %2301 = vmatprep.subr.bf16.mxu0 0
        %2302 = vmatpush1.bf16.msra.mxu0 %v2283
        %2303 = vmatprep.subr.bf16.mxu0 0
        %2304 = vmatpush1.bf16.msra.mxu0 %v2284
        %2305 = vmatprep.subr.bf16.mxu0 0
        %2306 = vmatpush1.bf16.msra.mxu0 %v2285
        %2307 = vmatprep.subr.bf16.mxu0 0
        %2308 = vmatpush1.bf16.msra.mxu0 %v2286
        %2309 = vmatprep.subr.bf16.mxu0 0
        %2310 = vmatpush1.bf16.msra.mxu0 %v2287
        %2311 = vmatprep.subr.bf16.mxu0 0
        %2312 = vmatpush1.bf16.msra.mxu0 %v2288
        %2313 = vmatprep.subr.bf16.mxu0 0
        %2314 = vmatpush1.bf16.msra.mxu0 0
        %2315 = vmatprep.subr.bf16.mxu0 0
        %2316 = vmatpush1.bf16.msra.mxu0 0
        %2317 = vmatprep.subr.bf16.mxu0 0
        %2318 = vmatpush1.bf16.msra.mxu0 0
        %2319 = vmatprep.subr.bf16.mxu0 0
        %2320 = vmatpush1.bf16.msra.mxu0 0
        %2321 = vmatprep.subr.bf16.mxu0 0
        %2322 = vmatpush1.bf16.msra.mxu0 0
        %2323 = vmatprep.subr.bf16.mxu0 0
        %2324 = vmatpush1.bf16.msra.mxu0 0
        %2325 = vmatprep.subr.bf16.mxu0 0
        %2326 = vmatpush1.bf16.msra.mxu0 0
        %2327 = vmatprep.subr.bf16.mxu0 0
        %2328 = vmatpush1.bf16.msra.mxu0 0
        %2329 = vmatprep.mubr.bf16.mxu0 0
        %2330 = vmatmul.mubr.bf16.gmra.mrb[0].mxu0 %v1401
        %v2331 = vpop.f32.mrb[0].mxu0
        %v2332 = vadd.f32 0.0, %v2331
        %v2333 = vpop.f32.mrb[0].mxu0
        %v2334 = vpop.f32.mrb[0].mxu0
        %v2335 = vadd.f32 0.0, %v2334
        %v2336 = vpop.f32.mrb[0].mxu0
        %2337 = vmatprep.mubr.bf16.mxu0 0
        %2338 = vmatmul.mubr.bf16.gmra.mrb[0].mxu0 %v1402
        %v2339 = vpop.f32.mrb[0].mxu0
        %v2340 = vadd.f32 0.0, %v2339
        %v2341 = vpop.f32.mrb[0].mxu0
        %v2342 = vpop.f32.mrb[0].mxu0
        %v2343 = vadd.f32 0.0, %v2342
        %v2344 = vpop.f32.mrb[0].mxu0
        %2345 = vmatprep.mubr.bf16.mxu0 0
        %2346 = vmatmul.mubr.bf16.gmra.mrb[0].mxu0 %v1403
        %v2347 = vpop.f32.mrb[0].mxu0
        %v2348 = vadd.f32 0.0, %v2347
        %v2349 = vpop.f32.mrb[0].mxu0
        %v2350 = vpop.f32.mrb[0].mxu0
        %v2351 = vadd.f32 0.0, %v2350
        %v2352 = vpop.f32.mrb[0].mxu0
        %2353 = vmatprep.mubr.bf16.mxu0 0
        %2354 = vmatmul.mubr.bf16.gmra.mrb[0].mxu0 %v1404
        %v2355 = vpop.f32.mrb[0].mxu0
        %v2356 = vadd.f32 0.0, %v2355
        %v2357 = vpop.f32.mrb[0].mxu0
        %v2358 = vpop.f32.mrb[0].mxu0
        %v2359 = vadd.f32 0.0, %v2358
        %v2360 = vpop.f32.mrb[0].mxu0
        %2361 = vmatprep.mubr.bf16.mxu0 0
        %2362 = vmatmul.mubr.bf16.gmra.mrb[0].mxu0 %v1405
        %v2363 = vpop.f32.mrb[0].mxu0
        %v2364 = vadd.f32 0.0, %v2363
        %v2365 = vpop.f32.mrb[0].mxu0
        %v2366 = vpop.f32.mrb[0].mxu0
        %v2367 = vadd.f32 0.0, %v2366
        %v2368 = vpop.f32.mrb[0].mxu0
        %2369 = vmatprep.mubr.bf16.mxu0 0
        %2370 = vmatmul.mubr.bf16.gmra.mrb[0].mxu0 %v1406
        %v2371 = vpop.f32.mrb[0].mxu0
        %v2372 = vadd.f32 0.0, %v2371
        %v2373 = vpop.f32.mrb[0].mxu0
        %v2374 = vpop.f32.mrb[0].mxu0
        %v2375 = vadd.f32 0.0, %v2374
        %v2376 = vpop.f32.mrb[0].mxu0
        %2377 = vmatprep.mubr.bf16.mxu0 0
        %2378 = vmatmul.mubr.bf16.gmra.mrb[0].mxu0 %v1407
        %v2379 = vpop.f32.mrb[0].mxu0
        %v2380 = vadd.f32 0.0, %v2379
        %v2381 = vpop.f32.mrb[0].mxu0
        %v2382 = vpop.f32.mrb[0].mxu0
        %v2383 = vadd.f32 0.0, %v2382
        %v2384 = vpop.f32.mrb[0].mxu0
        %2385 = vmatprep.mubr.bf16.mxu0 0
        %2386 = vmatmul.mubr.bf16.gmra.mrb[0].mxu0 %v1408
        %v2387 = vpop.f32.mrb[0].mxu0
        %v2388 = vadd.f32 0.0, %v2387
        %v2389 = vpop.f32.mrb[0].mxu0
        %v2390 = vpop.f32.mrb[0].mxu0
        %v2391 = vadd.f32 0.0, %v2390
        %v2392 = vpop.f32.mrb[0].mxu0
        %2393 = vmatprep.mubr.bf16.mxu0 0
        %2394 = vmatmul.mubr.bf16.gmra.mrb[0].mxu0 %v1409
        %v2395 = vpop.f32.mrb[0].mxu0
        %v2396 = vadd.f32 0.0, %v2395
        %v2397 = vpop.f32.mrb[0].mxu0
        %v2398 = vpop.f32.mrb[0].mxu0
        %v2399 = vadd.f32 0.0, %v2398
        %v2400 = vpop.f32.mrb[0].mxu0
        %2401 = vmatprep.mubr.bf16.mxu0 0
        %2402 = vmatmul.mubr.bf16.gmra.mrb[0].mxu0 %v1410
        %v2403 = vpop.f32.mrb[0].mxu0
        %v2404 = vadd.f32 0.0, %v2403
        %v2405 = vpop.f32.mrb[0].mxu0
        %v2406 = vpop.f32.mrb[0].mxu0
        %v2407 = vadd.f32 0.0, %v2406
        %v2408 = vpop.f32.mrb[0].mxu0
        %2409 = vmatprep.mubr.bf16.mxu0 0
        %2410 = vmatmul.mubr.bf16.gmra.mrb[0].mxu0 %v1411
        %v2411 = vpop.f32.mrb[0].mxu0
        %v2412 = vadd.f32 0.0, %v2411
        %v2413 = vpop.f32.mrb[0].mxu0
        %v2414 = vpop.f32.mrb[0].mxu0
        %v2415 = vadd.f32 0.0, %v2414
        %v2416 = vpop.f32.mrb[0].mxu0
        %2417 = vmatprep.mubr.bf16.mxu0 0
        %2418 = vmatmul.mubr.bf16.gmra.mrb[0].mxu0 %v1412
        %v2419 = vpop.f32.mrb[0].mxu0
        %v2420 = vadd.f32 0.0, %v2419
        %v2421 = vpop.f32.mrb[0].mxu0
        %v2422 = vpop.f32.mrb[0].mxu0
        %v2423 = vadd.f32 0.0, %v2422
        %v2424 = vpop.f32.mrb[0].mxu0
        %2425 = vmatprep.mubr.bf16.mxu0 0
        %2426 = vmatmul.mubr.bf16.gmra.mrb[0].mxu0 %v1413
        %v2427 = vpop.f32.mrb[0].mxu0
        %v2428 = vadd.f32 0.0, %v2427
        %v2429 = vpop.f32.mrb[0].mxu0
        %v2430 = vpop.f32.mrb[0].mxu0
        %v2431 = vadd.f32 0.0, %v2430
        %v2432 = vpop.f32.mrb[0].mxu0
        %2433 = vmatprep.mubr.bf16.mxu0 0
        %2434 = vmatmul.mubr.bf16.gmra.mrb[0].mxu0 %v1414
        %v2435 = vpop.f32.mrb[0].mxu0
        %v2436 = vadd.f32 0.0, %v2435
        %v2437 = vpop.f32.mrb[0].mxu0
        %v2438 = vpop.f32.mrb[0].mxu0
        %v2439 = vadd.f32 0.0, %v2438
        %v2440 = vpop.f32.mrb[0].mxu0
        %2441 = vmatprep.mubr.bf16.mxu0 0
        %2442 = vmatmul.mubr.bf16.gmra.mrb[0].mxu0 %v1415
        %v2443 = vpop.f32.mrb[0].mxu0
        %v2444 = vadd.f32 0.0, %v2443
        %v2445 = vpop.f32.mrb[0].mxu0
        %v2446 = vpop.f32.mrb[0].mxu0
        %v2447 = vadd.f32 0.0, %v2446
        %v2448 = vpop.f32.mrb[0].mxu0
        %2449 = vmatprep.mubr.bf16.mxu0 0
        %2450 = vmatmul.mubr.bf16.gmra.mrb[0].mxu0 %v2247
        %v2451 = vpop.f32.mrb[0].mxu0
        %v2452 = vadd.f32 0.0, %v2451
        %v2453 = vpop.f32.mrb[0].mxu0
        %v2454 = vpop.f32.mrb[0].mxu0
        %v2455 = vadd.f32 0.0, %v2454
        %v2456 = vpop.f32.mrb[0].mxu0
        %2457 = vdwg.mxu0
        %v2458 = vadd.f32 %v2189, %v2332
        %v2459 = vadd.f32 %v2190, %v2335
        %v2460 = vadd.f32 %v2191, %v2340
        %v2461 = vadd.f32 %v2192, %v2343
        %v2462 = vadd.f32 %v2193, %v2348
        %v2463 = vadd.f32 %v2194, %v2351
        %v2464 = vadd.f32 %v2195, %v2356
        %v2465 = vadd.f32 %v2196, %v2359
        %v2466 = vadd.f32 %v2197, %v2364
        %v2467 = vadd.f32 %v2198, %v2367
        %v2468 = vadd.f32 %v2199, %v2372
        %v2469 = vadd.f32 %v2200, %v2375
        %v2470 = vadd.f32 %v2201, %v2380
        %v2471 = vadd.f32 %v2202, %v2383
        %v2472 = vadd.f32 %v2203, %v2388
        %v2473 = vadd.f32 %v2204, %v2391
        %v2474 = vadd.f32 %v2205, %v2396
        %v2475 = vadd.f32 %v2206, %v2399
        %v2476 = vadd.f32 %v2207, %v2404
        %v2477 = vadd.f32 %v2208, %v2407
        %v2478 = vadd.f32 %v2209, %v2412
        %v2479 = vadd.f32 %v2210, %v2415
        %v2480 = vadd.f32 %v2211, %v2420
        %v2481 = vadd.f32 %v2212, %v2423
        %v2482 = vadd.f32 %v2213, %v2428
        %v2483 = vadd.f32 %v2214, %v2431
        %v2484 = vadd.f32 %v2215, %v2436
        %v2485 = vadd.f32 %v2216, %v2439
        %v2486 = vadd.f32 %v2217, %v2444
        %v2487 = vadd.f32 %v2218, %v2447
        %v2488 = vadd.f32 %v2219, %v2452
        %v2489 = vadd.f32 %v2220, %v2455
        %v2490 = vld [vmem:[%s1 + $0x180] sm:$0xf]
        %v2491 = vld [vmem:[%s1 + $0x184] sm:$0xf]
        %v2492 = vld [vmem:[%s1 + $0x188] sm:$0xf]
        %v2493 = vld [vmem:[%s1 + $0x18c] sm:$0xf]
        %v2494 = vld [vmem:[%s1 + $0x190] sm:$0xf]
        %v2495 = vld [vmem:[%s1 + $0x194] sm:$0xf]
        %v2496 = vld [vmem:[%s1 + $0x198] sm:$0xf]
        %v2497 = vld [vmem:[%s1 + $0x19c] sm:$0xf]
        %v2498 = vld [vmem:[%s1 + $0x1a0] sm:$0xf]
        %v2499 = vld [vmem:[%s1 + $0x1a4] sm:$0xf]
        %v2500 = vld [vmem:[%s1 + $0x1a8] sm:$0xf]
        %v2501 = vld [vmem:[%s1 + $0x1ac] sm:$0xf]
        %v2502 = vld [vmem:[%s1 + $0x1b0] sm:$0xf]
        %v2503 = vld [vmem:[%s1 + $0x1b4] sm:$0xf]
        %v2504 = vld [vmem:[%s1 + $0x1b8] sm:$0xf]
        %v2505 = vld [vmem:[%s1 + $0x1bc] sm:$0xf]
        %v2508 = vunpack.c.l.b16 %v221
        %v2509 = vunpack.c.l.b16 %v222
        %v2510 = vpack.c.b16 %v2509, %v2508
        %v2528 = vunpack.c.l.b16 %v2490
        %v2529 = vunpack.c.l.b16 %v2491
        %v2530 = vunpack.c.l.b16 %v2492
        %v2531 = vunpack.c.l.b16 %v2493
        %v2532 = vunpack.c.l.b16 %v2494
        %v2533 = vunpack.c.l.b16 %v2495
        %v2534 = vunpack.c.l.b16 %v2496
        %v2535 = vunpack.c.l.b16 %v2497
        %v2536 = vunpack.c.l.b16 %v2498
        %v2537 = vunpack.c.l.b16 %v2499
        %v2538 = vunpack.c.l.b16 %v2500
        %v2539 = vunpack.c.l.b16 %v2501
        %v2540 = vunpack.c.l.b16 %v2502
        %v2541 = vunpack.c.l.b16 %v2503
        %v2542 = vunpack.c.l.b16 %v2504
        %v2543 = vunpack.c.l.b16 %v2505
        %v2544 = vpack.c.b16 %v2529, %v2528
        %v2545 = vpack.c.b16 %v2531, %v2530
        %v2546 = vpack.c.b16 %v2533, %v2532
        %v2547 = vpack.c.b16 %v2535, %v2534
        %v2548 = vpack.c.b16 %v2537, %v2536
        %v2549 = vpack.c.b16 %v2539, %v2538
        %v2550 = vpack.c.b16 %v2541, %v2540
        %v2551 = vpack.c.b16 %v2543, %v2542
        %2560 = vmatprep.subr.bf16.mxu0 0
        %2561 = vmatpush1.bf16.msra.mxu0 %v2544
        %2562 = vmatprep.subr.bf16.mxu0 0
        %2563 = vmatpush1.bf16.msra.mxu0 %v2545
        %2564 = vmatprep.subr.bf16.mxu0 0
        %2565 = vmatpush1.bf16.msra.mxu0 %v2546
        %2566 = vmatprep.subr.bf16.mxu0 0
        %2567 = vmatpush1.bf16.msra.mxu0 %v2547
        %2568 = vmatprep.subr.bf16.mxu0 0
        %2569 = vmatpush1.bf16.msra.mxu0 %v2548
        %2570 = vmatprep.subr.bf16.mxu0 0
        %2571 = vmatpush1.bf16.msra.mxu0 %v2549
        %2572 = vmatprep.subr.bf16.mxu0 0
        %2573 = vmatpush1.bf16.msra.mxu0 %v2550
        %2574 = vmatprep.subr.bf16.mxu0 0
        %2575 = vmatpush1.bf16.msra.mxu0 %v2551
        %2576 = vmatprep.subr.bf16.mxu0 0
        %2577 = vmatpush1.bf16.msra.mxu0 0
        %2578 = vmatprep.subr.bf16.mxu0 0
        %2579 = vmatpush1.bf16.msra.mxu0 0
        %2580 = vmatprep.subr.bf16.mxu0 0
        %2581 = vmatpush1.bf16.msra.mxu0 0
        %2582 = vmatprep.subr.bf16.mxu0 0
        %2583 = vmatpush1.bf16.msra.mxu0 0
        %2584 = vmatprep.subr.bf16.mxu0 0
        %2585 = vmatpush1.bf16.msra.mxu0 0
        %2586 = vmatprep.subr.bf16.mxu0 0
        %2587 = vmatpush1.bf16.msra.mxu0 0
        %2588 = vmatprep.subr.bf16.mxu0 0
        %2589 = vmatpush1.bf16.msra.mxu0 0
        %2590 = vmatprep.subr.bf16.mxu0 0
        %2591 = vmatpush1.bf16.msra.mxu0 0
        %2592 = vmatprep.mubr.bf16.mxu0 0
        %2593 = vmatmul.mubr.bf16.gmra.mrb[0].mxu0 %v982
        %v2594 = vpop.f32.mrb[0].mxu0
        %v2595 = vadd.f32 0.0, %v2594
        %v2596 = vpop.f32.mrb[0].mxu0
        %v2597 = vpop.f32.mrb[0].mxu0
        %v2598 = vadd.f32 0.0, %v2597
        %v2599 = vpop.f32.mrb[0].mxu0
        %2600 = vmatprep.mubr.bf16.mxu0 0
        %2601 = vmatmul.mubr.bf16.gmra.mrb[0].mxu0 %v983
        %v2602 = vpop.f32.mrb[0].mxu0
        %v2603 = vadd.f32 0.0, %v2602
        %v2604 = vpop.f32.mrb[0].mxu0
        %v2605 = vpop.f32.mrb[0].mxu0
        %v2606 = vadd.f32 0.0, %v2605
        %v2607 = vpop.f32.mrb[0].mxu0
        %2608 = vmatprep.mubr.bf16.mxu0 0
        %2609 = vmatmul.mubr.bf16.gmra.mrb[0].mxu0 %v984
        %v2610 = vpop.f32.mrb[0].mxu0
        %v2611 = vadd.f32 0.0, %v2610
        %v2612 = vpop.f32.mrb[0].mxu0
        %v2613 = vpop.f32.mrb[0].mxu0
        %v2614 = vadd.f32 0.0, %v2613
        %v2615 = vpop.f32.mrb[0].mxu0
        %2616 = vmatprep.mubr.bf16.mxu0 0
        %2617 = vmatmul.mubr.bf16.gmra.mrb[0].mxu0 %v985
        %v2618 = vpop.f32.mrb[0].mxu0
        %v2619 = vadd.f32 0.0, %v2618
        %v2620 = vpop.f32.mrb[0].mxu0
        %v2621 = vpop.f32.mrb[0].mxu0
        %v2622 = vadd.f32 0.0, %v2621
        %v2623 = vpop.f32.mrb[0].mxu0
        %2624 = vmatprep.mubr.bf16.mxu0 0
        %2625 = vmatmul.mubr.bf16.gmra.mrb[0].mxu0 %v986
        %v2626 = vpop.f32.mrb[0].mxu0
        %v2627 = vadd.f32 0.0, %v2626
        %v2628 = vpop.f32.mrb[0].mxu0
        %v2629 = vpop.f32.mrb[0].mxu0
        %v2630 = vadd.f32 0.0, %v2629
        %v2631 = vpop.f32.mrb[0].mxu0
        %2632 = vmatprep.mubr.bf16.mxu0 0
        %2633 = vmatmul.mubr.bf16.gmra.mrb[0].mxu0 %v987
        %v2634 = vpop.f32.mrb[0].mxu0
        %v2635 = vadd.f32 0.0, %v2634
        %v2636 = vpop.f32.mrb[0].mxu0
        %v2637 = vpop.f32.mrb[0].mxu0
        %v2638 = vadd.f32 0.0, %v2637
        %v2639 = vpop.f32.mrb[0].mxu0
        %2640 = vmatprep.mubr.bf16.mxu0 0
        %2641 = vmatmul.mubr.bf16.gmra.mrb[0].mxu0 %v988
        %v2642 = vpop.f32.mrb[0].mxu0
        %v2643 = vadd.f32 0.0, %v2642
        %v2644 = vpop.f32.mrb[0].mxu0
        %v2645 = vpop.f32.mrb[0].mxu0
        %v2646 = vadd.f32 0.0, %v2645
        %v2647 = vpop.f32.mrb[0].mxu0
        %2648 = vmatprep.mubr.bf16.mxu0 0
        %2649 = vmatmul.mubr.bf16.gmra.mrb[0].mxu0 %v989
        %v2650 = vpop.f32.mrb[0].mxu0
        %v2651 = vadd.f32 0.0, %v2650
        %v2652 = vpop.f32.mrb[0].mxu0
        %v2653 = vpop.f32.mrb[0].mxu0
        %v2654 = vadd.f32 0.0, %v2653
        %v2655 = vpop.f32.mrb[0].mxu0
        %2656 = vmatprep.mubr.bf16.mxu0 0
        %2657 = vmatmul.mubr.bf16.gmra.mrb[0].mxu0 %v990
        %v2658 = vpop.f32.mrb[0].mxu0
        %v2659 = vadd.f32 0.0, %v2658
        %v2660 = vpop.f32.mrb[0].mxu0
        %v2661 = vpop.f32.mrb[0].mxu0
        %v2662 = vadd.f32 0.0, %v2661
        %v2663 = vpop.f32.mrb[0].mxu0
        %2664 = vmatprep.mubr.bf16.mxu0 0
        %2665 = vmatmul.mubr.bf16.gmra.mrb[0].mxu0 %v991
        %v2666 = vpop.f32.mrb[0].mxu0
        %v2667 = vadd.f32 0.0, %v2666
        %v2668 = vpop.f32.mrb[0].mxu0
        %v2669 = vpop.f32.mrb[0].mxu0
        %v2670 = vadd.f32 0.0, %v2669
        %v2671 = vpop.f32.mrb[0].mxu0
        %2672 = vmatprep.mubr.bf16.mxu0 0
        %2673 = vmatmul.mubr.bf16.gmra.mrb[0].mxu0 %v992
        %v2674 = vpop.f32.mrb[0].mxu0
        %v2675 = vadd.f32 0.0, %v2674
        %v2676 = vpop.f32.mrb[0].mxu0
        %v2677 = vpop.f32.mrb[0].mxu0
        %v2678 = vadd.f32 0.0, %v2677
        %v2679 = vpop.f32.mrb[0].mxu0
        %2680 = vmatprep.mubr.bf16.mxu0 0
        %2681 = vmatmul.mubr.bf16.gmra.mrb[0].mxu0 %v993
        %v2682 = vpop.f32.mrb[0].mxu0
        %v2683 = vadd.f32 0.0, %v2682
        %v2684 = vpop.f32.mrb[0].mxu0
        %v2685 = vpop.f32.mrb[0].mxu0
        %v2686 = vadd.f32 0.0, %v2685
        %v2687 = vpop.f32.mrb[0].mxu0
        %2688 = vmatprep.mubr.bf16.mxu0 0
        %2689 = vmatmul.mubr.bf16.gmra.mrb[0].mxu0 %v994
        %v2690 = vpop.f32.mrb[0].mxu0
        %v2691 = vadd.f32 0.0, %v2690
        %v2692 = vpop.f32.mrb[0].mxu0
        %v2693 = vpop.f32.mrb[0].mxu0
        %v2694 = vadd.f32 0.0, %v2693
        %v2695 = vpop.f32.mrb[0].mxu0
        %2696 = vmatprep.mubr.bf16.mxu0 0
        %2697 = vmatmul.mubr.bf16.gmra.mrb[0].mxu0 %v995
        %v2698 = vpop.f32.mrb[0].mxu0
        %v2699 = vadd.f32 0.0, %v2698
        %v2700 = vpop.f32.mrb[0].mxu0
        %v2701 = vpop.f32.mrb[0].mxu0
        %v2702 = vadd.f32 0.0, %v2701
        %v2703 = vpop.f32.mrb[0].mxu0
        %2704 = vmatprep.mubr.bf16.mxu0 0
        %2705 = vmatmul.mubr.bf16.gmra.mrb[0].mxu0 %v1693
        %v2706 = vpop.f32.mrb[0].mxu0
        %v2707 = vadd.f32 0.0, %v2706
        %v2708 = vpop.f32.mrb[0].mxu0
        %v2709 = vpop.f32.mrb[0].mxu0
        %v2710 = vadd.f32 0.0, %v2709
        %v2711 = vpop.f32.mrb[0].mxu0
        %2712 = vmatprep.mubr.bf16.mxu0 0
        %2713 = vmatmul.mubr.bf16.gmra.mrb[0].mxu0 %v2510
        %v2714 = vpop.f32.mrb[0].mxu0
        %v2715 = vadd.f32 0.0, %v2714
        %v2716 = vpop.f32.mrb[0].mxu0
        %v2717 = vpop.f32.mrb[0].mxu0
        %v2718 = vadd.f32 0.0, %v2717
        %v2719 = vpop.f32.mrb[0].mxu0
        %2720 = vdwg.mxu0
        %v2721 = vadd.f32 %v2458, %v2595
        %v2722 = vadd.f32 %v2459, %v2598
        %v2723 = vadd.f32 %v2460, %v2603
        %v2724 = vadd.f32 %v2461, %v2606
        %v2725 = vadd.f32 %v2462, %v2611
        %v2726 = vadd.f32 %v2463, %v2614
        %v2727 = vadd.f32 %v2464, %v2619
        %v2728 = vadd.f32 %v2465, %v2622
        %v2729 = vadd.f32 %v2466, %v2627
        %v2730 = vadd.f32 %v2467, %v2630
        %v2731 = vadd.f32 %v2468, %v2635
        %v2732 = vadd.f32 %v2469, %v2638
        %v2733 = vadd.f32 %v2470, %v2643
        %v2734 = vadd.f32 %v2471, %v2646
        %v2735 = vadd.f32 %v2472, %v2651
        %v2736 = vadd.f32 %v2473, %v2654
        %v2737 = vadd.f32 %v2474, %v2659
        %v2738 = vadd.f32 %v2475, %v2662
        %v2739 = vadd.f32 %v2476, %v2667
        %v2740 = vadd.f32 %v2477, %v2670
        %v2741 = vadd.f32 %v2478, %v2675
        %v2742 = vadd.f32 %v2479, %v2678
        %v2743 = vadd.f32 %v2480, %v2683
        %v2744 = vadd.f32 %v2481, %v2686
        %v2745 = vadd.f32 %v2482, %v2691
        %v2746 = vadd.f32 %v2483, %v2694
        %v2747 = vadd.f32 %v2484, %v2699
        %v2748 = vadd.f32 %v2485, %v2702
        %v2749 = vadd.f32 %v2486, %v2707
        %v2750 = vadd.f32 %v2487, %v2710
        %v2751 = vadd.f32 %v2488, %v2715
        %v2752 = vadd.f32 %v2489, %v2718
        %v2754 = vshrl.u32 %v221, 16
        %v2756 = vrot.slane %v2754, 4
        %v2757 = vshll.u32 %v221, 16
        %v2759 = vrot.slane %v2757, 5
        %v2760 = vor.u32 %v2756, %v2759
        %v2761 = vrot.slane %v2760, 4
        %v2763 = vshll.u32 %v222, 16
        %v2765 = vrot.slane %v2763, 5
        %v2766 = vsel %vm242, %v2761, %v2765
        %v2767 = vshrl.u32 %v222, 16
        %v2769 = vrot.slane %v2767, 4
        %v2770 = vor.u32 %v2769, %v2765
        %v2771 = vrot.slane %v2770, 4
        %v2773 = vshll.u32 %v223, 16
        %v2775 = vrot.slane %v2773, 5
        %v2776 = vsel %vm242, %v2771, %v2775
        %v2777 = vld [vmem:[%s1 + $0x1c0] sm:$0xf]
        %v2778 = vld [vmem:[%s1 + $0x1c4] sm:$0xf]
        %v2779 = vld [vmem:[%s1 + $0x1c8] sm:$0xf]
        %v2780 = vld [vmem:[%s1 + $0x1cc] sm:$0xf]
        %v2781 = vld [vmem:[%s1 + $0x1d0] sm:$0xf]
        %v2782 = vld [vmem:[%s1 + $0x1d4] sm:$0xf]
        %v2783 = vld [vmem:[%s1 + $0x1d8] sm:$0xf]
        %v2784 = vld [vmem:[%s1 + $0x1dc] sm:$0xf]
        %v2785 = vld [vmem:[%s1 + $0x1e0] sm:$0xf]
        %v2786 = vld [vmem:[%s1 + $0x1e4] sm:$0xf]
        %v2787 = vld [vmem:[%s1 + $0x1e8] sm:$0xf]
        %v2788 = vld [vmem:[%s1 + $0x1ec] sm:$0xf]
        %v2789 = vld [vmem:[%s1 + $0x1f0] sm:$0xf]
        %v2790 = vld [vmem:[%s1 + $0x1f4] sm:$0xf]
        %v2791 = vld [vmem:[%s1 + $0x1f8] sm:$0xf]
        %v2792 = vld [vmem:[%s1 + $0x1fc] sm:$0xf]
        %v2793 = vunpack.c.l.b16 %v2766
        %v2794 = vunpack.c.l.b16 %v2776
        %v2795 = vpack.c.b16 %v2794, %v2793
        %v2813 = vunpack.c.l.b16 %v2777
        %v2814 = vunpack.c.l.b16 %v2778
        %v2815 = vunpack.c.l.b16 %v2779
        %v2816 = vunpack.c.l.b16 %v2780
        %v2817 = vunpack.c.l.b16 %v2781
        %v2818 = vunpack.c.l.b16 %v2782
        %v2819 = vunpack.c.l.b16 %v2783
        %v2820 = vunpack.c.l.b16 %v2784
        %v2821 = vunpack.c.l.b16 %v2785
        %v2822 = vunpack.c.l.b16 %v2786
        %v2823 = vunpack.c.l.b16 %v2787
        %v2824 = vunpack.c.l.b16 %v2788
        %v2825 = vunpack.c.l.b16 %v2789
        %v2826 = vunpack.c.l.b16 %v2790
        %v2827 = vunpack.c.l.b16 %v2791
        %v2828 = vunpack.c.l.b16 %v2792
        %v2829 = vpack.c.b16 %v2814, %v2813
        %v2830 = vpack.c.b16 %v2816, %v2815
        %v2831 = vpack.c.b16 %v2818, %v2817
        %v2832 = vpack.c.b16 %v2820, %v2819
        %v2833 = vpack.c.b16 %v2822, %v2821
        %v2834 = vpack.c.b16 %v2824, %v2823
        %v2835 = vpack.c.b16 %v2826, %v2825
        %v2836 = vpack.c.b16 %v2828, %v2827
        %2845 = vmatprep.subr.bf16.mxu0 0
        %2846 = vmatpush1.bf16.msra.mxu0 %v2829
        %2847 = vmatprep.subr.bf16.mxu0 0
        %2848 = vmatpush1.bf16.msra.mxu0 %v2830
        %2849 = vmatprep.subr.bf16.mxu0 0
        %2850 = vmatpush1.bf16.msra.mxu0 %v2831
        %2851 = vmatprep.subr.bf16.mxu0 0
        %2852 = vmatpush1.bf16.msra.mxu0 %v2832
        %2853 = vmatprep.subr.bf16.mxu0 0
        %2854 = vmatpush1.bf16.msra.mxu0 %v2833
        %2855 = vmatprep.subr.bf16.mxu0 0
        %2856 = vmatpush1.bf16.msra.mxu0 %v2834
        %2857 = vmatprep.subr.bf16.mxu0 0
        %2858 = vmatpush1.bf16.msra.mxu0 %v2835
        %2859 = vmatprep.subr.bf16.mxu0 0
        %2860 = vmatpush1.bf16.msra.mxu0 %v2836
        %2861 = vmatprep.subr.bf16.mxu0 0
        %2862 = vmatpush1.bf16.msra.mxu0 0
        %2863 = vmatprep.subr.bf16.mxu0 0
        %2864 = vmatpush1.bf16.msra.mxu0 0
        %2865 = vmatprep.subr.bf16.mxu0 0
        %2866 = vmatpush1.bf16.msra.mxu0 0
        %2867 = vmatprep.subr.bf16.mxu0 0
        %2868 = vmatpush1.bf16.msra.mxu0 0
        %2869 = vmatprep.subr.bf16.mxu0 0
        %2870 = vmatpush1.bf16.msra.mxu0 0
        %2871 = vmatprep.subr.bf16.mxu0 0
        %2872 = vmatpush1.bf16.msra.mxu0 0
        %2873 = vmatprep.subr.bf16.mxu0 0
        %2874 = vmatpush1.bf16.msra.mxu0 0
        %2875 = vmatprep.subr.bf16.mxu0 0
        %2876 = vmatpush1.bf16.msra.mxu0 0
        %2877 = vmatprep.mubr.bf16.mxu0 0
        %2878 = vmatmul.mubr.bf16.gmra.mrb[0].mxu0 %v677
        %v2879 = vpop.f32.mrb[0].mxu0
        %v2880 = vadd.f32 0.0, %v2879
        %v2881 = vpop.f32.mrb[0].mxu0
        %v2882 = vpop.f32.mrb[0].mxu0
        %v2883 = vadd.f32 0.0, %v2882
        %v2884 = vpop.f32.mrb[0].mxu0
        %2885 = vmatprep.mubr.bf16.mxu0 0
        %2886 = vmatmul.mubr.bf16.gmra.mrb[0].mxu0 %v678
        %v2887 = vpop.f32.mrb[0].mxu0
        %v2888 = vadd.f32 0.0, %v2887
        %v2889 = vpop.f32.mrb[0].mxu0
        %v2890 = vpop.f32.mrb[0].mxu0
        %v2891 = vadd.f32 0.0, %v2890
        %v2892 = vpop.f32.mrb[0].mxu0
        %2893 = vmatprep.mubr.bf16.mxu0 0
        %2894 = vmatmul.mubr.bf16.gmra.mrb[0].mxu0 %v679
        %v2895 = vpop.f32.mrb[0].mxu0
        %v2896 = vadd.f32 0.0, %v2895
        %v2897 = vpop.f32.mrb[0].mxu0
        %v2898 = vpop.f32.mrb[0].mxu0
        %v2899 = vadd.f32 0.0, %v2898
        %v2900 = vpop.f32.mrb[0].mxu0
        %2901 = vmatprep.mubr.bf16.mxu0 0
        %2902 = vmatmul.mubr.bf16.gmra.mrb[0].mxu0 %v680
        %v2903 = vpop.f32.mrb[0].mxu0
        %v2904 = vadd.f32 0.0, %v2903
        %v2905 = vpop.f32.mrb[0].mxu0
        %v2906 = vpop.f32.mrb[0].mxu0
        %v2907 = vadd.f32 0.0, %v2906
        %v2908 = vpop.f32.mrb[0].mxu0
        %2909 = vmatprep.mubr.bf16.mxu0 0
        %2910 = vmatmul.mubr.bf16.gmra.mrb[0].mxu0 %v681
        %v2911 = vpop.f32.mrb[0].mxu0
        %v2912 = vadd.f32 0.0, %v2911
        %v2913 = vpop.f32.mrb[0].mxu0
        %v2914 = vpop.f32.mrb[0].mxu0
        %v2915 = vadd.f32 0.0, %v2914
        %v2916 = vpop.f32.mrb[0].mxu0
        %2917 = vmatprep.mubr.bf16.mxu0 0
        %2918 = vmatmul.mubr.bf16.gmra.mrb[0].mxu0 %v682
        %v2919 = vpop.f32.mrb[0].mxu0
        %v2920 = vadd.f32 0.0, %v2919
        %v2921 = vpop.f32.mrb[0].mxu0
        %v2922 = vpop.f32.mrb[0].mxu0
        %v2923 = vadd.f32 0.0, %v2922
        %v2924 = vpop.f32.mrb[0].mxu0
        %2925 = vmatprep.mubr.bf16.mxu0 0
        %2926 = vmatmul.mubr.bf16.gmra.mrb[0].mxu0 %v683
        %v2927 = vpop.f32.mrb[0].mxu0
        %v2928 = vadd.f32 0.0, %v2927
        %v2929 = vpop.f32.mrb[0].mxu0
        %v2930 = vpop.f32.mrb[0].mxu0
        %v2931 = vadd.f32 0.0, %v2930
        %v2932 = vpop.f32.mrb[0].mxu0
        %2933 = vmatprep.mubr.bf16.mxu0 0
        %2934 = vmatmul.mubr.bf16.gmra.mrb[0].mxu0 %v684
        %v2935 = vpop.f32.mrb[0].mxu0
        %v2936 = vadd.f32 0.0, %v2935
        %v2937 = vpop.f32.mrb[0].mxu0
        %v2938 = vpop.f32.mrb[0].mxu0
        %v2939 = vadd.f32 0.0, %v2938
        %v2940 = vpop.f32.mrb[0].mxu0
        %2941 = vmatprep.mubr.bf16.mxu0 0
        %2942 = vmatmul.mubr.bf16.gmra.mrb[0].mxu0 %v685
        %v2943 = vpop.f32.mrb[0].mxu0
        %v2944 = vadd.f32 0.0, %v2943
        %v2945 = vpop.f32.mrb[0].mxu0
        %v2946 = vpop.f32.mrb[0].mxu0
        %v2947 = vadd.f32 0.0, %v2946
        %v2948 = vpop.f32.mrb[0].mxu0
        %2949 = vmatprep.mubr.bf16.mxu0 0
        %2950 = vmatmul.mubr.bf16.gmra.mrb[0].mxu0 %v686
        %v2951 = vpop.f32.mrb[0].mxu0
        %v2952 = vadd.f32 0.0, %v2951
        %v2953 = vpop.f32.mrb[0].mxu0
        %v2954 = vpop.f32.mrb[0].mxu0
        %v2955 = vadd.f32 0.0, %v2954
        %v2956 = vpop.f32.mrb[0].mxu0
        %2957 = vmatprep.mubr.bf16.mxu0 0
        %2958 = vmatmul.mubr.bf16.gmra.mrb[0].mxu0 %v687
        %v2959 = vpop.f32.mrb[0].mxu0
        %v2960 = vadd.f32 0.0, %v2959
        %v2961 = vpop.f32.mrb[0].mxu0
        %v2962 = vpop.f32.mrb[0].mxu0
        %v2963 = vadd.f32 0.0, %v2962
        %v2964 = vpop.f32.mrb[0].mxu0
        %2965 = vmatprep.mubr.bf16.mxu0 0
        %2966 = vmatmul.mubr.bf16.gmra.mrb[0].mxu0 %v688
        %v2967 = vpop.f32.mrb[0].mxu0
        %v2968 = vadd.f32 0.0, %v2967
        %v2969 = vpop.f32.mrb[0].mxu0
        %v2970 = vpop.f32.mrb[0].mxu0
        %v2971 = vadd.f32 0.0, %v2970
        %v2972 = vpop.f32.mrb[0].mxu0
        %2973 = vmatprep.mubr.bf16.mxu0 0
        %2974 = vmatmul.mubr.bf16.gmra.mrb[0].mxu0 %v689
        %v2975 = vpop.f32.mrb[0].mxu0
        %v2976 = vadd.f32 0.0, %v2975
        %v2977 = vpop.f32.mrb[0].mxu0
        %v2978 = vpop.f32.mrb[0].mxu0
        %v2979 = vadd.f32 0.0, %v2978
        %v2980 = vpop.f32.mrb[0].mxu0
        %2981 = vmatprep.mubr.bf16.mxu0 0
        %2982 = vmatmul.mubr.bf16.gmra.mrb[0].mxu0 %v690
        %v2983 = vpop.f32.mrb[0].mxu0
        %v2984 = vadd.f32 0.0, %v2983
        %v2985 = vpop.f32.mrb[0].mxu0
        %v2986 = vpop.f32.mrb[0].mxu0
        %v2987 = vadd.f32 0.0, %v2986
        %v2988 = vpop.f32.mrb[0].mxu0
        %2989 = vmatprep.mubr.bf16.mxu0 0
        %2990 = vmatmul.mubr.bf16.gmra.mrb[0].mxu0 %v1978
        %v2991 = vpop.f32.mrb[0].mxu0
        %v2992 = vadd.f32 0.0, %v2991
        %v2993 = vpop.f32.mrb[0].mxu0
        %v2994 = vpop.f32.mrb[0].mxu0
        %v2995 = vadd.f32 0.0, %v2994
        %v2996 = vpop.f32.mrb[0].mxu0
        %2997 = vmatprep.mubr.bf16.mxu0 0
        %2998 = vmatmul.mubr.bf16.gmra.mrb[0].mxu0 %v2795
        %v2999 = vpop.f32.mrb[0].mxu0
        %v3000 = vadd.f32 0.0, %v2999
        %v3001 = vpop.f32.mrb[0].mxu0
        %v3002 = vpop.f32.mrb[0].mxu0
        %v3003 = vadd.f32 0.0, %v3002
        %v3004 = vpop.f32.mrb[0].mxu0
        %3005 = vdwg.mxu0
        %v3006 = vadd.f32 %v2721, %v2880
        %v3007 = vadd.f32 %v2722, %v2883
        %v3008 = vadd.f32 %v2723, %v2888
        %v3009 = vadd.f32 %v2724, %v2891
        %v3010 = vadd.f32 %v2725, %v2896
        %v3011 = vadd.f32 %v2726, %v2899
        %v3012 = vadd.f32 %v2727, %v2904
        %v3013 = vadd.f32 %v2728, %v2907
        %v3014 = vadd.f32 %v2729, %v2912
        %v3015 = vadd.f32 %v2730, %v2915
        %v3016 = vadd.f32 %v2731, %v2920
        %v3017 = vadd.f32 %v2732, %v2923
        %v3018 = vadd.f32 %v2733, %v2928
        %v3019 = vadd.f32 %v2734, %v2931
        %v3020 = vadd.f32 %v2735, %v2936
        %v3021 = vadd.f32 %v2736, %v2939
        %v3022 = vadd.f32 %v2737, %v2944
        %v3023 = vadd.f32 %v2738, %v2947
        %v3024 = vadd.f32 %v2739, %v2952
        %v3025 = vadd.f32 %v2740, %v2955
        %v3026 = vadd.f32 %v2741, %v2960
        %v3027 = vadd.f32 %v2742, %v2963
        %v3028 = vadd.f32 %v2743, %v2968
        %v3029 = vadd.f32 %v2744, %v2971
        %v3030 = vadd.f32 %v2745, %v2976
        %v3031 = vadd.f32 %v2746, %v2979
        %v3032 = vadd.f32 %v2747, %v2984
        %v3033 = vadd.f32 %v2748, %v2987
        %v3034 = vadd.f32 %v2749, %v2992
        %v3035 = vadd.f32 %v2750, %v2995
        %v3036 = vadd.f32 %v2751, %v3000
        %v3037 = vadd.f32 %v2752, %v3003
        %v3039 = vrot.slane %v221, 5
        %v3040 = vrot.slane %v3039, 4
        %v3041 = vrot.slane %v222, 5
        %v3042 = vsel %vm1239, %v3040, %v3041
        %v3043 = vrot.slane %v3041, 4
        %v3044 = vrot.slane %v223, 5
        %v3045 = vsel %vm1239, %v3043, %v3044
        %v3046 = vld [vmem:[%s1 + $0x200] sm:$0xf]
        %v3047 = vld [vmem:[%s1 + $0x204] sm:$0xf]
        %v3048 = vld [vmem:[%s1 + $0x208] sm:$0xf]
        %v3049 = vld [vmem:[%s1 + $0x20c] sm:$0xf]
        %v3050 = vld [vmem:[%s1 + $0x210] sm:$0xf]
        %v3051 = vld [vmem:[%s1 + $0x214] sm:$0xf]
        %v3052 = vld [vmem:[%s1 + $0x218] sm:$0xf]
        %v3053 = vld [vmem:[%s1 + $0x21c] sm:$0xf]
        %v3054 = vld [vmem:[%s1 + $0x220] sm:$0xf]
        %v3055 = vld [vmem:[%s1 + $0x224] sm:$0xf]
        %v3056 = vld [vmem:[%s1 + $0x228] sm:$0xf]
        %v3057 = vld [vmem:[%s1 + $0x22c] sm:$0xf]
        %v3058 = vld [vmem:[%s1 + $0x230] sm:$0xf]
        %v3059 = vld [vmem:[%s1 + $0x234] sm:$0xf]
        %v3060 = vld [vmem:[%s1 + $0x238] sm:$0xf]
        %v3061 = vld [vmem:[%s1 + $0x23c] sm:$0xf]
        %v3062 = vunpack.c.l.b16 %v3042
        %v3063 = vunpack.c.l.b16 %v3045
        %v3064 = vpack.c.b16 %v3063, %v3062
        %v3082 = vunpack.c.l.b16 %v3046
        %v3083 = vunpack.c.l.b16 %v3047
        %v3084 = vunpack.c.l.b16 %v3048
        %v3085 = vunpack.c.l.b16 %v3049
        %v3086 = vunpack.c.l.b16 %v3050
        %v3087 = vunpack.c.l.b16 %v3051
        %v3088 = vunpack.c.l.b16 %v3052
        %v3089 = vunpack.c.l.b16 %v3053
        %v3090 = vunpack.c.l.b16 %v3054
        %v3091 = vunpack.c.l.b16 %v3055
        %v3092 = vunpack.c.l.b16 %v3056
        %v3093 = vunpack.c.l.b16 %v3057
        %v3094 = vunpack.c.l.b16 %v3058
        %v3095 = vunpack.c.l.b16 %v3059
        %v3096 = vunpack.c.l.b16 %v3060
        %v3097 = vunpack.c.l.b16 %v3061
        %v3098 = vpack.c.b16 %v3083, %v3082
        %v3099 = vpack.c.b16 %v3085, %v3084
        %v3100 = vpack.c.b16 %v3087, %v3086
        %v3101 = vpack.c.b16 %v3089, %v3088
        %v3102 = vpack.c.b16 %v3091, %v3090
        %v3103 = vpack.c.b16 %v3093, %v3092
        %v3104 = vpack.c.b16 %v3095, %v3094
        %v3105 = vpack.c.b16 %v3097, %v3096
        %3114 = vmatprep.subr.bf16.mxu0 0
        %3115 = vmatpush1.bf16.msra.mxu0 %v3098
        %3116 = vmatprep.subr.bf16.mxu0 0
        %3117 = vmatpush1.bf16.msra.mxu0 %v3099
        %3118 = vmatprep.subr.bf16.mxu0 0
        %3119 = vmatpush1.bf16.msra.mxu0 %v3100
        %3120 = vmatprep.subr.bf16.mxu0 0
        %3121 = vmatpush1.bf16.msra.mxu0 %v3101
        %3122 = vmatprep.subr.bf16.mxu0 0
        %3123 = vmatpush1.bf16.msra.mxu0 %v3102
        %3124 = vmatprep.subr.bf16.mxu0 0
        %3125 = vmatpush1.bf16.msra.mxu0 %v3103
        %3126 = vmatprep.subr.bf16.mxu0 0
        %3127 = vmatpush1.bf16.msra.mxu0 %v3104
        %3128 = vmatprep.subr.bf16.mxu0 0
        %3129 = vmatpush1.bf16.msra.mxu0 %v3105
        %3130 = vmatprep.subr.bf16.mxu0 0
        %3131 = vmatpush1.bf16.msra.mxu0 0
        %3132 = vmatprep.subr.bf16.mxu0 0
        %3133 = vmatpush1.bf16.msra.mxu0 0
        %3134 = vmatprep.subr.bf16.mxu0 0
        %3135 = vmatpush1.bf16.msra.mxu0 0
        %3136 = vmatprep.subr.bf16.mxu0 0
        %3137 = vmatpush1.bf16.msra.mxu0 0
        %3138 = vmatprep.subr.bf16.mxu0 0
        %3139 = vmatpush1.bf16.msra.mxu0 0
        %3140 = vmatprep.subr.bf16.mxu0 0
        %3141 = vmatpush1.bf16.msra.mxu0 0
        %3142 = vmatprep.subr.bf16.mxu0 0
        %3143 = vmatpush1.bf16.msra.mxu0 0
        %3144 = vmatprep.subr.bf16.mxu0 0
        %3145 = vmatpush1.bf16.msra.mxu0 0
        %3146 = vmatprep.mubr.bf16.mxu0 0
        %3147 = vmatmul.mubr.bf16.gmra.mrb[0].mxu0 %v1402
        %v3148 = vpop.f32.mrb[0].mxu0
        %v3149 = vadd.f32 0.0, %v3148
        %v3150 = vpop.f32.mrb[0].mxu0
        %v3151 = vpop.f32.mrb[0].mxu0
        %v3152 = vadd.f32 0.0, %v3151
        %v3153 = vpop.f32.mrb[0].mxu0
        %3154 = vmatprep.mubr.bf16.mxu0 0
        %3155 = vmatmul.mubr.bf16.gmra.mrb[0].mxu0 %v1403
        %v3156 = vpop.f32.mrb[0].mxu0
        %v3157 = vadd.f32 0.0, %v3156
        %v3158 = vpop.f32.mrb[0].mxu0
        %v3159 = vpop.f32.mrb[0].mxu0
        %v3160 = vadd.f32 0.0, %v3159
        %v3161 = vpop.f32.mrb[0].mxu0
        %3162 = vmatprep.mubr.bf16.mxu0 0
        %3163 = vmatmul.mubr.bf16.gmra.mrb[0].mxu0 %v1404
        %v3164 = vpop.f32.mrb[0].mxu0
        %v3165 = vadd.f32 0.0, %v3164
        %v3166 = vpop.f32.mrb[0].mxu0
        %v3167 = vpop.f32.mrb[0].mxu0
        %v3168 = vadd.f32 0.0, %v3167
        %v3169 = vpop.f32.mrb[0].mxu0
        %3170 = vmatprep.mubr.bf16.mxu0 0
        %3171 = vmatmul.mubr.bf16.gmra.mrb[0].mxu0 %v1405
        %v3172 = vpop.f32.mrb[0].mxu0
        %v3173 = vadd.f32 0.0, %v3172
        %v3174 = vpop.f32.mrb[0].mxu0
        %v3175 = vpop.f32.mrb[0].mxu0
        %v3176 = vadd.f32 0.0, %v3175
        %v3177 = vpop.f32.mrb[0].mxu0
        %3178 = vmatprep.mubr.bf16.mxu0 0
        %3179 = vmatmul.mubr.bf16.gmra.mrb[0].mxu0 %v1406
        %v3180 = vpop.f32.mrb[0].mxu0
        %v3181 = vadd.f32 0.0, %v3180
        %v3182 = vpop.f32.mrb[0].mxu0
        %v3183 = vpop.f32.mrb[0].mxu0
        %v3184 = vadd.f32 0.0, %v3183
        %v3185 = vpop.f32.mrb[0].mxu0
        %3186 = vmatprep.mubr.bf16.mxu0 0
        %3187 = vmatmul.mubr.bf16.gmra.mrb[0].mxu0 %v1407
        %v3188 = vpop.f32.mrb[0].mxu0
        %v3189 = vadd.f32 0.0, %v3188
        %v3190 = vpop.f32.mrb[0].mxu0
        %v3191 = vpop.f32.mrb[0].mxu0
        %v3192 = vadd.f32 0.0, %v3191
        %v3193 = vpop.f32.mrb[0].mxu0
        %3194 = vmatprep.mubr.bf16.mxu0 0
        %3195 = vmatmul.mubr.bf16.gmra.mrb[0].mxu0 %v1408
        %v3196 = vpop.f32.mrb[0].mxu0
        %v3197 = vadd.f32 0.0, %v3196
        %v3198 = vpop.f32.mrb[0].mxu0
        %v3199 = vpop.f32.mrb[0].mxu0
        %v3200 = vadd.f32 0.0, %v3199
        %v3201 = vpop.f32.mrb[0].mxu0
        %3202 = vmatprep.mubr.bf16.mxu0 0
        %3203 = vmatmul.mubr.bf16.gmra.mrb[0].mxu0 %v1409
        %v3204 = vpop.f32.mrb[0].mxu0
        %v3205 = vadd.f32 0.0, %v3204
        %v3206 = vpop.f32.mrb[0].mxu0
        %v3207 = vpop.f32.mrb[0].mxu0
        %v3208 = vadd.f32 0.0, %v3207
        %v3209 = vpop.f32.mrb[0].mxu0
        %3210 = vmatprep.mubr.bf16.mxu0 0
        %3211 = vmatmul.mubr.bf16.gmra.mrb[0].mxu0 %v1410
        %v3212 = vpop.f32.mrb[0].mxu0
        %v3213 = vadd.f32 0.0, %v3212
        %v3214 = vpop.f32.mrb[0].mxu0
        %v3215 = vpop.f32.mrb[0].mxu0
        %v3216 = vadd.f32 0.0, %v3215
        %v3217 = vpop.f32.mrb[0].mxu0
        %3218 = vmatprep.mubr.bf16.mxu0 0
        %3219 = vmatmul.mubr.bf16.gmra.mrb[0].mxu0 %v1411
        %v3220 = vpop.f32.mrb[0].mxu0
        %v3221 = vadd.f32 0.0, %v3220
        %v3222 = vpop.f32.mrb[0].mxu0
        %v3223 = vpop.f32.mrb[0].mxu0
        %v3224 = vadd.f32 0.0, %v3223
        %v3225 = vpop.f32.mrb[0].mxu0
        %3226 = vmatprep.mubr.bf16.mxu0 0
        %3227 = vmatmul.mubr.bf16.gmra.mrb[0].mxu0 %v1412
        %v3228 = vpop.f32.mrb[0].mxu0
        %v3229 = vadd.f32 0.0, %v3228
        %v3230 = vpop.f32.mrb[0].mxu0
        %v3231 = vpop.f32.mrb[0].mxu0
        %v3232 = vadd.f32 0.0, %v3231
        %v3233 = vpop.f32.mrb[0].mxu0
        %3234 = vmatprep.mubr.bf16.mxu0 0
        %3235 = vmatmul.mubr.bf16.gmra.mrb[0].mxu0 %v1413
        %v3236 = vpop.f32.mrb[0].mxu0
        %v3237 = vadd.f32 0.0, %v3236
        %v3238 = vpop.f32.mrb[0].mxu0
        %v3239 = vpop.f32.mrb[0].mxu0
        %v3240 = vadd.f32 0.0, %v3239
        %v3241 = vpop.f32.mrb[0].mxu0
        %3242 = vmatprep.mubr.bf16.mxu0 0
        %3243 = vmatmul.mubr.bf16.gmra.mrb[0].mxu0 %v1414
        %v3244 = vpop.f32.mrb[0].mxu0
        %v3245 = vadd.f32 0.0, %v3244
        %v3246 = vpop.f32.mrb[0].mxu0
        %v3247 = vpop.f32.mrb[0].mxu0
        %v3248 = vadd.f32 0.0, %v3247
        %v3249 = vpop.f32.mrb[0].mxu0
        %3250 = vmatprep.mubr.bf16.mxu0 0
        %3251 = vmatmul.mubr.bf16.gmra.mrb[0].mxu0 %v1415
        %v3252 = vpop.f32.mrb[0].mxu0
        %v3253 = vadd.f32 0.0, %v3252
        %v3254 = vpop.f32.mrb[0].mxu0
        %v3255 = vpop.f32.mrb[0].mxu0
        %v3256 = vadd.f32 0.0, %v3255
        %v3257 = vpop.f32.mrb[0].mxu0
        %3258 = vmatprep.mubr.bf16.mxu0 0
        %3259 = vmatmul.mubr.bf16.gmra.mrb[0].mxu0 %v2247
        %v3260 = vpop.f32.mrb[0].mxu0
        %v3261 = vadd.f32 0.0, %v3260
        %v3262 = vpop.f32.mrb[0].mxu0
        %v3263 = vpop.f32.mrb[0].mxu0
        %v3264 = vadd.f32 0.0, %v3263
        %v3265 = vpop.f32.mrb[0].mxu0
        %3266 = vmatprep.mubr.bf16.mxu0 0
        %3267 = vmatmul.mubr.bf16.gmra.mrb[0].mxu0 %v3064
        %v3268 = vpop.f32.mrb[0].mxu0
        %v3269 = vadd.f32 0.0, %v3268
        %v3270 = vpop.f32.mrb[0].mxu0
        %v3271 = vpop.f32.mrb[0].mxu0
        %v3272 = vadd.f32 0.0, %v3271
        %v3273 = vpop.f32.mrb[0].mxu0
        %3274 = vdwg.mxu0
        %v3275 = vadd.f32 %v3006, %v3149
        %v3276 = vadd.f32 %v3007, %v3152
        %v3277 = vadd.f32 %v3008, %v3157
        %v3278 = vadd.f32 %v3009, %v3160
        %v3279 = vadd.f32 %v3010, %v3165
        %v3280 = vadd.f32 %v3011, %v3168
        %v3281 = vadd.f32 %v3012, %v3173
        %v3282 = vadd.f32 %v3013, %v3176
        %v3283 = vadd.f32 %v3014, %v3181
        %v3284 = vadd.f32 %v3015, %v3184
        %v3285 = vadd.f32 %v3016, %v3189
        %v3286 = vadd.f32 %v3017, %v3192
        %v3287 = vadd.f32 %v3018, %v3197
        %v3288 = vadd.f32 %v3019, %v3200
        %v3289 = vadd.f32 %v3020, %v3205
        %v3290 = vadd.f32 %v3021, %v3208
        %v3291 = vadd.f32 %v3022, %v3213
        %v3292 = vadd.f32 %v3023, %v3216
        %v3293 = vadd.f32 %v3024, %v3221
        %v3294 = vadd.f32 %v3025, %v3224
        %v3295 = vadd.f32 %v3026, %v3229
        %v3296 = vadd.f32 %v3027, %v3232
        %v3297 = vadd.f32 %v3028, %v3237
        %v3298 = vadd.f32 %v3029, %v3240
        %v3299 = vadd.f32 %v3030, %v3245
        %v3300 = vadd.f32 %v3031, %v3248
        %v3301 = vadd.f32 %v3032, %v3253
        %v3302 = vadd.f32 %v3033, %v3256
        %v3303 = vadd.f32 %v3034, %v3261
        %v3304 = vadd.f32 %v3035, %v3264
        %v3305 = vadd.f32 %v3036, %v3269
        %v3306 = vadd.f32 %v3037, %v3272
        %v3307 = vld [vmem:[%s2] sm:$0x1]
        %v3309 = vlaneseq
        %v3310 = vshrl.u32 %v3309, 7
        %v3311 = vsub.s32 0, %v3310
        %v3312 = vrot.slane %v3307, %v3311
        %v3314 = vadd.f32 %v3275, %v3312
        %v3315 = vadd.f32 %v3276, %v3312
        %v3316 = vadd.f32 %v3277, %v3312
        %v3317 = vadd.f32 %v3278, %v3312
        %v3318 = vadd.f32 %v3279, %v3312
        %v3319 = vadd.f32 %v3280, %v3312
        %v3320 = vadd.f32 %v3281, %v3312
        %v3321 = vadd.f32 %v3282, %v3312
        %v3322 = vadd.f32 %v3283, %v3312
        %v3323 = vadd.f32 %v3284, %v3312
        %v3324 = vadd.f32 %v3285, %v3312
        %v3325 = vadd.f32 %v3286, %v3312
        %v3326 = vadd.f32 %v3287, %v3312
        %v3327 = vadd.f32 %v3288, %v3312
        %v3328 = vadd.f32 %v3289, %v3312
        %v3329 = vadd.f32 %v3290, %v3312
        %v3330 = vadd.f32 %v3291, %v3312
        %v3331 = vadd.f32 %v3292, %v3312
        %v3332 = vadd.f32 %v3293, %v3312
        %v3333 = vadd.f32 %v3294, %v3312
        %v3334 = vadd.f32 %v3295, %v3312
        %v3335 = vadd.f32 %v3296, %v3312
        %v3336 = vadd.f32 %v3297, %v3312
        %v3337 = vadd.f32 %v3298, %v3312
        %v3338 = vadd.f32 %v3299, %v3312
        %v3339 = vadd.f32 %v3300, %v3312
        %v3340 = vadd.f32 %v3301, %v3312
        %v3341 = vadd.f32 %v3302, %v3312
        %v3342 = vadd.f32 %v3303, %v3312
        %v3343 = vadd.f32 %v3304, %v3312
        %v3344 = vadd.f32 %v3305, %v3312
        %v3345 = vadd.f32 %v3306, %v3312
        %v3346 = vmax.f32 %v3314, 0.0
        %v3347 = vmax.f32 %v3315, 0.0
        %v3348 = vmax.f32 %v3316, 0.0
        %v3349 = vmax.f32 %v3317, 0.0
        %v3350 = vmax.f32 %v3318, 0.0
        %v3351 = vmax.f32 %v3319, 0.0
        %v3352 = vmax.f32 %v3320, 0.0
        %v3353 = vmax.f32 %v3321, 0.0
        %v3354 = vmax.f32 %v3322, 0.0
        %v3355 = vmax.f32 %v3323, 0.0
        %v3356 = vmax.f32 %v3324, 0.0
        %v3357 = vmax.f32 %v3325, 0.0
        %v3358 = vmax.f32 %v3326, 0.0
        %v3359 = vmax.f32 %v3327, 0.0
        %v3360 = vmax.f32 %v3328, 0.0
        %v3361 = vmax.f32 %v3329, 0.0
        %v3362 = vmax.f32 %v3330, 0.0
        %v3363 = vmax.f32 %v3331, 0.0
        %v3364 = vmax.f32 %v3332, 0.0
        %v3365 = vmax.f32 %v3333, 0.0
        %v3366 = vmax.f32 %v3334, 0.0
        %v3367 = vmax.f32 %v3335, 0.0
        %v3368 = vmax.f32 %v3336, 0.0
        %v3369 = vmax.f32 %v3337, 0.0
        %v3370 = vmax.f32 %v3338, 0.0
        %v3371 = vmax.f32 %v3339, 0.0
        %v3372 = vmax.f32 %v3340, 0.0
        %v3373 = vmax.f32 %v3341, 0.0
        %v3374 = vmax.f32 %v3342, 0.0
        %v3375 = vmax.f32 %v3343, 0.0
        %v3376 = vmax.f32 %v3344, 0.0
        %v3377 = vmax.f32 %v3345, 0.0
        %v3378 = vpack.c.bf16 %v3347, %v3346
        %v3379 = vpack.c.bf16 %v3349, %v3348
        %v3380 = vpack.c.bf16 %v3351, %v3350
        %v3381 = vpack.c.bf16 %v3353, %v3352
        %v3382 = vpack.c.bf16 %v3355, %v3354
        %v3383 = vpack.c.bf16 %v3357, %v3356
        %v3384 = vpack.c.bf16 %v3359, %v3358
        %v3385 = vpack.c.bf16 %v3361, %v3360
        %v3386 = vpack.c.bf16 %v3363, %v3362
        %v3387 = vpack.c.bf16 %v3365, %v3364
        %v3388 = vpack.c.bf16 %v3367, %v3366
        %v3389 = vpack.c.bf16 %v3369, %v3368
        %v3390 = vpack.c.bf16 %v3371, %v3370
        %v3391 = vpack.c.bf16 %v3373, %v3372
        %v3392 = vpack.c.bf16 %v3375, %v3374
        %v3393 = vpack.c.bf16 %v3377, %v3376
        %v3410 = vunpack.c.l.b16 %v3378
        %v3411 = vunpack.c.h.b16 %v3378
        %v3412 = vunpack.c.l.b16 %v3379
        %v3413 = vunpack.c.h.b16 %v3379
        %v3414 = vunpack.c.l.b16 %v3380
        %v3415 = vunpack.c.h.b16 %v3380
        %v3416 = vunpack.c.l.b16 %v3381
        %v3417 = vunpack.c.h.b16 %v3381
        %v3418 = vunpack.c.l.b16 %v3382
        %v3419 = vunpack.c.h.b16 %v3382
        %v3420 = vunpack.c.l.b16 %v3383
        %v3421 = vunpack.c.h.b16 %v3383
        %v3422 = vunpack.c.l.b16 %v3384
        %v3423 = vunpack.c.h.b16 %v3384
        %v3424 = vunpack.c.l.b16 %v3385
        %v3425 = vunpack.c.h.b16 %v3385
        %v3426 = vunpack.c.l.b16 %v3386
        %v3427 = vunpack.c.h.b16 %v3386
        %v3428 = vunpack.c.l.b16 %v3387
        %v3429 = vunpack.c.h.b16 %v3387
        %v3430 = vunpack.c.l.b16 %v3388
        %v3431 = vunpack.c.h.b16 %v3388
        %v3432 = vunpack.c.l.b16 %v3389
        %v3433 = vunpack.c.h.b16 %v3389
        %v3434 = vunpack.c.l.b16 %v3390
        %v3435 = vunpack.c.h.b16 %v3390
        %v3436 = vunpack.c.l.b16 %v3391
        %v3437 = vunpack.c.h.b16 %v3391
        %v3438 = vunpack.c.l.b16 %v3392
        %v3439 = vunpack.c.h.b16 %v3392
        %v3440 = vunpack.c.l.b16 %v3393
        %v3441 = vunpack.c.h.b16 %v3393
        %v3442 = vpack.c.b16 %v3410, %v3410
        %v3443 = vpack.c.b16 %v3411, %v3411
        %v3444 = vpack.c.b16 %v3412, %v3412
        %v3445 = vpack.c.b16 %v3413, %v3413
        %v3446 = vpack.c.b16 %v3414, %v3414
        %v3447 = vpack.c.b16 %v3415, %v3415
        %v3448 = vpack.c.b16 %v3416, %v3416
        %v3449 = vpack.c.b16 %v3417, %v3417
        %v3450 = vpack.c.b16 %v3418, %v3418
        %v3451 = vpack.c.b16 %v3419, %v3419
        %v3452 = vpack.c.b16 %v3420, %v3420
        %v3453 = vpack.c.b16 %v3421, %v3421
        %v3454 = vpack.c.b16 %v3422, %v3422
        %v3455 = vpack.c.b16 %v3423, %v3423
        %v3456 = vpack.c.b16 %v3424, %v3424
        %v3457 = vpack.c.b16 %v3425, %v3425
        %v3458 = vpack.c.b16 %v3426, %v3426
        %v3459 = vpack.c.b16 %v3427, %v3427
        %v3460 = vpack.c.b16 %v3428, %v3428
        %v3461 = vpack.c.b16 %v3429, %v3429
        %v3462 = vpack.c.b16 %v3430, %v3430
        %v3463 = vpack.c.b16 %v3431, %v3431
        %v3464 = vpack.c.b16 %v3432, %v3432
        %v3465 = vpack.c.b16 %v3433, %v3433
        %v3466 = vpack.c.b16 %v3434, %v3434
        %v3467 = vpack.c.b16 %v3435, %v3435
        %v3468 = vpack.c.b16 %v3436, %v3436
        %v3469 = vpack.c.b16 %v3437, %v3437
        %v3470 = vpack.c.b16 %v3438, %v3438
        %v3471 = vpack.c.b16 %v3439, %v3439
        %v3472 = vpack.c.b16 %v3440, %v3440
        %v3473 = vpack.c.b16 %v3441, %v3441
        %3506 = vst [vmem:[%s163] sm:$0xf] %v3442
        %3507 = vst [vmem:[%s163 + $0x4] sm:$0xf] %v3443
        %3508 = vst [vmem:[%s163 + $0x8] sm:$0xf] %v3444
        %3509 = vst [vmem:[%s163 + $0xc] sm:$0xf] %v3445
        %3510 = vst [vmem:[%s163 + $0x10] sm:$0xf] %v3446
        %3511 = vst [vmem:[%s163 + $0x14] sm:$0xf] %v3447
        %3512 = vst [vmem:[%s163 + $0x18] sm:$0xf] %v3448
        %3513 = vst [vmem:[%s163 + $0x1c] sm:$0xf] %v3449
        %3514 = vst [vmem:[%s163 + $0x20] sm:$0xf] %v3450
        %3515 = vst [vmem:[%s163 + $0x24] sm:$0xf] %v3451
        %3516 = vst [vmem:[%s163 + $0x28] sm:$0xf] %v3452
        %3517 = vst [vmem:[%s163 + $0x2c] sm:$0xf] %v3453
        %3518 = vst [vmem:[%s163 + $0x30] sm:$0xf] %v3454
        %3519 = vst [vmem:[%s163 + $0x34] sm:$0xf] %v3455
        %3520 = vst [vmem:[%s163 + $0x38] sm:$0xf] %v3456
        %3521 = vst [vmem:[%s163 + $0x3c] sm:$0xf] %v3457
        %3522 = vst [vmem:[%s163 + $0x40] sm:$0xf] %v3458
        %3523 = vst [vmem:[%s163 + $0x44] sm:$0xf] %v3459
        %3524 = vst [vmem:[%s163 + $0x48] sm:$0xf] %v3460
        %3525 = vst [vmem:[%s163 + $0x4c] sm:$0xf] %v3461
        %3526 = vst [vmem:[%s163 + $0x50] sm:$0xf] %v3462
        %3527 = vst [vmem:[%s163 + $0x54] sm:$0xf] %v3463
        %3528 = vst [vmem:[%s163 + $0x58] sm:$0xf] %v3464
        %3529 = vst [vmem:[%s163 + $0x5c] sm:$0xf] %v3465
        %3530 = vst [vmem:[%s163 + $0x60] sm:$0xf] %v3466
        %3531 = vst [vmem:[%s163 + $0x64] sm:$0xf] %v3467
        %3532 = vst [vmem:[%s163 + $0x68] sm:$0xf] %v3468
        %3533 = vst [vmem:[%s163 + $0x6c] sm:$0xf] %v3469
        %3534 = vst [vmem:[%s163 + $0x70] sm:$0xf] %v3470
        %3535 = vst [vmem:[%s163 + $0x74] sm:$0xf] %v3471
        %3536 = vst [vmem:[%s163 + $0x78] sm:$0xf] %v3472
        %3537 = vst [vmem:[%s163 + $0x7c] sm:$0xf] %v3473
        %s3538 = sand.u32 %s93, 1
        %s3539 = scalar_lea.sflag [#allocation3], %s3538
        %s3540 = sand.u32 %s93, 1
        %s3541 = smul.addr %s3540, 128
        %s3542 = scalar_lea.vmem [#allocation2], %s3541
        // Predicated region
        $region33: #{tpu_custom_call.1} parent=31 // pred_check
          %p3543 = pneg %p103
        $region34: #{tpu_custom_call.1} parent=31 // pred_check_branch
          %3545 = sbr.rel (%p3543) target = $region36
        $region35: #{tpu_custom_call.1} parent=31 // pred_region
          %s3547 = ssub.s32 2048, 2048
          %3548 = vsyncadd %s3539, %s3547
          %s3549 = smul.addr %s17, 32
          %s3550 = smul.addr %s3549, 64
          %s3551 = scalar_lea.hbm %s3, %s3550
          %s3552 = sshll.u32 %s3542, 4
          %s3553 = int_to_ptr.vmem [resolvable:$true] %s3552
          %3558 = dma.vmem_to_hbm [thread:$0]  %s3553, 2048, %s3551, %s3539, 64, 64, 4
        $region36: #{tpu_custom_call.1} parent=31 // pred_fallthru
          _
      $region32: #{tpu_custom_call.1} parent=5 // pred_fallthru
        _
      %p3559 = scmp.le.s32.totalorder 2, %s12
      // Predicated region
      $region37: #{tpu_custom_call.1} parent=5 // pred_check
        %p3560 = pneg %p3559
      $region38: #{tpu_custom_call.1} parent=5 // pred_check_branch
        %3562 = sbr.rel (%p3560) target = $region40
      $region39: #{tpu_custom_call.1} parent=5 // pred_region
        %s3563 = ssub.s32 %s12, 2
        // Predicated region
        $region41: #{tpu_custom_call.1} parent=39 // pred_check
          %p3564 = pneg %p109
        $region42: #{tpu_custom_call.1} parent=39 // pred_check_branch
          %3566 = sbr.rel (%p3564) target = $region44
        $region43: #{tpu_custom_call.1} parent=39 // pred_region
          %s3567 = sand.u32 %s94, 1
          %s3568 = scalar_lea.sflag [#allocation3], %s3567
          %s3569 = sand.u32 %s94, 1
          %s3570 = smul.addr %s3569, 128
          %s3571 = scalar_lea.vmem [#allocation2], %s3570
          %3572 = dma.done %s3568, 2048
        $region44: #{tpu_custom_call.1} parent=39 // pred_fallthru
          _
      $region40: #{tpu_custom_call.1} parent=5 // pred_fallthru
        _
    $region6: #{tpu_custom_call.1} parent=1 // loop_footer
      %s16 = sadd.s32 1, %s12
    $region7: #{tpu_custom_call.1} parent=1 // loop_footer_branch
      %11 = sbr.rel target = $region3
    $region8: #{tpu_custom_call.1} parent=1 // loop_exit
      _
    %3573 = vsyncpa [#allocation3], 1
    %s3574 = scalar_lea.sflag [#allocation3], 1
    %3575 = vsyncpa %s3574, 1

</llo_original>
